<compile_context>
chip_gen: v5e
topology: v5e:2x2
jax: 0.10.0
libtpu: 0.0.40
codegen_flags: <defaults>
</compile_context>

<pallas_src>
import numpy as np

import jax
import jax.numpy as jnp
from jax.experimental import pallas as pl
from jax.experimental.pallas import tpu as pltpu

_VMEM = pl.BlockSpec(memory_space=pltpu.MemorySpace.VMEM)


# ---------------------------------------------------------------------------
# In-kernel building blocks (operate on VMEM-resident values, (N*C, L) layout)
# ---------------------------------------------------------------------------
def _k2_conv_bd(h, w_bd, b_col, dilation):
    """Conv1d(kernel_size=2, stride=1, dilation=d) on a batch-stacked (R, L) tile.

    h: (R, L), rows batch-major (n*C + c); w_bd: (R_out, 2*R) =
    [kron(I_N, W[:, :, 0]) | kron(I_N, W[:, :, 1])]; b_col: (R_out, 1).
    Both taps and both batch elements go through a single MXU dot.
    """
    lo = h.shape[1] - dilation
    taps = jnp.concatenate([h[:, 0:lo], h[:, dilation:dilation + lo]], axis=0)
    return jnp.dot(w_bd, taps, preferred_element_type=jnp.float32) + b_col


def _decimate(v, stride, offset, lo):
    """v[:, offset::stride][:, :lo] expressed as a matmul with a 0/1 selection
    matrix built from iotas (avoids strided lane slicing / tiny reshapes)."""
    l = v.shape[1]
    t = jax.lax.broadcasted_iota(jnp.int32, (l, lo), 0)
    s = jax.lax.broadcasted_iota(jnp.int32, (l, lo), 1)
    sel = (t == stride * s + offset).astype(v.dtype)
    return jnp.dot(v, sel, preferred_element_type=jnp.float32)


def _strided_conv_bd(h, w_bd, b_col, k):
    """Conv1d(kernel_size=k, stride=k): one block-diagonal stride-1 conv matmul
    over all k taps, then decimate the result by k."""
    l = h.shape[1]
    lo = (l - k) // k + 1
    lz = l - k + 1
    taps = jnp.concatenate([h[:, j:j + lz] for j in range(k)], axis=0)  # (k*R, lz)
    z = jnp.dot(w_bd, taps, preferred_element_type=jnp.float32)         # (R, lz)
    return _decimate(z, k, 0, lo) + b_col


def _maxpool_bd(h, k):
    """MaxPool1d(kernel_size=k, stride=k): elementwise max of the k phases."""
    lo = h.shape[1] // k
    out = _decimate(h, k, 0, lo)
    for j in range(1, k):
        out = jnp.maximum(out, _decimate(h, k, j, lo))
    return out


def _batchnorm_bd(h, gamma_col, beta_col, n, c, eps=1e-5):
    """BatchNorm1d training-mode forward on a batch-stacked (N*C, L) tile:
    one-pass sum / sum-of-squares stats over (N, L), fused scale+shift apply."""
    l = h.shape[1]
    cnt = float(n * l)
    row_s = jnp.sum(h, axis=1, keepdims=True)            # (N*C, 1)
    row_q = jnp.sum(h * h, axis=1, keepdims=True)        # (N*C, 1)
    ch_s = row_s[0:c]
    ch_q = row_q[0:c]
    for i in range(1, n):                                 # fold batch rows
        ch_s = ch_s + row_s[i * c:(i + 1) * c]
        ch_q = ch_q + row_q[i * c:(i + 1) * c]
    mean = ch_s / cnt
    var = jnp.maximum(ch_q / cnt - mean * mean, 0.0)      # biased variance
    scale = gamma_col * jax.lax.rsqrt(var + eps)          # (C, 1)  (EUP rsqrt)
    shift = beta_col - mean * scale
    scale_nc = jnp.concatenate([scale] * n, axis=0)       # (N*C, 1)
    shift_nc = jnp.concatenate([shift] * n, axis=0)
    return h * scale_nc + shift_nc


# ---------------------------------------------------------------------------
# Fused kernel (single invocation, everything VMEM resident, 2 input DMAs)
# ---------------------------------------------------------------------------
def _make_fused_kernel(n, c_in, c):
    r = n * c  # batch-stacked activation rows

    def kernel(x_ref, p_ref, o_ref):
        # ---- unpack the lane-packed parameter slab (static ref slices) -----
        off = 0

        def take(width, rows=None):
            nonlocal off
            rr = r if rows is None else rows
            v = p_ref[0:rr, off:off + width]
            off += width
            return v

        wp = None
        if c_in != 1:
            wp = take(2 * n * c_in)
        wd1 = take(2 * r)
        wd2 = take(2 * r)
        wd3 = take(2 * r)
        wc3 = take(2 * r)
        wc1 = take(4 * r)
        wc2 = take(4 * r)
        if c_in == 1:
            w0p = take(1)
            w1p = take(1)
        bp = take(1)
        bd1 = take(1)
        bd2 = take(1)
        bd3 = take(1)
        bc1 = take(1)
        bc2 = take(1)
        bc3 = take(1)
        g1 = take(1, rows=c)
        be1 = take(1, rows=c)
        g2 = take(1, rows=c)
        be2 = take(1, rows=c)

        xp = x_ref[...].astype(jnp.float32)               # (N*C_in, L+8), pre-padded
        lp = xp.shape[1]

        # ---- conv_p ---------------------------------------------------------
        if c_in == 1:
            # raw-audio special case: K=1 "matmul" as a VPU broadcast-FMA
            xb = jnp.concatenate(
                [jnp.broadcast_to(xp[b:b + 1, :], (c, lp)) for b in range(n)],
                axis=0)                                   # (N*C, L+8)
            lo = lp - 1
            h = w0p * xb[:, 0:lo] + w1p * xb[:, 1:1 + lo] + bp
        else:
            h = _k2_conv_bd(xp, wp, bp, 1)

        # ---- dilated conv stack + BN_1 --------------------------------------
        h = _k2_conv_bd(h, wd1, bd1, 1)
        h = _k2_conv_bd(h, wd2, bd2, 2)
        h = _k2_conv_bd(h, wd3, bd3, 4)
        h = _batchnorm_bd(h, g1, be1, n, c)               # BN_1

        # ---- strided convs + maxpool + BN_2 ----------------------------------
        h = _strided_conv_bd(h, wc1, bc1, 4)
        h = _strided_conv_bd(h, wc2, bc2, 4)
        h = _strided_conv_bd(h, wc3, bc3, 2)
        h = _maxpool_bd(h, 5)
        h = _batchnorm_bd(h, g2, be2, n, c)               # BN_2
        o_ref[...] = h.astype(o_ref.dtype)

    return kernel


# ---------------------------------------------------------------------------
# Wrapper: weight packing (block-diagonal over batch, one lane-packed slab)
# ---------------------------------------------------------------------------
def _blockdiag(w2d, n):
    return jnp.kron(jnp.eye(n, dtype=w2d.dtype), w2d)


def _pack_conv_bd(w, n):
    """PyTorch Conv1d weight (C_out, C_in, k) -> (N*C_out, k*N*C_in),
    tap-major column blocks, block-diagonal over the batch."""
    return jnp.concatenate(
        [_blockdiag(w[:, :, j], n) for j in range(w.shape[2])], axis=1)


def _col(v, n, rows):
    """(C,) vector -> (rows, 1) column, tiled across the batch and zero-padded
    so every parameter column has the same row count."""
    col = jnp.tile(v, n)[:, None]
    return jnp.pad(col, ((0, rows - col.shape[0]), (0, 0)))


def preconv_raw_forward(x_ncl, params):
    """x_ncl: (N, C_in, L) exactly like the PyTorch module; returns (N, C, L//160)."""
    n, c_in, length = x_ncl.shape
    wp, bp = params["conv_p"]
    c = wp.shape[0]
    rows = n * c

    # layout glue (tiny): stack batch on sublanes, apply conv_p's padding=4.
    x2d = jnp.pad(x_ncl.reshape(n * c_in, length).astype(jnp.float32),
                  ((0, 0), (4, 4)))

    g1, be1 = params["bn1"]
    g2, be2 = params["bn2"]

    # ---- lane-pack every parameter into ONE (N*C, K) slab (single DMA) ----
    blocks = []
    if c_in != 1:
        blocks.append(_pack_conv_bd(wp, n))
    blocks += [_pack_conv_bd(params["dconv1"][0], n),
               _pack_conv_bd(params["dconv2"][0], n),
               _pack_conv_bd(params["dconv3"][0], n),
               _pack_conv_bd(params["conv_3"][0], n),
               _pack_conv_bd(params["conv_1"][0], n),
               _pack_conv_bd(params["conv_2"][0], n)]
    if c_in == 1:
        blocks += [_col(wp[:, 0, 0], n, rows), _col(wp[:, 0, 1], n, rows)]
    blocks += [_col(bp, n, rows),
               _col(params["dconv1"][1], n, rows),
               _col(params["dconv2"][1], n, rows),
               _col(params["dconv3"][1], n, rows),
               _col(params["conv_1"][1], n, rows),
               _col(params["conv_2"][1], n, rows),
               _col(params["conv_3"][1], n, rows),
               _col(g1, 1, rows), _col(be1, 1, rows),
               _col(g2, 1, rows), _col(be2, 1, rows)]
    p_slab = jnp.concatenate(blocks, axis=1).astype(jnp.float32)

    # static length bookkeeping (matches PyTorch Conv1d / MaxPool1d arithmetic)
    l = length + 8 - 1            # conv_p (padding=4, k=2)
    l = l - 1                     # dilated_conv_1
    l = l - 2                     # dilated_conv_2
    l = l - 4                     # dilated_conv_3
    l = (l - 4) // 4 + 1          # conv_1
    l = (l - 4) // 4 + 1          # conv_2
    l = (l - 2) // 2 + 1          # conv_3
    l_out = l // 5                # maxpool

    out2d = pl.pallas_call(
        _make_fused_kernel(n, c_in, c),
        out_shape=jax.ShapeDtypeStruct((rows, l_out), jnp.float32),
        in_specs=[_VMEM, _VMEM],
        out_specs=_VMEM,
    )(x2d, p_slab)
    return out2d.reshape(n, c, l_out)


# ---------------------------------------------------------------------------
# Parameters (deterministic, PyTorch-default-style init) and demo
# ---------------------------------------------------------------------------
def init_params(key, in_channels, res_channels):
    def conv_init(k, cout, cin, ks):
        bound = 1.0 / np.sqrt(cin * ks)
        kw, kb = jax.random.split(k)
        w = jax.random.uniform(kw, (cout, cin, ks), jnp.float32, -bound, bound)
        b = jax.random.uniform(kb, (cout,), jnp.float32, -bound, bound)
        return w, b

    keys = jax.random.split(key, 7)
    return {
        "conv_p": conv_init(keys[0], res_channels, in_channels, 2),
        "dconv1": conv_init(keys[1], res_channels, res_channels, 2),
        "dconv2": conv_init(keys[2], res_channels, res_channels, 2),
        "dconv3": conv_init(keys[3], res_channels, res_channels, 2),
        "conv_1": conv_init(keys[4], res_channels, res_channels, 4),
        "conv_2": conv_init(keys[5], res_channels, res_channels, 4),
        "conv_3": conv_init(keys[6], res_channels, res_channels, 2),
        "bn1": (jnp.ones((res_channels,), jnp.float32),
                jnp.zeros((res_channels,), jnp.float32)),
        "bn2": (jnp.ones((res_channels,), jnp.float32),
                jnp.zeros((res_channels,), jnp.float32)),
    }


if __name__ == "__main__":
    batch, in_channels, res_channels, seq = 2, 1, 8, 800   # 800 / 160 = 5 frames
    key = jax.random.PRNGKey(0)
    k_x, k_p = jax.random.split(key)
    x = jax.random.normal(k_x, (batch, in_channels, seq), jnp.float32)
    params = init_params(k_p, in_channels, res_channels)

    fwd = jax.jit(preconv_raw_forward)
    out = jax.block_until_ready(fwd(x, params))

    assert out.shape == (batch, res_channels, seq // 160), out.shape
    assert bool(jnp.all(jnp.isfinite(out)))
    print("KERNEL_OK")
</pallas_src>

<mosaic_0001>
module attributes {stable_mosaic.version = 11 : i64} {
  func.func @kernel(%arg0: memref<2x808xf32, #tpu.memory_space<vmem>>, %arg1: memref<16x269xf32, #tpu.memory_space<vmem>>, %arg2: memref<16x5xf32, #tpu.memory_space<vmem>>) attributes {dimension_semantics = [], scalar_prefetch = 0 : i64, scratch_operands = 0 : i64, tpu.core_type = #tpu.core_type<tc>} {
    %c0 = arith.constant 0 : index
    %c0_0 = arith.constant 0 : index
    %0 = vector.load %arg1[%c0, %c0_0] : memref<16x269xf32, #tpu.memory_space<vmem>>, vector<16x32xf32>
    %c0_1 = arith.constant 0 : index
    %c32 = arith.constant 32 : index
    %1 = vector.load %arg1[%c0_1, %c32] : memref<16x269xf32, #tpu.memory_space<vmem>>, vector<16x32xf32>
    %c0_2 = arith.constant 0 : index
    %c64 = arith.constant 64 : index
    %2 = vector.load %arg1[%c0_2, %c64] : memref<16x269xf32, #tpu.memory_space<vmem>>, vector<16x32xf32>
    %c0_3 = arith.constant 0 : index
    %c96 = arith.constant 96 : index
    %3 = vector.load %arg1[%c0_3, %c96] : memref<16x269xf32, #tpu.memory_space<vmem>>, vector<16x32xf32>
    %c0_4 = arith.constant 0 : index
    %c128 = arith.constant 128 : index
    %4 = vector.load %arg1[%c0_4, %c128] : memref<16x269xf32, #tpu.memory_space<vmem>>, vector<16x64xf32>
    %c0_5 = arith.constant 0 : index
    %c192 = arith.constant 192 : index
    %5 = vector.load %arg1[%c0_5, %c192] : memref<16x269xf32, #tpu.memory_space<vmem>>, vector<16x64xf32>
    %c0_6 = arith.constant 0 : index
    %c256 = arith.constant 256 : index
    %6 = vector.load %arg1[%c0_6, %c256] : memref<16x269xf32, #tpu.memory_space<vmem>>, vector<16x1xf32>
    %c0_7 = arith.constant 0 : index
    %c257 = arith.constant 257 : index
    %7 = vector.load %arg1[%c0_7, %c257] : memref<16x269xf32, #tpu.memory_space<vmem>>, vector<16x1xf32>
    %c0_8 = arith.constant 0 : index
    %c258 = arith.constant 258 : index
    %8 = vector.load %arg1[%c0_8, %c258] : memref<16x269xf32, #tpu.memory_space<vmem>>, vector<16x1xf32>
    %c0_9 = arith.constant 0 : index
    %c259 = arith.constant 259 : index
    %9 = vector.load %arg1[%c0_9, %c259] : memref<16x269xf32, #tpu.memory_space<vmem>>, vector<16x1xf32>
    %c0_10 = arith.constant 0 : index
    %c260 = arith.constant 260 : index
    %10 = vector.load %arg1[%c0_10, %c260] : memref<16x269xf32, #tpu.memory_space<vmem>>, vector<16x1xf32>
    %c0_11 = arith.constant 0 : index
    %c261 = arith.constant 261 : index
    %11 = vector.load %arg1[%c0_11, %c261] : memref<16x269xf32, #tpu.memory_space<vmem>>, vector<16x1xf32>
    %c0_12 = arith.constant 0 : index
    %c262 = arith.constant 262 : index
    %12 = vector.load %arg1[%c0_12, %c262] : memref<16x269xf32, #tpu.memory_space<vmem>>, vector<16x1xf32>
    %c0_13 = arith.constant 0 : index
    %c263 = arith.constant 263 : index
    %13 = vector.load %arg1[%c0_13, %c263] : memref<16x269xf32, #tpu.memory_space<vmem>>, vector<16x1xf32>
    %c0_14 = arith.constant 0 : index
    %c264 = arith.constant 264 : index
    %14 = vector.load %arg1[%c0_14, %c264] : memref<16x269xf32, #tpu.memory_space<vmem>>, vector<16x1xf32>
    %c0_15 = arith.constant 0 : index
    %c265 = arith.constant 265 : index
    %15 = vector.load %arg1[%c0_15, %c265] : memref<16x269xf32, #tpu.memory_space<vmem>>, vector<8x1xf32>
    %c0_16 = arith.constant 0 : index
    %c266 = arith.constant 266 : index
    %16 = vector.load %arg1[%c0_16, %c266] : memref<16x269xf32, #tpu.memory_space<vmem>>, vector<8x1xf32>
    %c0_17 = arith.constant 0 : index
    %c267 = arith.constant 267 : index
    %17 = vector.load %arg1[%c0_17, %c267] : memref<16x269xf32, #tpu.memory_space<vmem>>, vector<8x1xf32>
    %c0_18 = arith.constant 0 : index
    %c268 = arith.constant 268 : index
    %18 = vector.load %arg1[%c0_18, %c268] : memref<16x269xf32, #tpu.memory_space<vmem>>, vector<8x1xf32>
    %c0_19 = arith.constant 0 : index
    %c0_20 = arith.constant 0 : index
    %19 = vector.load %arg0[%c0_19, %c0_20] : memref<2x808xf32, #tpu.memory_space<vmem>>, vector<2x808xf32>
    %20 = vector.extract_strided_slice %19 {offsets = [0, 0], sizes = [1, 808], strides = [1, 1]} : vector<2x808xf32> to vector<1x808xf32>
    %21 = vector.shape_cast %20 : vector<1x808xf32> to vector<1x808xf32>
    %22 = vector.broadcast %21 : vector<1x808xf32> to vector<8x808xf32>
    %23 = vector.extract_strided_slice %19 {offsets = [1, 0], sizes = [1, 808], strides = [1, 1]} : vector<2x808xf32> to vector<1x808xf32>
    %24 = vector.shape_cast %23 : vector<1x808xf32> to vector<1x808xf32>
    %25 = vector.broadcast %24 : vector<1x808xf32> to vector<8x808xf32>
    %26 = tpu.concatenate %22, %25 in 0 : vector<8x808xf32>, vector<8x808xf32> -> vector<16x808xf32>
    %27 = vector.extract_strided_slice %26 {offsets = [0, 0], sizes = [16, 807], strides = [1, 1]} : vector<16x808xf32> to vector<16x807xf32>
    %28 = vector.broadcast %6 : vector<16x1xf32> to vector<16x807xf32>
    %29 = arith.mulf %28, %27 : vector<16x807xf32>
    %30 = vector.extract_strided_slice %26 {offsets = [0, 1], sizes = [16, 807], strides = [1, 1]} : vector<16x808xf32> to vector<16x807xf32>
    %31 = vector.broadcast %7 : vector<16x1xf32> to vector<16x807xf32>
    %32 = arith.mulf %31, %30 : vector<16x807xf32>
    %33 = arith.addf %29, %32 : vector<16x807xf32>
    %34 = vector.broadcast %8 : vector<16x1xf32> to vector<16x807xf32>
    %35 = arith.addf %33, %34 : vector<16x807xf32>
    %36 = vector.extract_strided_slice %35 {offsets = [0, 0], sizes = [16, 806], strides = [1, 1]} : vector<16x807xf32> to vector<16x806xf32>
    %37 = vector.extract_strided_slice %35 {offsets = [0, 1], sizes = [16, 806], strides = [1, 1]} : vector<16x807xf32> to vector<16x806xf32>
    %38 = tpu.concatenate %36, %37 in 0 : vector<16x806xf32>, vector<16x806xf32> -> vector<32x806xf32>
    %cst = arith.constant dense<0.000000e+00> : vector<16x806xf32>
    %39 = tpu.matmul %0, %38, %cst {dimension_numbers = #tpu.dot_dimension_numbers<[1], [0], [0], [1], [0, 0, 1, 1], [], []>} : vector<16x32xf32>, vector<32x806xf32>, vector<16x806xf32> -> vector<16x806xf32>
    %40 = vector.broadcast %9 : vector<16x1xf32> to vector<16x806xf32>
    %41 = arith.addf %39, %40 : vector<16x806xf32>
    %42 = vector.extract_strided_slice %41 {offsets = [0, 0], sizes = [16, 804], strides = [1, 1]} : vector<16x806xf32> to vector<16x804xf32>
    %43 = vector.extract_strided_slice %41 {offsets = [0, 2], sizes = [16, 804], strides = [1, 1]} : vector<16x806xf32> to vector<16x804xf32>
    %44 = tpu.concatenate %42, %43 in 0 : vector<16x804xf32>, vector<16x804xf32> -> vector<32x804xf32>
    %cst_21 = arith.constant dense<0.000000e+00> : vector<16x804xf32>
    %45 = tpu.matmul %1, %44, %cst_21 {dimension_numbers = #tpu.dot_dimension_numbers<[1], [0], [0], [1], [0, 0, 1, 1], [], []>} : vector<16x32xf32>, vector<32x804xf32>, vector<16x804xf32> -> vector<16x804xf32>
    %46 = vector.broadcast %10 : vector<16x1xf32> to vector<16x804xf32>
    %47 = arith.addf %45, %46 : vector<16x804xf32>
    %48 = vector.extract_strided_slice %47 {offsets = [0, 0], sizes = [16, 800], strides = [1, 1]} : vector<16x804xf32> to vector<16x800xf32>
    %49 = vector.extract_strided_slice %47 {offsets = [0, 4], sizes = [16, 800], strides = [1, 1]} : vector<16x804xf32> to vector<16x800xf32>
    %50 = tpu.concatenate %48, %49 in 0 : vector<16x800xf32>, vector<16x800xf32> -> vector<32x800xf32>
    %cst_22 = arith.constant dense<0.000000e+00> : vector<16x800xf32>
    %51 = tpu.matmul %2, %50, %cst_22 {dimension_numbers = #tpu.dot_dimension_numbers<[1], [0], [0], [1], [0, 0, 1, 1], [], []>} : vector<16x32xf32>, vector<32x800xf32>, vector<16x800xf32> -> vector<16x800xf32>
    %52 = vector.broadcast %11 : vector<16x1xf32> to vector<16x800xf32>
    %53 = arith.addf %51, %52 : vector<16x800xf32>
    %cst_23 = arith.constant dense<0.000000e+00> : vector<16xf32>
    %54 = vector.multi_reduction <add>, %53, %cst_23 [1] : vector<16x800xf32> to vector<16xf32>
    %55 = vector.shape_cast %54 : vector<16xf32> to vector<16x1xf32>
    %56 = arith.mulf %53, %53 : vector<16x800xf32>
    %cst_24 = arith.constant dense<0.000000e+00> : vector<16xf32>
    %57 = vector.multi_reduction <add>, %56, %cst_24 [1] : vector<16x800xf32> to vector<16xf32>
    %58 = vector.shape_cast %57 : vector<16xf32> to vector<16x1xf32>
    %59 = vector.extract_strided_slice %55 {offsets = [0, 0], sizes = [8, 1], strides = [1, 1]} : vector<16x1xf32> to vector<8x1xf32>
    %60 = vector.extract_strided_slice %58 {offsets = [0, 0], sizes = [8, 1], strides = [1, 1]} : vector<16x1xf32> to vector<8x1xf32>
    %61 = vector.extract_strided_slice %55 {offsets = [8, 0], sizes = [8, 1], strides = [1, 1]} : vector<16x1xf32> to vector<8x1xf32>
    %62 = arith.addf %59, %61 : vector<8x1xf32>
    %63 = vector.extract_strided_slice %58 {offsets = [8, 0], sizes = [8, 1], strides = [1, 1]} : vector<16x1xf32> to vector<8x1xf32>
    %64 = arith.addf %60, %63 : vector<8x1xf32>
    %cst_25 = arith.constant 1.600000e+03 : f32
    %65 = vector.broadcast %cst_25 : f32 to vector<8x1xf32>
    %66 = arith.divf %62, %65 : vector<8x1xf32>
    %cst_26 = arith.constant 1.600000e+03 : f32
    %67 = vector.broadcast %cst_26 : f32 to vector<8x1xf32>
    %68 = arith.divf %64, %67 : vector<8x1xf32>
    %69 = arith.mulf %66, %66 : vector<8x1xf32>
    %70 = arith.subf %68, %69 : vector<8x1xf32>
    %cst_27 = arith.constant 0.000000e+00 : f32
    %71 = vector.broadcast %cst_27 : f32 to vector<8x1xf32>
    %72 = arith.maximumf %70, %71 : vector<8x1xf32>
    %cst_28 = arith.constant 9.99999974E-6 : f32
    %73 = vector.broadcast %cst_28 : f32 to vector<8x1xf32>
    %74 = arith.addf %72, %73 : vector<8x1xf32>
    %75 = math.rsqrt %74 : vector<8x1xf32>
    %76 = arith.mulf %15, %75 : vector<8x1xf32>
    %77 = arith.mulf %66, %76 : vector<8x1xf32>
    %78 = arith.subf %16, %77 : vector<8x1xf32>
    %79 = tpu.concatenate %76, %76 in 0 : vector<8x1xf32>, vector<8x1xf32> -> vector<16x1xf32>
    %80 = tpu.concatenate %78, %78 in 0 : vector<8x1xf32>, vector<8x1xf32> -> vector<16x1xf32>
    %81 = vector.broadcast %79 : vector<16x1xf32> to vector<16x800xf32>
    %82 = arith.mulf %53, %81 : vector<16x800xf32>
    %83 = vector.broadcast %80 : vector<16x1xf32> to vector<16x800xf32>
    %84 = arith.addf %82, %83 : vector<16x800xf32>
    %85 = vector.extract_strided_slice %84 {offsets = [0, 0], sizes = [16, 797], strides = [1, 1]} : vector<16x800xf32> to vector<16x797xf32>
    %86 = vector.extract_strided_slice %84 {offsets = [0, 1], sizes = [16, 797], strides = [1, 1]} : vector<16x800xf32> to vector<16x797xf32>
    %87 = vector.extract_strided_slice %84 {offsets = [0, 2], sizes = [16, 797], strides = [1, 1]} : vector<16x800xf32> to vector<16x797xf32>
    %88 = vector.extract_strided_slice %84 {offsets = [0, 3], sizes = [16, 797], strides = [1, 1]} : vector<16x800xf32> to vector<16x797xf32>
    %89 = tpu.concatenate %85, %86, %87, %88 in 0 : vector<16x797xf32>, vector<16x797xf32>, vector<16x797xf32>, vector<16x797xf32> -> vector<64x797xf32>
    %cst_29 = arith.constant dense<0.000000e+00> : vector<16x797xf32>
    %90 = tpu.matmul %4, %89, %cst_29 {dimension_numbers = #tpu.dot_dimension_numbers<[1], [0], [0], [1], [0, 0, 1, 1], [], []>} : vector<16x64xf32>, vector<64x797xf32>, vector<16x797xf32> -> vector<16x797xf32>
    %91 = tpu.iota {dimensions = array<i32: 0>} : vector<797x200xi32>
    %92 = tpu.iota {dimensions = array<i32: 1>} : vector<797x200xi32>
    %c4_i32 = arith.constant 4 : i32
    %93 = vector.broadcast %c4_i32 : i32 to vector<797x200xi32>
    %94 = arith.muli %93, %92 : vector<797x200xi32>
    %c0_i32 = arith.constant 0 : i32
    %95 = vector.broadcast %c0_i32 : i32 to vector<797x200xi32>
    %96 = arith.addi %94, %95 : vector<797x200xi32>
    %97 = arith.cmpi eq, %91, %96 : vector<797x200xi32>
    %98 = arith.extui %97 : vector<797x200xi1> to vector<797x200xi32>
    %99 = arith.sitofp %98 : vector<797x200xi32> to vector<797x200xf32>
    %cst_30 = arith.constant dense<0.000000e+00> : vector<16x200xf32>
    %100 = tpu.matmul %90, %99, %cst_30 {dimension_numbers = #tpu.dot_dimension_numbers<[1], [0], [0], [1], [0, 0, 1, 1], [], []>} : vector<16x797xf32>, vector<797x200xf32>, vector<16x200xf32> -> vector<16x200xf32>
    %101 = vector.broadcast %12 : vector<16x1xf32> to vector<16x200xf32>
    %102 = arith.addf %100, %101 : vector<16x200xf32>
    %103 = vector.extract_strided_slice %102 {offsets = [0, 0], sizes = [16, 197], strides = [1, 1]} : vector<16x200xf32> to vector<16x197xf32>
    %104 = vector.extract_strided_slice %102 {offsets = [0, 1], sizes = [16, 197], strides = [1, 1]} : vector<16x200xf32> to vector<16x197xf32>
    %105 = vector.extract_strided_slice %102 {offsets = [0, 2], sizes = [16, 197], strides = [1, 1]} : vector<16x200xf32> to vector<16x197xf32>
    %106 = vector.extract_strided_slice %102 {offsets = [0, 3], sizes = [16, 197], strides = [1, 1]} : vector<16x200xf32> to vector<16x197xf32>
    %107 = tpu.concatenate %103, %104, %105, %106 in 0 : vector<16x197xf32>, vector<16x197xf32>, vector<16x197xf32>, vector<16x197xf32> -> vector<64x197xf32>
    %cst_31 = arith.constant dense<0.000000e+00> : vector<16x197xf32>
    %108 = tpu.matmul %5, %107, %cst_31 {dimension_numbers = #tpu.dot_dimension_numbers<[1], [0], [0], [1], [0, 0, 1, 1], [], []>} : vector<16x64xf32>, vector<64x197xf32>, vector<16x197xf32> -> vector<16x197xf32>
    %109 = tpu.iota {dimensions = array<i32: 0>} : vector<197x50xi32>
    %110 = tpu.iota {dimensions = array<i32: 1>} : vector<197x50xi32>
    %c4_i32_32 = arith.constant 4 : i32
    %111 = vector.broadcast %c4_i32_32 : i32 to vector<197x50xi32>
    %112 = arith.muli %111, %110 : vector<197x50xi32>
    %c0_i32_33 = arith.constant 0 : i32
    %113 = vector.broadcast %c0_i32_33 : i32 to vector<197x50xi32>
    %114 = arith.addi %112, %113 : vector<197x50xi32>
    %115 = arith.cmpi eq, %109, %114 : vector<197x50xi32>
    %116 = arith.extui %115 : vector<197x50xi1> to vector<197x50xi32>
    %117 = arith.sitofp %116 : vector<197x50xi32> to vector<197x50xf32>
    %cst_34 = arith.constant dense<0.000000e+00> : vector<16x50xf32>
    %118 = tpu.matmul %108, %117, %cst_34 {dimension_numbers = #tpu.dot_dimension_numbers<[1], [0], [0], [1], [0, 0, 1, 1], [], []>} : vector<16x197xf32>, vector<197x50xf32>, vector<16x50xf32> -> vector<16x50xf32>
    %119 = vector.broadcast %13 : vector<16x1xf32> to vector<16x50xf32>
    %120 = arith.addf %118, %119 : vector<16x50xf32>
    %121 = vector.extract_strided_slice %120 {offsets = [0, 0], sizes = [16, 49], strides = [1, 1]} : vector<16x50xf32> to vector<16x49xf32>
    %122 = vector.extract_strided_slice %120 {offsets = [0, 1], sizes = [16, 49], strides = [1, 1]} : vector<16x50xf32> to vector<16x49xf32>
    %123 = tpu.concatenate %121, %122 in 0 : vector<16x49xf32>, vector<16x49xf32> -> vector<32x49xf32>
    %cst_35 = arith.constant dense<0.000000e+00> : vector<16x49xf32>
    %124 = tpu.matmul %3, %123, %cst_35 {dimension_numbers = #tpu.dot_dimension_numbers<[1], [0], [0], [1], [0, 0, 1, 1], [], []>} : vector<16x32xf32>, vector<32x49xf32>, vector<16x49xf32> -> vector<16x49xf32>
    %125 = tpu.iota {dimensions = array<i32: 0>} : vector<49x25xi32>
    %126 = tpu.iota {dimensions = array<i32: 1>} : vector<49x25xi32>
    %c2_i32 = arith.constant 2 : i32
    %127 = vector.broadcast %c2_i32 : i32 to vector<49x25xi32>
    %128 = arith.muli %127, %126 : vector<49x25xi32>
    %c0_i32_36 = arith.constant 0 : i32
    %129 = vector.broadcast %c0_i32_36 : i32 to vector<49x25xi32>
    %130 = arith.addi %128, %129 : vector<49x25xi32>
    %131 = arith.cmpi eq, %125, %130 : vector<49x25xi32>
    %132 = arith.extui %131 : vector<49x25xi1> to vector<49x25xi32>
    %133 = arith.sitofp %132 : vector<49x25xi32> to vector<49x25xf32>
    %cst_37 = arith.constant dense<0.000000e+00> : vector<16x25xf32>
    %134 = tpu.matmul %124, %133, %cst_37 {dimension_numbers = #tpu.dot_dimension_numbers<[1], [0], [0], [1], [0, 0, 1, 1], [], []>} : vector<16x49xf32>, vector<49x25xf32>, vector<16x25xf32> -> vector<16x25xf32>
    %135 = vector.broadcast %14 : vector<16x1xf32> to vector<16x25xf32>
    %136 = arith.addf %134, %135 : vector<16x25xf32>
    %137 = tpu.iota {dimensions = array<i32: 0>} : vector<25x5xi32>
    %138 = tpu.iota {dimensions = array<i32: 1>} : vector<25x5xi32>
    %c5_i32 = arith.constant 5 : i32
    %139 = vector.broadcast %c5_i32 : i32 to vector<25x5xi32>
    %140 = arith.muli %139, %138 : vector<25x5xi32>
    %c0_i32_38 = arith.constant 0 : i32
    %141 = vector.broadcast %c0_i32_38 : i32 to vector<25x5xi32>
    %142 = arith.addi %140, %141 : vector<25x5xi32>
    %143 = arith.cmpi eq, %137, %142 : vector<25x5xi32>
    %144 = arith.extui %143 : vector<25x5xi1> to vector<25x5xi32>
    %145 = arith.sitofp %144 : vector<25x5xi32> to vector<25x5xf32>
    %cst_39 = arith.constant dense<0.000000e+00> : vector<16x5xf32>
    %146 = tpu.matmul %136, %145, %cst_39 {dimension_numbers = #tpu.dot_dimension_numbers<[1], [0], [0], [1], [0, 0, 1, 1], [], []>} : vector<16x25xf32>, vector<25x5xf32>, vector<16x5xf32> -> vector<16x5xf32>
    %147 = tpu.iota {dimensions = array<i32: 0>} : vector<25x5xi32>
    %148 = tpu.iota {dimensions = array<i32: 1>} : vector<25x5xi32>
    %c5_i32_40 = arith.constant 5 : i32
    %149 = vector.broadcast %c5_i32_40 : i32 to vector<25x5xi32>
    %150 = arith.muli %149, %148 : vector<25x5xi32>
    %c1_i32 = arith.constant 1 : i32
    %151 = vector.broadcast %c1_i32 : i32 to vector<25x5xi32>
    %152 = arith.addi %150, %151 : vector<25x5xi32>
    %153 = arith.cmpi eq, %147, %152 : vector<25x5xi32>
    %154 = arith.extui %153 : vector<25x5xi1> to vector<25x5xi32>
    %155 = arith.sitofp %154 : vector<25x5xi32> to vector<25x5xf32>
    %cst_41 = arith.constant dense<0.000000e+00> : vector<16x5xf32>
    %156 = tpu.matmul %136, %155, %cst_41 {dimension_numbers = #tpu.dot_dimension_numbers<[1], [0], [0], [1], [0, 0, 1, 1], [], []>} : vector<16x25xf32>, vector<25x5xf32>, vector<16x5xf32> -> vector<16x5xf32>
    %157 = arith.maximumf %146, %156 : vector<16x5xf32>
    %158 = tpu.iota {dimensions = array<i32: 0>} : vector<25x5xi32>
    %159 = tpu.iota {dimensions = array<i32: 1>} : vector<25x5xi32>
    %c5_i32_42 = arith.constant 5 : i32
    %160 = vector.broadcast %c5_i32_42 : i32 to vector<25x5xi32>
    %161 = arith.muli %160, %159 : vector<25x5xi32>
    %c2_i32_43 = arith.constant 2 : i32
    %162 = vector.broadcast %c2_i32_43 : i32 to vector<25x5xi32>
    %163 = arith.addi %161, %162 : vector<25x5xi32>
    %164 = arith.cmpi eq, %158, %163 : vector<25x5xi32>
    %165 = arith.extui %164 : vector<25x5xi1> to vector<25x5xi32>
    %166 = arith.sitofp %165 : vector<25x5xi32> to vector<25x5xf32>
    %cst_44 = arith.constant dense<0.000000e+00> : vector<16x5xf32>
    %167 = tpu.matmul %136, %166, %cst_44 {dimension_numbers = #tpu.dot_dimension_numbers<[1], [0], [0], [1], [0, 0, 1, 1], [], []>} : vector<16x25xf32>, vector<25x5xf32>, vector<16x5xf32> -> vector<16x5xf32>
    %168 = arith.maximumf %157, %167 : vector<16x5xf32>
    %169 = tpu.iota {dimensions = array<i32: 0>} : vector<25x5xi32>
    %170 = tpu.iota {dimensions = array<i32: 1>} : vector<25x5xi32>
    %c5_i32_45 = arith.constant 5 : i32
    %171 = vector.broadcast %c5_i32_45 : i32 to vector<25x5xi32>
    %172 = arith.muli %171, %170 : vector<25x5xi32>
    %c3_i32 = arith.constant 3 : i32
    %173 = vector.broadcast %c3_i32 : i32 to vector<25x5xi32>
    %174 = arith.addi %172, %173 : vector<25x5xi32>
    %175 = arith.cmpi eq, %169, %174 : vector<25x5xi32>
    %176 = arith.extui %175 : vector<25x5xi1> to vector<25x5xi32>
    %177 = arith.sitofp %176 : vector<25x5xi32> to vector<25x5xf32>
    %cst_46 = arith.constant dense<0.000000e+00> : vector<16x5xf32>
    %178 = tpu.matmul %136, %177, %cst_46 {dimension_numbers = #tpu.dot_dimension_numbers<[1], [0], [0], [1], [0, 0, 1, 1], [], []>} : vector<16x25xf32>, vector<25x5xf32>, vector<16x5xf32> -> vector<16x5xf32>
    %179 = arith.maximumf %168, %178 : vector<16x5xf32>
    %180 = tpu.iota {dimensions = array<i32: 0>} : vector<25x5xi32>
    %181 = tpu.iota {dimensions = array<i32: 1>} : vector<25x5xi32>
    %c5_i32_47 = arith.constant 5 : i32
    %182 = vector.broadcast %c5_i32_47 : i32 to vector<25x5xi32>
    %183 = arith.muli %182, %181 : vector<25x5xi32>
    %c4_i32_48 = arith.constant 4 : i32
    %184 = vector.broadcast %c4_i32_48 : i32 to vector<25x5xi32>
    %185 = arith.addi %183, %184 : vector<25x5xi32>
    %186 = arith.cmpi eq, %180, %185 : vector<25x5xi32>
    %187 = arith.extui %186 : vector<25x5xi1> to vector<25x5xi32>
    %188 = arith.sitofp %187 : vector<25x5xi32> to vector<25x5xf32>
    %cst_49 = arith.constant dense<0.000000e+00> : vector<16x5xf32>
    %189 = tpu.matmul %136, %188, %cst_49 {dimension_numbers = #tpu.dot_dimension_numbers<[1], [0], [0], [1], [0, 0, 1, 1], [], []>} : vector<16x25xf32>, vector<25x5xf32>, vector<16x5xf32> -> vector<16x5xf32>
    %190 = arith.maximumf %179, %189 : vector<16x5xf32>
    %cst_50 = arith.constant dense<0.000000e+00> : vector<16xf32>
    %191 = vector.multi_reduction <add>, %190, %cst_50 [1] : vector<16x5xf32> to vector<16xf32>
    %192 = vector.shape_cast %191 : vector<16xf32> to vector<16x1xf32>
    %193 = arith.mulf %190, %190 : vector<16x5xf32>
    %cst_51 = arith.constant dense<0.000000e+00> : vector<16xf32>
    %194 = vector.multi_reduction <add>, %193, %cst_51 [1] : vector<16x5xf32> to vector<16xf32>
    %195 = vector.shape_cast %194 : vector<16xf32> to vector<16x1xf32>
    %196 = vector.extract_strided_slice %192 {offsets = [0, 0], sizes = [8, 1], strides = [1, 1]} : vector<16x1xf32> to vector<8x1xf32>
    %197 = vector.extract_strided_slice %195 {offsets = [0, 0], sizes = [8, 1], strides = [1, 1]} : vector<16x1xf32> to vector<8x1xf32>
    %198 = vector.extract_strided_slice %192 {offsets = [8, 0], sizes = [8, 1], strides = [1, 1]} : vector<16x1xf32> to vector<8x1xf32>
    %199 = arith.addf %196, %198 : vector<8x1xf32>
    %200 = vector.extract_strided_slice %195 {offsets = [8, 0], sizes = [8, 1], strides = [1, 1]} : vector<16x1xf32> to vector<8x1xf32>
    %201 = arith.addf %197, %200 : vector<8x1xf32>
    %cst_52 = arith.constant 1.000000e+01 : f32
    %202 = vector.broadcast %cst_52 : f32 to vector<8x1xf32>
    %203 = arith.divf %199, %202 : vector<8x1xf32>
    %cst_53 = arith.constant 1.000000e+01 : f32
    %204 = vector.broadcast %cst_53 : f32 to vector<8x1xf32>
    %205 = arith.divf %201, %204 : vector<8x1xf32>
    %206 = arith.mulf %203, %203 : vector<8x1xf32>
    %207 = arith.subf %205, %206 : vector<8x1xf32>
    %cst_54 = arith.constant 0.000000e+00 : f32
    %208 = vector.broadcast %cst_54 : f32 to vector<8x1xf32>
    %209 = arith.maximumf %207, %208 : vector<8x1xf32>
    %cst_55 = arith.constant 9.99999974E-6 : f32
    %210 = vector.broadcast %cst_55 : f32 to vector<8x1xf32>
    %211 = arith.addf %209, %210 : vector<8x1xf32>
    %212 = math.rsqrt %211 : vector<8x1xf32>
    %213 = arith.mulf %17, %212 : vector<8x1xf32>
    %214 = arith.mulf %203, %213 : vector<8x1xf32>
    %215 = arith.subf %18, %214 : vector<8x1xf32>
    %216 = tpu.concatenate %213, %213 in 0 : vector<8x1xf32>, vector<8x1xf32> -> vector<16x1xf32>
    %217 = tpu.concatenate %215, %215 in 0 : vector<8x1xf32>, vector<8x1xf32> -> vector<16x1xf32>
    %218 = vector.broadcast %216 : vector<16x1xf32> to vector<16x5xf32>
    %219 = arith.mulf %190, %218 : vector<16x5xf32>
    %220 = vector.broadcast %217 : vector<16x1xf32> to vector<16x5xf32>
    %221 = arith.addf %219, %220 : vector<16x5xf32>
    %c0_56 = arith.constant 0 : index
    %c0_57 = arith.constant 0 : index
    %222 = vector.load %arg2[%c0_56, %c0_57] : memref<16x5xf32, #tpu.memory_space<vmem>>, vector<16x5xf32>
    tpu.vector_store %arg2[%c0_56, %c0_57], %221 {strides = array<i32>} : memref<16x5xf32, #tpu.memory_space<vmem>>, vector<16x5xf32>,
    return
  }
}

</mosaic_0001>

<llo_original>
// kernel: tile.49
$region0: #{tile.49}
  #allocation0 [shape = 's32[1]{0}', space=sflag, size = 0x4, scoped, tag = 'scoped memory for tile.49']
  %s0 = inlined_call_operand.vmem [shape: f32[8], index: 0, kind: input, shape index: {}]
  %s1 = inlined_call_operand.vmem [shape: f32[2,8], index: 1, kind: output, shape index: {}]
  // Predicated region
  $region2: #{tile.49} parent=0 // pred_check
    _
  $region3: #{tile.49} parent=0 // pred_check_branch
    %3 = sbr.rel (0) target = $region5
  $region4: #{tile.49} parent=0 // pred_region
    _
  $region5: #{tile.49} parent=0 // pred_fallthru
    _
  %v4 = vld [vmem:[%s0] ss:$0 sm:$0xff]
  %5 = vst [vmem:[%s1] sm:$0x3] %v4

// kernel: tile.0
$region0: #{tile.0}
  %s0 = inlined_call_operand.vmem [shape: f32[2,8], index: 0, kind: input, shape index: {}]
  %s1 = inlined_call_operand.vmem [shape: f32[16,1], index: 1, kind: output, shape index: {}]
  $region1: #{tile.0} parent=0
    #allocation0 [shape = 'u8[4096]{0}', space=vmem, size = 0x1000, scoped, tag = 'scoped mem for input reshape']
    %s3 = ssub.s32 4, 1
    %v4 = vld [vmem:[%s0] sm:%s3]
    %5 = vst [vmem:[#allocation0] sm:%s3] %v4
    %v6 = vld [vmem:[#allocation0] sm:$0x3]
    %vm7 = vcmask 7168
    %8 = vst.msk [vmem:[%s1] ss:$8 sm:$0x3] %vm7, %v6
    %v9 = vld [vmem:[#allocation0] sm:$0x3]
    %10 = vrot.lane.b32.xlu0 %v9, 127
    %v11 = vpop.permute.xlu0 %10
    %vm12 = vcmask 7168
    %s13 = scalar_lea.vmem %s1, 1
    %14 = vst.msk [vmem:[%s13] ss:$8 sm:$0x3] %vm12, %v11
    %v15 = vld [vmem:[#allocation0] sm:$0x3]
    %16 = vrot.lane.b32.xlu0 %v15, 126
    %v17 = vpop.permute.xlu0 %16
    %vm18 = vcmask 7168
    %s19 = scalar_lea.vmem %s1, 2
    %20 = vst.msk [vmem:[%s19] ss:$8 sm:$0x3] %vm18, %v17
    %v21 = vld [vmem:[#allocation0] sm:$0x3]
    %22 = vrot.lane.b32.xlu0 %v21, 125
    %v23 = vpop.permute.xlu0 %22
    %vm24 = vcmask 7168
    %s25 = scalar_lea.vmem %s1, 3
    %26 = vst.msk [vmem:[%s25] ss:$8 sm:$0x3] %vm24, %v23
    %v27 = vld [vmem:[#allocation0] sm:$0x3]
    %28 = vrot.lane.b32.xlu0 %v27, 124
    %v29 = vpop.permute.xlu0 %28
    %vm30 = vcmask 7168
    %s31 = scalar_lea.vmem %s1, 4
    %32 = vst.msk [vmem:[%s31] ss:$8 sm:$0x3] %vm30, %v29
    %v33 = vld [vmem:[#allocation0] sm:$0x3]
    %34 = vrot.lane.b32.xlu0 %v33, 123
    %v35 = vpop.permute.xlu0 %34
    %vm36 = vcmask 7168
    %s37 = scalar_lea.vmem %s1, 5
    %38 = vst.msk [vmem:[%s37] ss:$8 sm:$0x3] %vm36, %v35
    %v39 = vld [vmem:[#allocation0] sm:$0x3]
    %40 = vrot.lane.b32.xlu0 %v39, 122
    %v41 = vpop.permute.xlu0 %40
    %vm42 = vcmask 7168
    %s43 = scalar_lea.vmem %s1, 6
    %44 = vst.msk [vmem:[%s43] ss:$8 sm:$0x3] %vm42, %v41
    %v45 = vld [vmem:[#allocation0] sm:$0x3]
    %46 = vrot.lane.b32.xlu0 %v45, 121
    %v47 = vpop.permute.xlu0 %46
    %vm48 = vcmask 7168
    %s49 = scalar_lea.vmem %s1, 7
    %50 = vst.msk [vmem:[%s49] ss:$8 sm:$0x3] %vm48, %v47

// kernel: preconv_raw_forward.1
$region0: #{preconv_raw_forward.1}
  #allocation0 [shape = 'u32[]', space=smem, size = 0x4, offset = 0x4, fixed_abs, tag = 'smem constant byte address 0x4 - core index']
  #allocation1 [shape = 'u32[72,128]{1,0:T(1,128)}', space=vmem, size = 0x9000, scoped, tag = 'internal scratch']
  %s0 = inlined_call_operand.vmem [shape: f32[2,808], index: 0, kind: input, shape index: {}]
  %s1 = inlined_call_operand.vmem [shape: f32[16,269], index: 1, kind: input, shape index: {}]
  %s2 = inlined_call_operand.vmem [shape: f32[16,5], index: 2, kind: output, shape index: {}]
  %s3 = sld [smem:[#allocation0]]
  $region18: #{preconv_raw_forward.1} parent=0
    _
  %s5 = ssub.s32 1, %s3
  %s6 = scalar_select 0, %s5, %s3
  // Predicated region
  $region2: #{preconv_raw_forward.1} parent=0 // pred_check
    _
  $region3: #{preconv_raw_forward.1} parent=0 // pred_check_branch
    %8 = sbr.rel (0) target = $region5
  $region4: #{preconv_raw_forward.1} parent=0 // pred_region
    _
  $region5: #{preconv_raw_forward.1} parent=0 // pred_fallthru
    _
  // Predicated region
  $region6: #{preconv_raw_forward.1} parent=0 // pred_check
    _
  $region7: #{preconv_raw_forward.1} parent=0 // pred_check_branch
    %10 = sbr.rel (0) target = $region9
  $region8: #{preconv_raw_forward.1} parent=0 // pred_region
    _
  $region9: #{preconv_raw_forward.1} parent=0 // pred_fallthru
    _
  %v11 = vld [vmem:[%s1] sm:$0xff]
  %v12 = vld [vmem:[%s1 + $0x18] sm:$0xff]
  %v13 = vld [vmem:[%s1 + $0x8] sm:$0xff]
  %v14 = vld [vmem:[%s1 + $0x20] sm:$0xff]
  %v15 = vld [vmem:[%s1 + $0x10] sm:$0xff]
  %v16 = vld [vmem:[%s1 + $0x28] sm:$0xff]
  %v17 = vld [vmem:[%s0] sm:$0xff]
  %v18 = vld [vmem:[%s0 + $0x8] sm:$0x3f]
  %v21 = vperm.slane %v17, 0
  %v22 = vperm.slane %v17, 2
  %v23 = vperm.slane %v17, 4
  %v24 = vperm.slane %v17, 6
  %v25 = vperm.slane %v18, 0
  %v26 = vperm.slane %v18, 2
  %v27 = vperm.slane %v18, 4
  %v35 = vperm.slane %v21, 0
  %v36 = vperm.slane %v22, 0
  %v37 = vperm.slane %v23, 0
  %v38 = vperm.slane %v24, 0
  %v39 = vperm.slane %v25, 0
  %v40 = vperm.slane %v26, 0
  %v41 = vperm.slane %v27, 0
  %v42 = vperm.slane %v17, 1
  %v43 = vperm.slane %v17, 3
  %v44 = vperm.slane %v17, 5
  %v45 = vperm.slane %v17, 7
  %v46 = vperm.slane %v18, 1
  %v47 = vperm.slane %v18, 3
  %v48 = vperm.slane %v18, 5
  %v56 = vperm.slane %v42, 1
  %v57 = vperm.slane %v43, 1
  %v58 = vperm.slane %v44, 1
  %v59 = vperm.slane %v45, 1
  %v60 = vperm.slane %v46, 1
  %v61 = vperm.slane %v47, 1
  %v62 = vperm.slane %v48, 1
  %64 = vset.pattern.permute.xlu0 0
  %65 = vperm.xlu0 %64, %v15
  %v66 = vpop.permute.xlu0 %65
  %69 = vset.pattern.permute.xlu0 0
  %70 = vperm.xlu0 %69, %v16
  %v71 = vpop.permute.xlu0 %70
  %v73 = vmul.f32 %v66, %v35
  %v74 = vmul.f32 %v66, %v36
  %v75 = vmul.f32 %v66, %v37
  %v76 = vmul.f32 %v66, %v38
  %v77 = vmul.f32 %v66, %v39
  %v78 = vmul.f32 %v66, %v40
  %v79 = vmul.f32 %v66, %v41
  %v80 = vmul.f32 %v71, %v56
  %v81 = vmul.f32 %v71, %v57
  %v82 = vmul.f32 %v71, %v58
  %v83 = vmul.f32 %v71, %v59
  %v84 = vmul.f32 %v71, %v60
  %v85 = vmul.f32 %v71, %v61
  %v86 = vmul.f32 %v71, %v62
  %87 = vset.pattern.permute.xlu0 1
  %88 = vperm.xlu0 %87, %v15
  %v89 = vpop.permute.xlu0 %88
  %91 = vset.pattern.permute.xlu0 1
  %92 = vperm.xlu0 %91, %v16
  %v93 = vpop.permute.xlu0 %92
  %v95 = vmul.f32 %v89, %v35
  %v96 = vmul.f32 %v89, %v36
  %v97 = vmul.f32 %v89, %v37
  %v98 = vmul.f32 %v89, %v38
  %v99 = vmul.f32 %v89, %v39
  %v100 = vmul.f32 %v89, %v40
  %v101 = vmul.f32 %v89, %v41
  %v102 = vmul.f32 %v93, %v56
  %v103 = vmul.f32 %v93, %v57
  %v104 = vmul.f32 %v93, %v58
  %v105 = vmul.f32 %v93, %v59
  %v106 = vmul.f32 %v93, %v60
  %v107 = vmul.f32 %v93, %v61
  %v108 = vmul.f32 %v93, %v62
  %123 = vrot.lane.b32.xlu0 %v95, 127
  %v124 = vpop.permute.xlu0 %123
  %125 = vrot.lane.b32.xlu0 %v96, 127
  %v126 = vpop.permute.xlu0 %125
  %127 = vrot.lane.b32.xlu0 %v97, 127
  %v128 = vpop.permute.xlu0 %127
  %129 = vrot.lane.b32.xlu0 %v98, 127
  %v130 = vpop.permute.xlu0 %129
  %131 = vrot.lane.b32.xlu0 %v99, 127
  %v132 = vpop.permute.xlu0 %131
  %133 = vrot.lane.b32.xlu0 %v100, 127
  %v134 = vpop.permute.xlu0 %133
  %135 = vrot.lane.b32.xlu0 %v101, 127
  %v136 = vpop.permute.xlu0 %135
  %137 = vrot.lane.b32.xlu0 %v102, 127
  %v138 = vpop.permute.xlu0 %137
  %139 = vrot.lane.b32.xlu0 %v103, 127
  %v140 = vpop.permute.xlu0 %139
  %141 = vrot.lane.b32.xlu0 %v104, 127
  %v142 = vpop.permute.xlu0 %141
  %143 = vrot.lane.b32.xlu0 %v105, 127
  %v144 = vpop.permute.xlu0 %143
  %145 = vrot.lane.b32.xlu0 %v106, 127
  %v146 = vpop.permute.xlu0 %145
  %147 = vrot.lane.b32.xlu0 %v107, 127
  %v148 = vpop.permute.xlu0 %147
  %149 = vrot.lane.b32.xlu0 %v108, 127
  %v150 = vpop.permute.xlu0 %149
  %vm151 = vcmask 1039360
  %v152 = vsel %vm151, %v124, %v126
  %v153 = vsel %vm151, %v126, %v128
  %v154 = vsel %vm151, %v128, %v130
  %v155 = vsel %vm151, %v130, %v132
  %v156 = vsel %vm151, %v132, %v134
  %v157 = vsel %vm151, %v134, %v136
  %v158 = vsel %vm151, %v138, %v140
  %v159 = vsel %vm151, %v140, %v142
  %v160 = vsel %vm151, %v142, %v144
  %v161 = vsel %vm151, %v144, %v146
  %v162 = vsel %vm151, %v146, %v148
  %v163 = vsel %vm151, %v148, %v150
  %v178 = vadd.f32 %v73, %v152
  %v179 = vadd.f32 %v74, %v153
  %v180 = vadd.f32 %v75, %v154
  %v181 = vadd.f32 %v76, %v155
  %v182 = vadd.f32 %v77, %v156
  %v183 = vadd.f32 %v78, %v157
  %v184 = vadd.f32 %v79, %v136
  %v185 = vadd.f32 %v80, %v158
  %v186 = vadd.f32 %v81, %v159
  %v187 = vadd.f32 %v82, %v160
  %v188 = vadd.f32 %v83, %v161
  %v189 = vadd.f32 %v84, %v162
  %v190 = vadd.f32 %v85, %v163
  %v191 = vadd.f32 %v86, %v150
  %192 = vset.pattern.permute.xlu0 2
  %193 = vperm.xlu0 %192, %v15
  %v194 = vpop.permute.xlu0 %193
  %196 = vset.pattern.permute.xlu0 2
  %197 = vperm.xlu0 %196, %v16
  %v198 = vpop.permute.xlu0 %197
  %v200 = vadd.f32 %v178, %v194
  %v201 = vadd.f32 %v179, %v194
  %v202 = vadd.f32 %v180, %v194
  %v203 = vadd.f32 %v181, %v194
  %v204 = vadd.f32 %v182, %v194
  %v205 = vadd.f32 %v183, %v194
  %v206 = vadd.f32 %v184, %v194
  %v207 = vadd.f32 %v185, %v198
  %v208 = vadd.f32 %v186, %v198
  %v209 = vadd.f32 %v187, %v198
  %v210 = vadd.f32 %v188, %v198
  %v211 = vadd.f32 %v189, %v198
  %v212 = vadd.f32 %v190, %v198
  %v213 = vadd.f32 %v191, %v198
  %228 = vrot.lane.b32.xlu0 %v200, 127
  %v229 = vpop.permute.xlu0 %228
  %230 = vrot.lane.b32.xlu0 %v201, 127
  %v231 = vpop.permute.xlu0 %230
  %232 = vrot.lane.b32.xlu0 %v202, 127
  %v233 = vpop.permute.xlu0 %232
  %234 = vrot.lane.b32.xlu0 %v203, 127
  %v235 = vpop.permute.xlu0 %234
  %236 = vrot.lane.b32.xlu0 %v204, 127
  %v237 = vpop.permute.xlu0 %236
  %238 = vrot.lane.b32.xlu0 %v205, 127
  %v239 = vpop.permute.xlu0 %238
  %240 = vrot.lane.b32.xlu0 %v206, 127
  %v241 = vpop.permute.xlu0 %240
  %242 = vrot.lane.b32.xlu0 %v207, 127
  %v243 = vpop.permute.xlu0 %242
  %244 = vrot.lane.b32.xlu0 %v208, 127
  %v245 = vpop.permute.xlu0 %244
  %246 = vrot.lane.b32.xlu0 %v209, 127
  %v247 = vpop.permute.xlu0 %246
  %248 = vrot.lane.b32.xlu0 %v210, 127
  %v249 = vpop.permute.xlu0 %248
  %250 = vrot.lane.b32.xlu0 %v211, 127
  %v251 = vpop.permute.xlu0 %250
  %252 = vrot.lane.b32.xlu0 %v212, 127
  %v253 = vpop.permute.xlu0 %252
  %254 = vrot.lane.b32.xlu0 %v213, 127
  %v255 = vpop.permute.xlu0 %254
  %v256 = vsel %vm151, %v229, %v231
  %v257 = vsel %vm151, %v231, %v233
  %v258 = vsel %vm151, %v233, %v235
  %v259 = vsel %vm151, %v235, %v237
  %v260 = vsel %vm151, %v237, %v239
  %v261 = vsel %vm151, %v239, %v241
  %v262 = vsel %vm151, %v243, %v245
  %v263 = vsel %vm151, %v245, %v247
  %v264 = vsel %vm151, %v247, %v249
  %v265 = vsel %vm151, %v249, %v251
  %v266 = vsel %vm151, %v251, %v253
  %v267 = vsel %vm151, %v253, %v255
  %282 = vset.pattern.permute.xlu0 3
  %283 = vperm.xlu0 %282, %v15
  %v284 = vpop.permute.xlu0 %283
  %286 = vset.pattern.permute.xlu0 3
  %287 = vperm.xlu0 %286, %v16
  %v288 = vpop.permute.xlu0 %287
  %vm290 = vcmask 261120
  %v292 = vsel %vm290, %v11, 0
  %v295 = vsel %vm290, %v12, 0
  %297 = vmatpush.msra.mxu0 0.0
  %298 = vmatpush.msra.mxu0 0.0
  %299 = vmatpush.msra.mxu0 0.0
  %300 = vmatpush.msra.mxu0 0.0
  %301 = vmatpush.msra.mxu0 0.0
  %302 = vmatpush.msra.mxu0 0.0
  %303 = vmatpush.msra.mxu0 0.0
  %304 = vmatpush.msra.mxu0 0.0
  %305 = vmatpush.msra.mxu0 0.0
  %306 = vmatpush.msra.mxu0 0.0
  %307 = vmatpush.msra.mxu0 0.0
  %308 = vmatpush.msra.mxu0 0.0
  %309 = vmatpush.msra.mxu0 %v262
  %310 = vmatpush.msra.mxu0 %v256
  %311 = vmatpush.msra.mxu0 %v207
  %312 = vmatpush.msra.mxu0 %v200
  %313 = vmatmul.f32.gmra.mxu0 %v292
  %v314 = vpop.f32.mrf.mxu0
  %v315 = vadd.f32 %v284, %v314
  %316 = vmatmul.f32.gmra.mxu0 %v295
  %v317 = vpop.f32.mrf.mxu0
  %v318 = vadd.f32 %v288, %v317
  %319 = vdwg.mxu0
  %320 = vmatpush.msra.mxu0 0.0
  %321 = vmatpush.msra.mxu0 0.0
  %322 = vmatpush.msra.mxu0 0.0
  %323 = vmatpush.msra.mxu0 0.0
  %324 = vmatpush.msra.mxu0 0.0
  %325 = vmatpush.msra.mxu0 0.0
  %326 = vmatpush.msra.mxu0 0.0
  %327 = vmatpush.msra.mxu0 0.0
  %328 = vmatpush.msra.mxu0 0.0
  %329 = vmatpush.msra.mxu0 0.0
  %330 = vmatpush.msra.mxu0 0.0
  %331 = vmatpush.msra.mxu0 0.0
  %332 = vmatpush.msra.mxu0 %v263
  %333 = vmatpush.msra.mxu0 %v257
  %334 = vmatpush.msra.mxu0 %v208
  %335 = vmatpush.msra.mxu0 %v201
  %336 = vmatmul.f32.gmra.mxu0 %v292
  %v337 = vpop.f32.mrf.mxu0
  %v338 = vadd.f32 %v284, %v337
  %339 = vmatmul.f32.gmra.mxu0 %v295
  %v340 = vpop.f32.mrf.mxu0
  %v341 = vadd.f32 %v288, %v340
  %342 = vdwg.mxu0
  %343 = vmatpush.msra.mxu0 0.0
  %344 = vmatpush.msra.mxu0 0.0
  %345 = vmatpush.msra.mxu0 0.0
  %346 = vmatpush.msra.mxu0 0.0
  %347 = vmatpush.msra.mxu0 0.0
  %348 = vmatpush.msra.mxu0 0.0
  %349 = vmatpush.msra.mxu0 0.0
  %350 = vmatpush.msra.mxu0 0.0
  %351 = vmatpush.msra.mxu0 0.0
  %352 = vmatpush.msra.mxu0 0.0
  %353 = vmatpush.msra.mxu0 0.0
  %354 = vmatpush.msra.mxu0 0.0
  %355 = vmatpush.msra.mxu0 %v264
  %356 = vmatpush.msra.mxu0 %v258
  %357 = vmatpush.msra.mxu0 %v209
  %358 = vmatpush.msra.mxu0 %v202
  %359 = vmatmul.f32.gmra.mxu0 %v292
  %v360 = vpop.f32.mrf.mxu0
  %v361 = vadd.f32 %v284, %v360
  %362 = vmatmul.f32.gmra.mxu0 %v295
  %v363 = vpop.f32.mrf.mxu0
  %v364 = vadd.f32 %v288, %v363
  %365 = vdwg.mxu0
  %366 = vmatpush.msra.mxu0 0.0
  %367 = vmatpush.msra.mxu0 0.0
  %368 = vmatpush.msra.mxu0 0.0
  %369 = vmatpush.msra.mxu0 0.0
  %370 = vmatpush.msra.mxu0 0.0
  %371 = vmatpush.msra.mxu0 0.0
  %372 = vmatpush.msra.mxu0 0.0
  %373 = vmatpush.msra.mxu0 0.0
  %374 = vmatpush.msra.mxu0 0.0
  %375 = vmatpush.msra.mxu0 0.0
  %376 = vmatpush.msra.mxu0 0.0
  %377 = vmatpush.msra.mxu0 0.0
  %378 = vmatpush.msra.mxu0 %v265
  %379 = vmatpush.msra.mxu0 %v259
  %380 = vmatpush.msra.mxu0 %v210
  %381 = vmatpush.msra.mxu0 %v203
  %382 = vmatmul.f32.gmra.mxu0 %v292
  %v383 = vpop.f32.mrf.mxu0
  %v384 = vadd.f32 %v284, %v383
  %385 = vmatmul.f32.gmra.mxu0 %v295
  %v386 = vpop.f32.mrf.mxu0
  %v387 = vadd.f32 %v288, %v386
  %388 = vdwg.mxu0
  %389 = vmatpush.msra.mxu0 0.0
  %390 = vmatpush.msra.mxu0 0.0
  %391 = vmatpush.msra.mxu0 0.0
  %392 = vmatpush.msra.mxu0 0.0
  %393 = vmatpush.msra.mxu0 0.0
  %394 = vmatpush.msra.mxu0 0.0
  %395 = vmatpush.msra.mxu0 0.0
  %396 = vmatpush.msra.mxu0 0.0
  %397 = vmatpush.msra.mxu0 0.0
  %398 = vmatpush.msra.mxu0 0.0
  %399 = vmatpush.msra.mxu0 0.0
  %400 = vmatpush.msra.mxu0 0.0
  %401 = vmatpush.msra.mxu0 %v266
  %402 = vmatpush.msra.mxu0 %v260
  %403 = vmatpush.msra.mxu0 %v211
  %404 = vmatpush.msra.mxu0 %v204
  %405 = vmatmul.f32.gmra.mxu0 %v292
  %v406 = vpop.f32.mrf.mxu0
  %v407 = vadd.f32 %v284, %v406
  %408 = vmatmul.f32.gmra.mxu0 %v295
  %v409 = vpop.f32.mrf.mxu0
  %v410 = vadd.f32 %v288, %v409
  %411 = vdwg.mxu0
  %412 = vmatpush.msra.mxu0 0.0
  %413 = vmatpush.msra.mxu0 0.0
  %414 = vmatpush.msra.mxu0 0.0
  %415 = vmatpush.msra.mxu0 0.0
  %416 = vmatpush.msra.mxu0 0.0
  %417 = vmatpush.msra.mxu0 0.0
  %418 = vmatpush.msra.mxu0 0.0
  %419 = vmatpush.msra.mxu0 0.0
  %420 = vmatpush.msra.mxu0 0.0
  %421 = vmatpush.msra.mxu0 0.0
  %422 = vmatpush.msra.mxu0 0.0
  %423 = vmatpush.msra.mxu0 0.0
  %424 = vmatpush.msra.mxu0 %v267
  %425 = vmatpush.msra.mxu0 %v261
  %426 = vmatpush.msra.mxu0 %v212
  %427 = vmatpush.msra.mxu0 %v205
  %428 = vmatmul.f32.gmra.mxu0 %v292
  %v429 = vpop.f32.mrf.mxu0
  %v430 = vadd.f32 %v284, %v429
  %431 = vmatmul.f32.gmra.mxu0 %v295
  %v432 = vpop.f32.mrf.mxu0
  %v433 = vadd.f32 %v288, %v432
  %434 = vdwg.mxu0
  %435 = vmatpush.msra.mxu0 0.0
  %436 = vmatpush.msra.mxu0 0.0
  %437 = vmatpush.msra.mxu0 0.0
  %438 = vmatpush.msra.mxu0 0.0
  %439 = vmatpush.msra.mxu0 0.0
  %440 = vmatpush.msra.mxu0 0.0
  %441 = vmatpush.msra.mxu0 0.0
  %442 = vmatpush.msra.mxu0 0.0
  %443 = vmatpush.msra.mxu0 0.0
  %444 = vmatpush.msra.mxu0 0.0
  %445 = vmatpush.msra.mxu0 0.0
  %446 = vmatpush.msra.mxu0 0.0
  %447 = vmatpush.msra.mxu0 %v255
  %448 = vmatpush.msra.mxu0 %v241
  %449 = vmatpush.msra.mxu0 %v213
  %450 = vmatpush.msra.mxu0 %v206
  %451 = vmatmul.f32.gmra.mxu0 %v292
  %v452 = vpop.f32.mrf.mxu0
  %v453 = vadd.f32 %v284, %v452
  %454 = vmatmul.f32.gmra.mxu0 %v295
  %v455 = vpop.f32.mrf.mxu0
  %v456 = vadd.f32 %v288, %v455
  %457 = vdwg.mxu0
  %472 = vrot.lane.b32.xlu0 %v315, 126
  %v473 = vpop.permute.xlu0 %472
  %474 = vrot.lane.b32.xlu0 %v338, 126
  %v475 = vpop.permute.xlu0 %474
  %476 = vrot.lane.b32.xlu0 %v361, 126
  %v477 = vpop.permute.xlu0 %476
  %478 = vrot.lane.b32.xlu0 %v384, 126
  %v479 = vpop.permute.xlu0 %478
  %480 = vrot.lane.b32.xlu0 %v407, 126
  %v481 = vpop.permute.xlu0 %480
  %482 = vrot.lane.b32.xlu0 %v430, 126
  %v483 = vpop.permute.xlu0 %482
  %484 = vrot.lane.b32.xlu0 %v453, 126
  %v485 = vpop.permute.xlu0 %484
  %486 = vrot.lane.b32.xlu0 %v318, 126
  %v487 = vpop.permute.xlu0 %486
  %488 = vrot.lane.b32.xlu0 %v341, 126
  %v489 = vpop.permute.xlu0 %488
  %490 = vrot.lane.b32.xlu0 %v364, 126
  %v491 = vpop.permute.xlu0 %490
  %492 = vrot.lane.b32.xlu0 %v387, 126
  %v493 = vpop.permute.xlu0 %492
  %494 = vrot.lane.b32.xlu0 %v410, 126
  %v495 = vpop.permute.xlu0 %494
  %496 = vrot.lane.b32.xlu0 %v433, 126
  %v497 = vpop.permute.xlu0 %496
  %498 = vrot.lane.b32.xlu0 %v456, 126
  %v499 = vpop.permute.xlu0 %498
  %vm500 = vcmask 1031168
  %v501 = vsel %vm500, %v473, %v475
  %v502 = vsel %vm500, %v475, %v477
  %v503 = vsel %vm500, %v477, %v479
  %v504 = vsel %vm500, %v479, %v481
  %v505 = vsel %vm500, %v481, %v483
  %v506 = vsel %vm500, %v483, %v485
  %v507 = vsel %vm500, %v487, %v489
  %v508 = vsel %vm500, %v489, %v491
  %v509 = vsel %vm500, %v491, %v493
  %v510 = vsel %vm500, %v493, %v495
  %v511 = vsel %vm500, %v495, %v497
  %v512 = vsel %vm500, %v497, %v499
  %527 = vset.pattern.permute.xlu0 4
  %528 = vperm.xlu0 %527, %v15
  %v529 = vpop.permute.xlu0 %528
  %531 = vset.pattern.permute.xlu0 4
  %532 = vperm.xlu0 %531, %v16
  %v533 = vpop.permute.xlu0 %532
  %535 = vrot.lane.b32.xlu0 %v11, 96
  %v536 = vpop.permute.xlu0 %535
  %537 = vrot.lane.b32.xlu0 %v12, 96
  %v538 = vpop.permute.xlu0 %537
  %v539 = vsel %vm290, %v536, 0
  %v541 = vsel %vm290, %v538, 0
  %543 = vmatpush.msra.mxu0 0.0
  %544 = vmatpush.msra.mxu0 0.0
  %545 = vmatpush.msra.mxu0 0.0
  %546 = vmatpush.msra.mxu0 0.0
  %547 = vmatpush.msra.mxu0 0.0
  %548 = vmatpush.msra.mxu0 0.0
  %549 = vmatpush.msra.mxu0 0.0
  %550 = vmatpush.msra.mxu0 0.0
  %551 = vmatpush.msra.mxu0 0.0
  %552 = vmatpush.msra.mxu0 0.0
  %553 = vmatpush.msra.mxu0 0.0
  %554 = vmatpush.msra.mxu0 0.0
  %555 = vmatpush.msra.mxu0 %v507
  %556 = vmatpush.msra.mxu0 %v501
  %557 = vmatpush.msra.mxu0 %v318
  %558 = vmatpush.msra.mxu0 %v315
  %559 = vmatmul.f32.gmra.mxu0 %v539
  %v560 = vpop.f32.mrf.mxu0
  %v561 = vadd.f32 %v529, %v560
  %562 = vmatmul.f32.gmra.mxu0 %v541
  %v563 = vpop.f32.mrf.mxu0
  %v564 = vadd.f32 %v533, %v563
  %565 = vdwg.mxu0
  %566 = vmatpush.msra.mxu0 0.0
  %567 = vmatpush.msra.mxu0 0.0
  %568 = vmatpush.msra.mxu0 0.0
  %569 = vmatpush.msra.mxu0 0.0
  %570 = vmatpush.msra.mxu0 0.0
  %571 = vmatpush.msra.mxu0 0.0
  %572 = vmatpush.msra.mxu0 0.0
  %573 = vmatpush.msra.mxu0 0.0
  %574 = vmatpush.msra.mxu0 0.0
  %575 = vmatpush.msra.mxu0 0.0
  %576 = vmatpush.msra.mxu0 0.0
  %577 = vmatpush.msra.mxu0 0.0
  %578 = vmatpush.msra.mxu0 %v508
  %579 = vmatpush.msra.mxu0 %v502
  %580 = vmatpush.msra.mxu0 %v341
  %581 = vmatpush.msra.mxu0 %v338
  %582 = vmatmul.f32.gmra.mxu0 %v539
  %v583 = vpop.f32.mrf.mxu0
  %v584 = vadd.f32 %v529, %v583
  %585 = vmatmul.f32.gmra.mxu0 %v541
  %v586 = vpop.f32.mrf.mxu0
  %v587 = vadd.f32 %v533, %v586
  %588 = vdwg.mxu0
  %589 = vmatpush.msra.mxu0 0.0
  %590 = vmatpush.msra.mxu0 0.0
  %591 = vmatpush.msra.mxu0 0.0
  %592 = vmatpush.msra.mxu0 0.0
  %593 = vmatpush.msra.mxu0 0.0
  %594 = vmatpush.msra.mxu0 0.0
  %595 = vmatpush.msra.mxu0 0.0
  %596 = vmatpush.msra.mxu0 0.0
  %597 = vmatpush.msra.mxu0 0.0
  %598 = vmatpush.msra.mxu0 0.0
  %599 = vmatpush.msra.mxu0 0.0
  %600 = vmatpush.msra.mxu0 0.0
  %601 = vmatpush.msra.mxu0 %v509
  %602 = vmatpush.msra.mxu0 %v503
  %603 = vmatpush.msra.mxu0 %v364
  %604 = vmatpush.msra.mxu0 %v361
  %605 = vmatmul.f32.gmra.mxu0 %v539
  %v606 = vpop.f32.mrf.mxu0
  %v607 = vadd.f32 %v529, %v606
  %608 = vmatmul.f32.gmra.mxu0 %v541
  %v609 = vpop.f32.mrf.mxu0
  %v610 = vadd.f32 %v533, %v609
  %611 = vdwg.mxu0
  %612 = vmatpush.msra.mxu0 0.0
  %613 = vmatpush.msra.mxu0 0.0
  %614 = vmatpush.msra.mxu0 0.0
  %615 = vmatpush.msra.mxu0 0.0
  %616 = vmatpush.msra.mxu0 0.0
  %617 = vmatpush.msra.mxu0 0.0
  %618 = vmatpush.msra.mxu0 0.0
  %619 = vmatpush.msra.mxu0 0.0
  %620 = vmatpush.msra.mxu0 0.0
  %621 = vmatpush.msra.mxu0 0.0
  %622 = vmatpush.msra.mxu0 0.0
  %623 = vmatpush.msra.mxu0 0.0
  %624 = vmatpush.msra.mxu0 %v510
  %625 = vmatpush.msra.mxu0 %v504
  %626 = vmatpush.msra.mxu0 %v387
  %627 = vmatpush.msra.mxu0 %v384
  %628 = vmatmul.f32.gmra.mxu0 %v539
  %v629 = vpop.f32.mrf.mxu0
  %v630 = vadd.f32 %v529, %v629
  %631 = vmatmul.f32.gmra.mxu0 %v541
  %v632 = vpop.f32.mrf.mxu0
  %v633 = vadd.f32 %v533, %v632
  %634 = vdwg.mxu0
  %635 = vmatpush.msra.mxu0 0.0
  %636 = vmatpush.msra.mxu0 0.0
  %637 = vmatpush.msra.mxu0 0.0
  %638 = vmatpush.msra.mxu0 0.0
  %639 = vmatpush.msra.mxu0 0.0
  %640 = vmatpush.msra.mxu0 0.0
  %641 = vmatpush.msra.mxu0 0.0
  %642 = vmatpush.msra.mxu0 0.0
  %643 = vmatpush.msra.mxu0 0.0
  %644 = vmatpush.msra.mxu0 0.0
  %645 = vmatpush.msra.mxu0 0.0
  %646 = vmatpush.msra.mxu0 0.0
  %647 = vmatpush.msra.mxu0 %v511
  %648 = vmatpush.msra.mxu0 %v505
  %649 = vmatpush.msra.mxu0 %v410
  %650 = vmatpush.msra.mxu0 %v407
  %651 = vmatmul.f32.gmra.mxu0 %v539
  %v652 = vpop.f32.mrf.mxu0
  %v653 = vadd.f32 %v529, %v652
  %654 = vmatmul.f32.gmra.mxu0 %v541
  %v655 = vpop.f32.mrf.mxu0
  %v656 = vadd.f32 %v533, %v655
  %657 = vdwg.mxu0
  %658 = vmatpush.msra.mxu0 0.0
  %659 = vmatpush.msra.mxu0 0.0
  %660 = vmatpush.msra.mxu0 0.0
  %661 = vmatpush.msra.mxu0 0.0
  %662 = vmatpush.msra.mxu0 0.0
  %663 = vmatpush.msra.mxu0 0.0
  %664 = vmatpush.msra.mxu0 0.0
  %665 = vmatpush.msra.mxu0 0.0
  %666 = vmatpush.msra.mxu0 0.0
  %667 = vmatpush.msra.mxu0 0.0
  %668 = vmatpush.msra.mxu0 0.0
  %669 = vmatpush.msra.mxu0 0.0
  %670 = vmatpush.msra.mxu0 %v512
  %671 = vmatpush.msra.mxu0 %v506
  %672 = vmatpush.msra.mxu0 %v433
  %673 = vmatpush.msra.mxu0 %v430
  %674 = vmatmul.f32.gmra.mxu0 %v539
  %v675 = vpop.f32.mrf.mxu0
  %v676 = vadd.f32 %v529, %v675
  %677 = vmatmul.f32.gmra.mxu0 %v541
  %v678 = vpop.f32.mrf.mxu0
  %v679 = vadd.f32 %v533, %v678
  %680 = vdwg.mxu0
  %681 = vmatpush.msra.mxu0 0.0
  %682 = vmatpush.msra.mxu0 0.0
  %683 = vmatpush.msra.mxu0 0.0
  %684 = vmatpush.msra.mxu0 0.0
  %685 = vmatpush.msra.mxu0 0.0
  %686 = vmatpush.msra.mxu0 0.0
  %687 = vmatpush.msra.mxu0 0.0
  %688 = vmatpush.msra.mxu0 0.0
  %689 = vmatpush.msra.mxu0 0.0
  %690 = vmatpush.msra.mxu0 0.0
  %691 = vmatpush.msra.mxu0 0.0
  %692 = vmatpush.msra.mxu0 0.0
  %693 = vmatpush.msra.mxu0 %v499
  %694 = vmatpush.msra.mxu0 %v485
  %695 = vmatpush.msra.mxu0 %v456
  %696 = vmatpush.msra.mxu0 %v453
  %697 = vmatmul.f32.gmra.mxu0 %v539
  %v698 = vpop.f32.mrf.mxu0
  %v699 = vadd.f32 %v529, %v698
  %700 = vmatmul.f32.gmra.mxu0 %v541
  %v701 = vpop.f32.mrf.mxu0
  %v702 = vadd.f32 %v533, %v701
  %703 = vdwg.mxu0
  %718 = vrot.lane.b32.xlu0 %v561, 124
  %v719 = vpop.permute.xlu0 %718
  %720 = vrot.lane.b32.xlu0 %v584, 124
  %v721 = vpop.permute.xlu0 %720
  %722 = vrot.lane.b32.xlu0 %v607, 124
  %v723 = vpop.permute.xlu0 %722
  %724 = vrot.lane.b32.xlu0 %v630, 124
  %v725 = vpop.permute.xlu0 %724
  %726 = vrot.lane.b32.xlu0 %v653, 124
  %v727 = vpop.permute.xlu0 %726
  %728 = vrot.lane.b32.xlu0 %v676, 124
  %v729 = vpop.permute.xlu0 %728
  %730 = vrot.lane.b32.xlu0 %v699, 124
  %v731 = vpop.permute.xlu0 %730
  %732 = vrot.lane.b32.xlu0 %v564, 124
  %v733 = vpop.permute.xlu0 %732
  %734 = vrot.lane.b32.xlu0 %v587, 124
  %v735 = vpop.permute.xlu0 %734
  %736 = vrot.lane.b32.xlu0 %v610, 124
  %v737 = vpop.permute.xlu0 %736
  %738 = vrot.lane.b32.xlu0 %v633, 124
  %v739 = vpop.permute.xlu0 %738
  %740 = vrot.lane.b32.xlu0 %v656, 124
  %v741 = vpop.permute.xlu0 %740
  %742 = vrot.lane.b32.xlu0 %v679, 124
  %v743 = vpop.permute.xlu0 %742
  %744 = vrot.lane.b32.xlu0 %v702, 124
  %v745 = vpop.permute.xlu0 %744
  %vm746 = vcmask 1014784
  %v747 = vsel %vm746, %v719, %v721
  %v748 = vsel %vm746, %v721, %v723
  %v749 = vsel %vm746, %v723, %v725
  %v750 = vsel %vm746, %v725, %v727
  %v751 = vsel %vm746, %v727, %v729
  %v752 = vsel %vm746, %v729, %v731
  %v753 = vsel %vm746, %v733, %v735
  %v754 = vsel %vm746, %v735, %v737
  %v755 = vsel %vm746, %v737, %v739
  %v756 = vsel %vm746, %v739, %v741
  %v757 = vsel %vm746, %v741, %v743
  %v758 = vsel %vm746, %v743, %v745
  %773 = vset.pattern.permute.xlu0 5
  %774 = vperm.xlu0 %773, %v15
  %v775 = vpop.permute.xlu0 %774
  %777 = vset.pattern.permute.xlu0 5
  %778 = vperm.xlu0 %777, %v16
  %v779 = vpop.permute.xlu0 %778
  %781 = vrot.lane.b32.xlu0 %v11, 64
  %v782 = vpop.permute.xlu0 %781
  %783 = vrot.lane.b32.xlu0 %v12, 64
  %v784 = vpop.permute.xlu0 %783
  %v785 = vsel %vm290, %v782, 0
  %v787 = vsel %vm290, %v784, 0
  %789 = vmatpush.msra.mxu0 0.0
  %790 = vmatpush.msra.mxu0 0.0
  %791 = vmatpush.msra.mxu0 0.0
  %792 = vmatpush.msra.mxu0 0.0
  %793 = vmatpush.msra.mxu0 0.0
  %794 = vmatpush.msra.mxu0 0.0
  %795 = vmatpush.msra.mxu0 0.0
  %796 = vmatpush.msra.mxu0 0.0
  %797 = vmatpush.msra.mxu0 0.0
  %798 = vmatpush.msra.mxu0 0.0
  %799 = vmatpush.msra.mxu0 0.0
  %800 = vmatpush.msra.mxu0 0.0
  %801 = vmatpush.msra.mxu0 %v753
  %802 = vmatpush.msra.mxu0 %v747
  %803 = vmatpush.msra.mxu0 %v564
  %804 = vmatpush.msra.mxu0 %v561
  %805 = vmatmul.f32.gmra.mxu0 %v785
  %v806 = vpop.f32.mrf.mxu0
  %v807 = vadd.f32 %v775, %v806
  %808 = vmatmul.f32.gmra.mxu0 %v787
  %v809 = vpop.f32.mrf.mxu0
  %v810 = vadd.f32 %v779, %v809
  %811 = vdwg.mxu0
  %812 = vmatpush.msra.mxu0 0.0
  %813 = vmatpush.msra.mxu0 0.0
  %814 = vmatpush.msra.mxu0 0.0
  %815 = vmatpush.msra.mxu0 0.0
  %816 = vmatpush.msra.mxu0 0.0
  %817 = vmatpush.msra.mxu0 0.0
  %818 = vmatpush.msra.mxu0 0.0
  %819 = vmatpush.msra.mxu0 0.0
  %820 = vmatpush.msra.mxu0 0.0
  %821 = vmatpush.msra.mxu0 0.0
  %822 = vmatpush.msra.mxu0 0.0
  %823 = vmatpush.msra.mxu0 0.0
  %824 = vmatpush.msra.mxu0 %v754
  %825 = vmatpush.msra.mxu0 %v748
  %826 = vmatpush.msra.mxu0 %v587
  %827 = vmatpush.msra.mxu0 %v584
  %828 = vmatmul.f32.gmra.mxu0 %v785
  %v829 = vpop.f32.mrf.mxu0
  %v830 = vadd.f32 %v775, %v829
  %831 = vmatmul.f32.gmra.mxu0 %v787
  %v832 = vpop.f32.mrf.mxu0
  %v833 = vadd.f32 %v779, %v832
  %834 = vdwg.mxu0
  %835 = vmatpush.msra.mxu0 0.0
  %836 = vmatpush.msra.mxu0 0.0
  %837 = vmatpush.msra.mxu0 0.0
  %838 = vmatpush.msra.mxu0 0.0
  %839 = vmatpush.msra.mxu0 0.0
  %840 = vmatpush.msra.mxu0 0.0
  %841 = vmatpush.msra.mxu0 0.0
  %842 = vmatpush.msra.mxu0 0.0
  %843 = vmatpush.msra.mxu0 0.0
  %844 = vmatpush.msra.mxu0 0.0
  %845 = vmatpush.msra.mxu0 0.0
  %846 = vmatpush.msra.mxu0 0.0
  %847 = vmatpush.msra.mxu0 %v755
  %848 = vmatpush.msra.mxu0 %v749
  %849 = vmatpush.msra.mxu0 %v610
  %850 = vmatpush.msra.mxu0 %v607
  %851 = vmatmul.f32.gmra.mxu0 %v785
  %v852 = vpop.f32.mrf.mxu0
  %v853 = vadd.f32 %v775, %v852
  %854 = vmatmul.f32.gmra.mxu0 %v787
  %v855 = vpop.f32.mrf.mxu0
  %v856 = vadd.f32 %v779, %v855
  %857 = vdwg.mxu0
  %858 = vmatpush.msra.mxu0 0.0
  %859 = vmatpush.msra.mxu0 0.0
  %860 = vmatpush.msra.mxu0 0.0
  %861 = vmatpush.msra.mxu0 0.0
  %862 = vmatpush.msra.mxu0 0.0
  %863 = vmatpush.msra.mxu0 0.0
  %864 = vmatpush.msra.mxu0 0.0
  %865 = vmatpush.msra.mxu0 0.0
  %866 = vmatpush.msra.mxu0 0.0
  %867 = vmatpush.msra.mxu0 0.0
  %868 = vmatpush.msra.mxu0 0.0
  %869 = vmatpush.msra.mxu0 0.0
  %870 = vmatpush.msra.mxu0 %v756
  %871 = vmatpush.msra.mxu0 %v750
  %872 = vmatpush.msra.mxu0 %v633
  %873 = vmatpush.msra.mxu0 %v630
  %874 = vmatmul.f32.gmra.mxu0 %v785
  %v875 = vpop.f32.mrf.mxu0
  %v876 = vadd.f32 %v775, %v875
  %877 = vmatmul.f32.gmra.mxu0 %v787
  %v878 = vpop.f32.mrf.mxu0
  %v879 = vadd.f32 %v779, %v878
  %880 = vdwg.mxu0
  %881 = vmatpush.msra.mxu0 0.0
  %882 = vmatpush.msra.mxu0 0.0
  %883 = vmatpush.msra.mxu0 0.0
  %884 = vmatpush.msra.mxu0 0.0
  %885 = vmatpush.msra.mxu0 0.0
  %886 = vmatpush.msra.mxu0 0.0
  %887 = vmatpush.msra.mxu0 0.0
  %888 = vmatpush.msra.mxu0 0.0
  %889 = vmatpush.msra.mxu0 0.0
  %890 = vmatpush.msra.mxu0 0.0
  %891 = vmatpush.msra.mxu0 0.0
  %892 = vmatpush.msra.mxu0 0.0
  %893 = vmatpush.msra.mxu0 %v757
  %894 = vmatpush.msra.mxu0 %v751
  %895 = vmatpush.msra.mxu0 %v656
  %896 = vmatpush.msra.mxu0 %v653
  %897 = vmatmul.f32.gmra.mxu0 %v785
  %v898 = vpop.f32.mrf.mxu0
  %v899 = vadd.f32 %v775, %v898
  %900 = vmatmul.f32.gmra.mxu0 %v787
  %v901 = vpop.f32.mrf.mxu0
  %v902 = vadd.f32 %v779, %v901
  %903 = vdwg.mxu0
  %904 = vmatpush.msra.mxu0 0.0
  %905 = vmatpush.msra.mxu0 0.0
  %906 = vmatpush.msra.mxu0 0.0
  %907 = vmatpush.msra.mxu0 0.0
  %908 = vmatpush.msra.mxu0 0.0
  %909 = vmatpush.msra.mxu0 0.0
  %910 = vmatpush.msra.mxu0 0.0
  %911 = vmatpush.msra.mxu0 0.0
  %912 = vmatpush.msra.mxu0 0.0
  %913 = vmatpush.msra.mxu0 0.0
  %914 = vmatpush.msra.mxu0 0.0
  %915 = vmatpush.msra.mxu0 0.0
  %916 = vmatpush.msra.mxu0 %v758
  %917 = vmatpush.msra.mxu0 %v752
  %918 = vmatpush.msra.mxu0 %v679
  %919 = vmatpush.msra.mxu0 %v676
  %920 = vmatmul.f32.gmra.mxu0 %v785
  %v921 = vpop.f32.mrf.mxu0
  %v922 = vadd.f32 %v775, %v921
  %923 = vmatmul.f32.gmra.mxu0 %v787
  %v924 = vpop.f32.mrf.mxu0
  %v925 = vadd.f32 %v779, %v924
  %926 = vdwg.mxu0
  %927 = vmatpush.msra.mxu0 0.0
  %928 = vmatpush.msra.mxu0 0.0
  %929 = vmatpush.msra.mxu0 0.0
  %930 = vmatpush.msra.mxu0 0.0
  %931 = vmatpush.msra.mxu0 0.0
  %932 = vmatpush.msra.mxu0 0.0
  %933 = vmatpush.msra.mxu0 0.0
  %934 = vmatpush.msra.mxu0 0.0
  %935 = vmatpush.msra.mxu0 0.0
  %936 = vmatpush.msra.mxu0 0.0
  %937 = vmatpush.msra.mxu0 0.0
  %938 = vmatpush.msra.mxu0 0.0
  %939 = vmatpush.msra.mxu0 %v745
  %940 = vmatpush.msra.mxu0 %v731
  %941 = vmatpush.msra.mxu0 %v702
  %942 = vmatpush.msra.mxu0 %v699
  %943 = vmatmul.f32.gmra.mxu0 %v785
  %v944 = vpop.f32.mrf.mxu0
  %v945 = vadd.f32 %v775, %v944
  %946 = vmatmul.f32.gmra.mxu0 %v787
  %v947 = vpop.f32.mrf.mxu0
  %v948 = vadd.f32 %v779, %v947
  %949 = vdwg.mxu0
  %v950 = vadd.f32 %v807, %v830
  %v951 = vadd.f32 %v950, %v853
  %v952 = vadd.f32 %v951, %v876
  %v953 = vadd.f32 %v952, %v899
  %v954 = vadd.f32 %v953, %v922
  %v955 = vsel %vm290, %v945, 0.0
  %v956 = vadd.f32 %v954, %v955
  %957 = vadd.xlane.f32.xlu0 %v956
  %v958 = vpop.xlane.xlu0 %957
  %v959 = vadd.f32 %v810, %v833
  %v960 = vadd.f32 %v959, %v856
  %v961 = vadd.f32 %v960, %v879
  %v962 = vadd.f32 %v961, %v902
  %v963 = vadd.f32 %v962, %v925
  %v964 = vsel %vm290, %v948, 0.0
  %v965 = vadd.f32 %v963, %v964
  %966 = vadd.xlane.f32.xlu0 %v965
  %v967 = vpop.xlane.xlu0 %966
  %v968 = vmul.f32 %v807, %v807
  %v969 = vmul.f32 %v830, %v830
  %v970 = vmul.f32 %v853, %v853
  %v971 = vmul.f32 %v876, %v876
  %v972 = vmul.f32 %v899, %v899
  %v973 = vmul.f32 %v922, %v922
  %v974 = vmul.f32 %v945, %v945
  %v975 = vmul.f32 %v810, %v810
  %v976 = vmul.f32 %v833, %v833
  %v977 = vmul.f32 %v856, %v856
  %v978 = vmul.f32 %v879, %v879
  %v979 = vmul.f32 %v902, %v902
  %v980 = vmul.f32 %v925, %v925
  %v981 = vmul.f32 %v948, %v948
  %v982 = vadd.f32 %v968, %v969
  %v983 = vadd.f32 %v982, %v970
  %v984 = vadd.f32 %v983, %v971
  %v985 = vadd.f32 %v984, %v972
  %v986 = vadd.f32 %v985, %v973
  %v987 = vsel %vm290, %v974, 0.0
  %v988 = vadd.f32 %v986, %v987
  %989 = vadd.xlane.f32.xlu0 %v988
  %v990 = vpop.xlane.xlu0 %989
  %v991 = vadd.f32 %v975, %v976
  %v992 = vadd.f32 %v991, %v977
  %v993 = vadd.f32 %v992, %v978
  %v994 = vadd.f32 %v993, %v979
  %v995 = vadd.f32 %v994, %v980
  %v996 = vsel %vm290, %v981, 0.0
  %v997 = vadd.f32 %v995, %v996
  %998 = vadd.xlane.f32.xlu0 %v997
  %v999 = vpop.xlane.xlu0 %998
  %v1000 = vadd.f32 %v958, %v967
  %v1001 = vadd.f32 %v990, %v999
  %v1002 = vrcp.pop 1600.0
  %v1003 = vmul.f32 1600.0, %v1002
  %v1004 = vsub.f32 1.0, %v1003
  %v1005 = vmul.f32 %v1002, %v1004
  %v1006 = vadd.f32 %v1002, %v1005
  %vm1007 = vweird.f32 %v1002
  %v1008 = vsel %vm1007, %v1002, %v1006
  %v1009 = vmul.f32 %v1000, %v1008
  %v1010 = vmul.f32 %v1001, %v1008
  %v1011 = vmul.f32 %v1009, %v1009
  %v1012 = vsub.f32 %v1010, %v1011
  %v1013 = vmax.f32 %v1012, 0.0
  %v1014 = vadd.f32 %v1013, 1e-05
  %v1015 = vrsqrt.pop %v1014
  %v1016 = vmul.f32 %v1015, %v1014
  %v1017 = vmul.f32 %v1016, %v1015
  %v1018 = vmul.f32 0.5, %v1017
  %v1019 = vsub.f32 1.5, %v1018
  %v1020 = vmul.f32 %v1015, %v1019
  %vm1021 = vweird.f32 %v1014
  %vm1022 = vweird.f32 %v1015
  %vm1023 = vmor %vm1021, %vm1022
  %v1024 = vsel %vm1023, %v1015, %v1020
  %v1025 = vmul.f32 %v15, %v1024
  %v1026 = vmul.f32 %v1009, %v1025
  %1028 = vrot.lane.b32.xlu0 %v1026, 1
  %v1029 = vpop.permute.xlu0 %1028
  %v1031 = vsub.f32 %v15, %v1029
  %1033 = vset.pattern.permute.xlu0 9
  %1034 = vperm.xlu0 %1033, %v1025
  %v1035 = vpop.permute.xlu0 %1034
  %v1037 = vmul.f32 %v807, %v1035
  %v1038 = vmul.f32 %v830, %v1035
  %v1039 = vmul.f32 %v853, %v1035
  %v1040 = vmul.f32 %v876, %v1035
  %v1041 = vmul.f32 %v899, %v1035
  %v1042 = vmul.f32 %v922, %v1035
  %v1043 = vmul.f32 %v945, %v1035
  %v1044 = vmul.f32 %v810, %v1035
  %v1045 = vmul.f32 %v833, %v1035
  %v1046 = vmul.f32 %v856, %v1035
  %v1047 = vmul.f32 %v879, %v1035
  %v1048 = vmul.f32 %v902, %v1035
  %v1049 = vmul.f32 %v925, %v1035
  %v1050 = vmul.f32 %v948, %v1035
  %1052 = vset.pattern.permute.xlu0 10
  %1053 = vperm.xlu0 %1052, %v1031
  %v1054 = vpop.permute.xlu0 %1053
  %v1056 = vadd.f32 %v1037, %v1054
  %v1057 = vadd.f32 %v1038, %v1054
  %v1058 = vadd.f32 %v1039, %v1054
  %v1059 = vadd.f32 %v1040, %v1054
  %v1060 = vadd.f32 %v1041, %v1054
  %v1061 = vadd.f32 %v1042, %v1054
  %v1062 = vadd.f32 %v1043, %v1054
  %v1063 = vadd.f32 %v1044, %v1054
  %v1064 = vadd.f32 %v1045, %v1054
  %v1065 = vadd.f32 %v1046, %v1054
  %v1066 = vadd.f32 %v1047, %v1054
  %v1067 = vadd.f32 %v1048, %v1054
  %v1068 = vadd.f32 %v1049, %v1054
  %v1069 = vadd.f32 %v1050, %v1054
  %1084 = vrot.lane.b32.xlu0 %v1056, 127
  %v1085 = vpop.permute.xlu0 %1084
  %1086 = vrot.lane.b32.xlu0 %v1057, 127
  %v1087 = vpop.permute.xlu0 %1086
  %1088 = vrot.lane.b32.xlu0 %v1058, 127
  %v1089 = vpop.permute.xlu0 %1088
  %1090 = vrot.lane.b32.xlu0 %v1059, 127
  %v1091 = vpop.permute.xlu0 %1090
  %1092 = vrot.lane.b32.xlu0 %v1060, 127
  %v1093 = vpop.permute.xlu0 %1092
  %1094 = vrot.lane.b32.xlu0 %v1061, 127
  %v1095 = vpop.permute.xlu0 %1094
  %1096 = vrot.lane.b32.xlu0 %v1062, 127
  %v1097 = vpop.permute.xlu0 %1096
  %1098 = vrot.lane.b32.xlu0 %v1063, 127
  %v1099 = vpop.permute.xlu0 %1098
  %1100 = vrot.lane.b32.xlu0 %v1064, 127
  %v1101 = vpop.permute.xlu0 %1100
  %1102 = vrot.lane.b32.xlu0 %v1065, 127
  %v1103 = vpop.permute.xlu0 %1102
  %1104 = vrot.lane.b32.xlu0 %v1066, 127
  %v1105 = vpop.permute.xlu0 %1104
  %1106 = vrot.lane.b32.xlu0 %v1067, 127
  %v1107 = vpop.permute.xlu0 %1106
  %1108 = vrot.lane.b32.xlu0 %v1068, 127
  %v1109 = vpop.permute.xlu0 %1108
  %1110 = vrot.lane.b32.xlu0 %v1069, 127
  %v1111 = vpop.permute.xlu0 %1110
  %v1112 = vsel %vm151, %v1085, %v1087
  %v1113 = vsel %vm151, %v1087, %v1089
  %v1114 = vsel %vm151, %v1089, %v1091
  %v1115 = vsel %vm151, %v1091, %v1093
  %v1116 = vsel %vm151, %v1093, %v1095
  %v1117 = vsel %vm151, %v1095, %v1097
  %v1118 = vsel %vm151, %v1099, %v1101
  %v1119 = vsel %vm151, %v1101, %v1103
  %v1120 = vsel %vm151, %v1103, %v1105
  %v1121 = vsel %vm151, %v1105, %v1107
  %v1122 = vsel %vm151, %v1107, %v1109
  %v1123 = vsel %vm151, %v1109, %v1111
  %1138 = vrot.lane.b32.xlu0 %v1056, 126
  %v1139 = vpop.permute.xlu0 %1138
  %1140 = vrot.lane.b32.xlu0 %v1057, 126
  %v1141 = vpop.permute.xlu0 %1140
  %1142 = vrot.lane.b32.xlu0 %v1058, 126
  %v1143 = vpop.permute.xlu0 %1142
  %1144 = vrot.lane.b32.xlu0 %v1059, 126
  %v1145 = vpop.permute.xlu0 %1144
  %1146 = vrot.lane.b32.xlu0 %v1060, 126
  %v1147 = vpop.permute.xlu0 %1146
  %1148 = vrot.lane.b32.xlu0 %v1061, 126
  %v1149 = vpop.permute.xlu0 %1148
  %1150 = vrot.lane.b32.xlu0 %v1062, 126
  %v1151 = vpop.permute.xlu0 %1150
  %1152 = vrot.lane.b32.xlu0 %v1063, 126
  %v1153 = vpop.permute.xlu0 %1152
  %1154 = vrot.lane.b32.xlu0 %v1064, 126
  %v1155 = vpop.permute.xlu0 %1154
  %1156 = vrot.lane.b32.xlu0 %v1065, 126
  %v1157 = vpop.permute.xlu0 %1156
  %1158 = vrot.lane.b32.xlu0 %v1066, 126
  %v1159 = vpop.permute.xlu0 %1158
  %1160 = vrot.lane.b32.xlu0 %v1067, 126
  %v1161 = vpop.permute.xlu0 %1160
  %1162 = vrot.lane.b32.xlu0 %v1068, 126
  %v1163 = vpop.permute.xlu0 %1162
  %1164 = vrot.lane.b32.xlu0 %v1069, 126
  %v1165 = vpop.permute.xlu0 %1164
  %v1166 = vsel %vm500, %v1139, %v1141
  %v1167 = vsel %vm500, %v1141, %v1143
  %v1168 = vsel %vm500, %v1143, %v1145
  %v1169 = vsel %vm500, %v1145, %v1147
  %v1170 = vsel %vm500, %v1147, %v1149
  %v1171 = vsel %vm500, %v1149, %v1151
  %v1172 = vsel %vm500, %v1153, %v1155
  %v1173 = vsel %vm500, %v1155, %v1157
  %v1174 = vsel %vm500, %v1157, %v1159
  %v1175 = vsel %vm500, %v1159, %v1161
  %v1176 = vsel %vm500, %v1161, %v1163
  %v1177 = vsel %vm500, %v1163, %v1165
  %1192 = vrot.lane.b32.xlu0 %v1056, 125
  %v1193 = vpop.permute.xlu0 %1192
  %1194 = vrot.lane.b32.xlu0 %v1057, 125
  %v1195 = vpop.permute.xlu0 %1194
  %1196 = vrot.lane.b32.xlu0 %v1058, 125
  %v1197 = vpop.permute.xlu0 %1196
  %1198 = vrot.lane.b32.xlu0 %v1059, 125
  %v1199 = vpop.permute.xlu0 %1198
  %1200 = vrot.lane.b32.xlu0 %v1060, 125
  %v1201 = vpop.permute.xlu0 %1200
  %1202 = vrot.lane.b32.xlu0 %v1061, 125
  %v1203 = vpop.permute.xlu0 %1202
  %1204 = vrot.lane.b32.xlu0 %v1062, 125
  %v1205 = vpop.permute.xlu0 %1204
  %1206 = vrot.lane.b32.xlu0 %v1063, 125
  %v1207 = vpop.permute.xlu0 %1206
  %1208 = vrot.lane.b32.xlu0 %v1064, 125
  %v1209 = vpop.permute.xlu0 %1208
  %1210 = vrot.lane.b32.xlu0 %v1065, 125
  %v1211 = vpop.permute.xlu0 %1210
  %1212 = vrot.lane.b32.xlu0 %v1066, 125
  %v1213 = vpop.permute.xlu0 %1212
  %1214 = vrot.lane.b32.xlu0 %v1067, 125
  %v1215 = vpop.permute.xlu0 %1214
  %1216 = vrot.lane.b32.xlu0 %v1068, 125
  %v1217 = vpop.permute.xlu0 %1216
  %1218 = vrot.lane.b32.xlu0 %v1069, 125
  %v1219 = vpop.permute.xlu0 %1218
  %vm1220 = vcmask 1022976
  %v1221 = vsel %vm1220, %v1193, %v1195
  %v1222 = vsel %vm1220, %v1195, %v1197
  %v1223 = vsel %vm1220, %v1197, %v1199
  %v1224 = vsel %vm1220, %v1199, %v1201
  %v1225 = vsel %vm1220, %v1201, %v1203
  %v1226 = vsel %vm1220, %v1203, %v1205
  %v1227 = vsel %vm1220, %v1207, %v1209
  %v1228 = vsel %vm1220, %v1209, %v1211
  %v1229 = vsel %vm1220, %v1211, %v1213
  %v1230 = vsel %vm1220, %v1213, %v1215
  %v1231 = vsel %vm1220, %v1215, %v1217
  %v1232 = vsel %vm1220, %v1217, %v1219
  %vm1247 = vcmask 523264
  %v1249 = vsel %vm1247, %v13, 0
  %v1252 = vsel %vm1247, %v14, 0
  %1254 = vmatpush.msra.mxu0 0.0
  %1255 = vmatpush.msra.mxu0 0.0
  %1256 = vmatpush.msra.mxu0 0.0
  %1257 = vmatpush.msra.mxu0 0.0
  %1258 = vmatpush.msra.mxu0 0.0
  %1259 = vmatpush.msra.mxu0 0.0
  %1260 = vmatpush.msra.mxu0 0.0
  %1261 = vmatpush.msra.mxu0 0.0
  %1262 = vmatpush.msra.mxu0 %v1227
  %1263 = vmatpush.msra.mxu0 %v1221
  %1264 = vmatpush.msra.mxu0 %v1172
  %1265 = vmatpush.msra.mxu0 %v1166
  %1266 = vmatpush.msra.mxu0 %v1118
  %1267 = vmatpush.msra.mxu0 %v1112
  %1268 = vmatpush.msra.mxu0 %v1063
  %1269 = vmatpush.msra.mxu0 %v1056
  %1270 = vmatmul.f32.gmra.mxu0 %v1249
  %v1271 = vpop.f32.mrf.mxu0
  %v1272 = vadd.f32 0.0, %v1271
  %1273 = vmatmul.f32.gmra.mxu0 %v1252
  %v1274 = vpop.f32.mrf.mxu0
  %v1275 = vadd.f32 0.0, %v1274
  %1276 = vdwg.mxu0
  %1277 = vmatpush.msra.mxu0 0.0
  %1278 = vmatpush.msra.mxu0 0.0
  %1279 = vmatpush.msra.mxu0 0.0
  %1280 = vmatpush.msra.mxu0 0.0
  %1281 = vmatpush.msra.mxu0 0.0
  %1282 = vmatpush.msra.mxu0 0.0
  %1283 = vmatpush.msra.mxu0 0.0
  %1284 = vmatpush.msra.mxu0 0.0
  %1285 = vmatpush.msra.mxu0 %v1228
  %1286 = vmatpush.msra.mxu0 %v1222
  %1287 = vmatpush.msra.mxu0 %v1173
  %1288 = vmatpush.msra.mxu0 %v1167
  %1289 = vmatpush.msra.mxu0 %v1119
  %1290 = vmatpush.msra.mxu0 %v1113
  %1291 = vmatpush.msra.mxu0 %v1064
  %1292 = vmatpush.msra.mxu0 %v1057
  %1293 = vmatmul.f32.gmra.mxu0 %v1249
  %v1294 = vpop.f32.mrf.mxu0
  %v1295 = vadd.f32 0.0, %v1294
  %1296 = vmatmul.f32.gmra.mxu0 %v1252
  %v1297 = vpop.f32.mrf.mxu0
  %v1298 = vadd.f32 0.0, %v1297
  %1299 = vdwg.mxu0
  %1300 = vmatpush.msra.mxu0 0.0
  %1301 = vmatpush.msra.mxu0 0.0
  %1302 = vmatpush.msra.mxu0 0.0
  %1303 = vmatpush.msra.mxu0 0.0
  %1304 = vmatpush.msra.mxu0 0.0
  %1305 = vmatpush.msra.mxu0 0.0
  %1306 = vmatpush.msra.mxu0 0.0
  %1307 = vmatpush.msra.mxu0 0.0
  %1308 = vmatpush.msra.mxu0 %v1229
  %1309 = vmatpush.msra.mxu0 %v1223
  %1310 = vmatpush.msra.mxu0 %v1174
  %1311 = vmatpush.msra.mxu0 %v1168
  %1312 = vmatpush.msra.mxu0 %v1120
  %1313 = vmatpush.msra.mxu0 %v1114
  %1314 = vmatpush.msra.mxu0 %v1065
  %1315 = vmatpush.msra.mxu0 %v1058
  %1316 = vmatmul.f32.gmra.mxu0 %v1249
  %v1317 = vpop.f32.mrf.mxu0
  %v1318 = vadd.f32 0.0, %v1317
  %1319 = vmatmul.f32.gmra.mxu0 %v1252
  %v1320 = vpop.f32.mrf.mxu0
  %v1321 = vadd.f32 0.0, %v1320
  %1322 = vdwg.mxu0
  %1323 = vmatpush.msra.mxu0 0.0
  %1324 = vmatpush.msra.mxu0 0.0
  %1325 = vmatpush.msra.mxu0 0.0
  %1326 = vmatpush.msra.mxu0 0.0
  %1327 = vmatpush.msra.mxu0 0.0
  %1328 = vmatpush.msra.mxu0 0.0
  %1329 = vmatpush.msra.mxu0 0.0
  %1330 = vmatpush.msra.mxu0 0.0
  %1331 = vmatpush.msra.mxu0 %v1230
  %1332 = vmatpush.msra.mxu0 %v1224
  %1333 = vmatpush.msra.mxu0 %v1175
  %1334 = vmatpush.msra.mxu0 %v1169
  %1335 = vmatpush.msra.mxu0 %v1121
  %1336 = vmatpush.msra.mxu0 %v1115
  %1337 = vmatpush.msra.mxu0 %v1066
  %1338 = vmatpush.msra.mxu0 %v1059
  %1339 = vmatmul.f32.gmra.mxu0 %v1249
  %v1340 = vpop.f32.mrf.mxu0
  %v1341 = vadd.f32 0.0, %v1340
  %1342 = vmatmul.f32.gmra.mxu0 %v1252
  %v1343 = vpop.f32.mrf.mxu0
  %v1344 = vadd.f32 0.0, %v1343
  %1345 = vdwg.mxu0
  %1346 = vmatpush.msra.mxu0 0.0
  %1347 = vmatpush.msra.mxu0 0.0
  %1348 = vmatpush.msra.mxu0 0.0
  %1349 = vmatpush.msra.mxu0 0.0
  %1350 = vmatpush.msra.mxu0 0.0
  %1351 = vmatpush.msra.mxu0 0.0
  %1352 = vmatpush.msra.mxu0 0.0
  %1353 = vmatpush.msra.mxu0 0.0
  %1354 = vmatpush.msra.mxu0 %v1231
  %1355 = vmatpush.msra.mxu0 %v1225
  %1356 = vmatpush.msra.mxu0 %v1176
  %1357 = vmatpush.msra.mxu0 %v1170
  %1358 = vmatpush.msra.mxu0 %v1122
  %1359 = vmatpush.msra.mxu0 %v1116
  %1360 = vmatpush.msra.mxu0 %v1067
  %1361 = vmatpush.msra.mxu0 %v1060
  %1362 = vmatmul.f32.gmra.mxu0 %v1249
  %v1363 = vpop.f32.mrf.mxu0
  %v1364 = vadd.f32 0.0, %v1363
  %1365 = vmatmul.f32.gmra.mxu0 %v1252
  %v1366 = vpop.f32.mrf.mxu0
  %v1367 = vadd.f32 0.0, %v1366
  %1368 = vdwg.mxu0
  %1369 = vmatpush.msra.mxu0 0.0
  %1370 = vmatpush.msra.mxu0 0.0
  %1371 = vmatpush.msra.mxu0 0.0
  %1372 = vmatpush.msra.mxu0 0.0
  %1373 = vmatpush.msra.mxu0 0.0
  %1374 = vmatpush.msra.mxu0 0.0
  %1375 = vmatpush.msra.mxu0 0.0
  %1376 = vmatpush.msra.mxu0 0.0
  %1377 = vmatpush.msra.mxu0 %v1232
  %1378 = vmatpush.msra.mxu0 %v1226
  %1379 = vmatpush.msra.mxu0 %v1177
  %1380 = vmatpush.msra.mxu0 %v1171
  %1381 = vmatpush.msra.mxu0 %v1123
  %1382 = vmatpush.msra.mxu0 %v1117
  %1383 = vmatpush.msra.mxu0 %v1068
  %1384 = vmatpush.msra.mxu0 %v1061
  %1385 = vmatmul.f32.gmra.mxu0 %v1249
  %v1386 = vpop.f32.mrf.mxu0
  %v1387 = vadd.f32 0.0, %v1386
  %1388 = vmatmul.f32.gmra.mxu0 %v1252
  %v1389 = vpop.f32.mrf.mxu0
  %v1390 = vadd.f32 0.0, %v1389
  %1391 = vdwg.mxu0
  %1392 = vmatpush.msra.mxu0 0.0
  %1393 = vmatpush.msra.mxu0 0.0
  %1394 = vmatpush.msra.mxu0 0.0
  %1395 = vmatpush.msra.mxu0 0.0
  %1396 = vmatpush.msra.mxu0 0.0
  %1397 = vmatpush.msra.mxu0 0.0
  %1398 = vmatpush.msra.mxu0 0.0
  %1399 = vmatpush.msra.mxu0 0.0
  %1400 = vmatpush.msra.mxu0 %v1219
  %1401 = vmatpush.msra.mxu0 %v1205
  %1402 = vmatpush.msra.mxu0 %v1165
  %1403 = vmatpush.msra.mxu0 %v1151
  %1404 = vmatpush.msra.mxu0 %v1111
  %1405 = vmatpush.msra.mxu0 %v1097
  %1406 = vmatpush.msra.mxu0 %v1069
  %1407 = vmatpush.msra.mxu0 %v1062
  %1408 = vmatmul.f32.gmra.mxu0 %v1249
  %v1409 = vpop.f32.mrf.mxu0
  %v1410 = vadd.f32 0.0, %v1409
  %1411 = vmatmul.f32.gmra.mxu0 %v1252
  %v1412 = vpop.f32.mrf.mxu0
  %v1413 = vadd.f32 0.0, %v1412
  %1414 = vdwg.mxu0
  %v1415 = vlaneseq
  %v1416 = vshrl.u32 %v1415, 7
  %v1417 = vadd.s32 %v1416, 8
  %v1418 = vadd.s32 %v1416, 16
  %v1419 = vadd.s32 %v1416, 24
  %v1420 = vadd.s32 %v1416, 32
  %v1421 = vadd.s32 %v1416, 40
  %v1422 = vadd.s32 %v1416, 48
  %v1423 = vadd.s32 %v1416, 56
  %v1424 = vadd.s32 %v1416, 64
  %v1425 = vadd.s32 %v1416, 72
  %v1426 = vadd.s32 %v1416, 80
  %v1427 = vadd.s32 %v1416, 88
  %v1428 = vadd.s32 %v1416, 96
  %v1429 = vadd.s32 %v1416, 104
  %v1430 = vadd.s32 %v1416, 112
  %v1431 = vadd.s32 %v1416, 120
  %v1432 = vadd.s32 %v1416, 128
  %v1433 = vadd.s32 %v1416, 136
  %v1434 = vadd.s32 %v1416, 144
  %v1435 = vadd.s32 %v1416, 152
  %v1436 = vadd.s32 %v1416, 160
  %v1437 = vadd.s32 %v1416, 168
  %v1438 = vadd.s32 %v1416, 176
  %v1439 = vadd.s32 %v1416, 184
  %v1440 = vadd.s32 %v1416, 192
  %v1441 = vadd.s32 %v1416, 200
  %v1442 = vadd.s32 %v1416, 208
  %v1443 = vadd.s32 %v1416, 216
  %v1444 = vadd.s32 %v1416, 224
  %v1445 = vadd.s32 %v1416, 232
  %v1446 = vadd.s32 %v1416, 240
  %v1447 = vadd.s32 %v1416, 248
  %v1448 = vadd.s32 %v1416, 256
  %v1449 = vadd.s32 %v1416, 264
  %v1450 = vadd.s32 %v1416, 272
  %v1451 = vadd.s32 %v1416, 280
  %v1452 = vadd.s32 %v1416, 288
  %v1453 = vadd.s32 %v1416, 296
  %v1454 = vadd.s32 %v1416, 304
  %v1455 = vadd.s32 %v1416, 312
  %v1456 = vadd.s32 %v1416, 320
  %v1457 = vadd.s32 %v1416, 328
  %v1458 = vadd.s32 %v1416, 336
  %v1459 = vadd.s32 %v1416, 344
  %v1460 = vadd.s32 %v1416, 352
  %v1461 = vadd.s32 %v1416, 360
  %v1462 = vadd.s32 %v1416, 368
  %v1463 = vadd.s32 %v1416, 376
  %v1464 = vadd.s32 %v1416, 384
  %v1465 = vadd.s32 %v1416, 392
  %v1466 = vadd.s32 %v1416, 400
  %v1467 = vadd.s32 %v1416, 408
  %v1468 = vadd.s32 %v1416, 416
  %v1469 = vadd.s32 %v1416, 424
  %v1470 = vadd.s32 %v1416, 432
  %v1471 = vadd.s32 %v1416, 440
  %v1472 = vadd.s32 %v1416, 448
  %v1473 = vadd.s32 %v1416, 456
  %v1474 = vadd.s32 %v1416, 464
  %v1475 = vadd.s32 %v1416, 472
  %v1476 = vadd.s32 %v1416, 480
  %v1477 = vadd.s32 %v1416, 488
  %v1478 = vadd.s32 %v1416, 496
  %v1479 = vadd.s32 %v1416, 504
  %v1480 = vadd.s32 %v1416, 512
  %v1481 = vadd.s32 %v1416, 520
  %v1482 = vadd.s32 %v1416, 528
  %v1483 = vadd.s32 %v1416, 536
  %v1484 = vadd.s32 %v1416, 544
  %v1485 = vadd.s32 %v1416, 552
  %v1486 = vadd.s32 %v1416, 560
  %v1487 = vadd.s32 %v1416, 568
  %v1488 = vadd.s32 %v1416, 576
  %v1489 = vadd.s32 %v1416, 584
  %v1490 = vadd.s32 %v1416, 592
  %v1491 = vadd.s32 %v1416, 600
  %v1492 = vadd.s32 %v1416, 608
  %v1493 = vadd.s32 %v1416, 616
  %v1494 = vadd.s32 %v1416, 624
  %v1495 = vadd.s32 %v1416, 632
  %v1496 = vadd.s32 %v1416, 640
  %v1497 = vadd.s32 %v1416, 648
  %v1498 = vadd.s32 %v1416, 656
  %v1499 = vadd.s32 %v1416, 664
  %v1500 = vadd.s32 %v1416, 672
  %v1501 = vadd.s32 %v1416, 680
  %v1502 = vadd.s32 %v1416, 688
  %v1503 = vadd.s32 %v1416, 696
  %v1504 = vadd.s32 %v1416, 704
  %v1505 = vadd.s32 %v1416, 712
  %v1506 = vadd.s32 %v1416, 720
  %v1507 = vadd.s32 %v1416, 728
  %v1508 = vadd.s32 %v1416, 736
  %v1509 = vadd.s32 %v1416, 744
  %v1510 = vadd.s32 %v1416, 752
  %v1511 = vadd.s32 %v1416, 760
  %v1512 = vadd.s32 %v1416, 768
  %v1513 = vadd.s32 %v1416, 776
  %v1514 = vadd.s32 %v1416, 784
  %v1515 = vadd.s32 %v1416, 792
  %v1516 = vlaneseq
  %v1517 = vand.u32 %v1516, 127
  %v1518 = vadd.s32 %v1517, 128
  %v1519 = vmul.u32 %v1517, 4
  %v1520 = vmul.u32 %v1518, 4
  %vm1521 = vcmp.eq.s32.totalorder %v1416, %v1519
  %vm1522 = vcmp.eq.s32.totalorder %v1416, %v1520
  %vm1523 = vcmp.eq.s32.totalorder %v1417, %v1519
  %vm1524 = vcmp.eq.s32.totalorder %v1417, %v1520
  %vm1525 = vcmp.eq.s32.totalorder %v1418, %v1519
  %vm1526 = vcmp.eq.s32.totalorder %v1418, %v1520
  %vm1527 = vcmp.eq.s32.totalorder %v1419, %v1519
  %vm1528 = vcmp.eq.s32.totalorder %v1419, %v1520
  %vm1529 = vcmp.eq.s32.totalorder %v1420, %v1519
  %vm1530 = vcmp.eq.s32.totalorder %v1420, %v1520
  %vm1531 = vcmp.eq.s32.totalorder %v1421, %v1519
  %vm1532 = vcmp.eq.s32.totalorder %v1421, %v1520
  %vm1533 = vcmp.eq.s32.totalorder %v1422, %v1519
  %vm1534 = vcmp.eq.s32.totalorder %v1422, %v1520
  %vm1535 = vcmp.eq.s32.totalorder %v1423, %v1519
  %vm1536 = vcmp.eq.s32.totalorder %v1423, %v1520
  %vm1537 = vcmp.eq.s32.totalorder %v1424, %v1519
  %vm1538 = vcmp.eq.s32.totalorder %v1424, %v1520
  %vm1539 = vcmp.eq.s32.totalorder %v1425, %v1519
  %vm1540 = vcmp.eq.s32.totalorder %v1425, %v1520
  %vm1541 = vcmp.eq.s32.totalorder %v1426, %v1519
  %vm1542 = vcmp.eq.s32.totalorder %v1426, %v1520
  %vm1543 = vcmp.eq.s32.totalorder %v1427, %v1519
  %vm1544 = vcmp.eq.s32.totalorder %v1427, %v1520
  %vm1545 = vcmp.eq.s32.totalorder %v1428, %v1519
  %vm1546 = vcmp.eq.s32.totalorder %v1428, %v1520
  %vm1547 = vcmp.eq.s32.totalorder %v1429, %v1519
  %vm1548 = vcmp.eq.s32.totalorder %v1429, %v1520
  %vm1549 = vcmp.eq.s32.totalorder %v1430, %v1519
  %vm1550 = vcmp.eq.s32.totalorder %v1430, %v1520
  %vm1551 = vcmp.eq.s32.totalorder %v1431, %v1519
  %vm1552 = vcmp.eq.s32.totalorder %v1431, %v1520
  %vm1553 = vcmp.eq.s32.totalorder %v1432, %v1519
  %vm1554 = vcmp.eq.s32.totalorder %v1432, %v1520
  %vm1555 = vcmp.eq.s32.totalorder %v1433, %v1519
  %vm1556 = vcmp.eq.s32.totalorder %v1433, %v1520
  %vm1557 = vcmp.eq.s32.totalorder %v1434, %v1519
  %vm1558 = vcmp.eq.s32.totalorder %v1434, %v1520
  %vm1559 = vcmp.eq.s32.totalorder %v1435, %v1519
  %vm1560 = vcmp.eq.s32.totalorder %v1435, %v1520
  %vm1561 = vcmp.eq.s32.totalorder %v1436, %v1519
  %vm1562 = vcmp.eq.s32.totalorder %v1436, %v1520
  %vm1563 = vcmp.eq.s32.totalorder %v1437, %v1519
  %vm1564 = vcmp.eq.s32.totalorder %v1437, %v1520
  %vm1565 = vcmp.eq.s32.totalorder %v1438, %v1519
  %vm1566 = vcmp.eq.s32.totalorder %v1438, %v1520
  %vm1567 = vcmp.eq.s32.totalorder %v1439, %v1519
  %vm1568 = vcmp.eq.s32.totalorder %v1439, %v1520
  %vm1569 = vcmp.eq.s32.totalorder %v1440, %v1519
  %vm1570 = vcmp.eq.s32.totalorder %v1440, %v1520
  %vm1571 = vcmp.eq.s32.totalorder %v1441, %v1519
  %vm1572 = vcmp.eq.s32.totalorder %v1441, %v1520
  %vm1573 = vcmp.eq.s32.totalorder %v1442, %v1519
  %vm1574 = vcmp.eq.s32.totalorder %v1442, %v1520
  %vm1575 = vcmp.eq.s32.totalorder %v1443, %v1519
  %vm1576 = vcmp.eq.s32.totalorder %v1443, %v1520
  %vm1577 = vcmp.eq.s32.totalorder %v1444, %v1519
  %vm1578 = vcmp.eq.s32.totalorder %v1444, %v1520
  %vm1579 = vcmp.eq.s32.totalorder %v1445, %v1519
  %vm1580 = vcmp.eq.s32.totalorder %v1445, %v1520
  %vm1581 = vcmp.eq.s32.totalorder %v1446, %v1519
  %vm1582 = vcmp.eq.s32.totalorder %v1446, %v1520
  %vm1583 = vcmp.eq.s32.totalorder %v1447, %v1519
  %vm1584 = vcmp.eq.s32.totalorder %v1447, %v1520
  %vm1585 = vcmp.eq.s32.totalorder %v1448, %v1519
  %vm1586 = vcmp.eq.s32.totalorder %v1448, %v1520
  %vm1587 = vcmp.eq.s32.totalorder %v1449, %v1519
  %vm1588 = vcmp.eq.s32.totalorder %v1449, %v1520
  %vm1589 = vcmp.eq.s32.totalorder %v1450, %v1519
  %vm1590 = vcmp.eq.s32.totalorder %v1450, %v1520
  %vm1591 = vcmp.eq.s32.totalorder %v1451, %v1519
  %vm1592 = vcmp.eq.s32.totalorder %v1451, %v1520
  %vm1593 = vcmp.eq.s32.totalorder %v1452, %v1519
  %vm1594 = vcmp.eq.s32.totalorder %v1452, %v1520
  %vm1595 = vcmp.eq.s32.totalorder %v1453, %v1519
  %vm1596 = vcmp.eq.s32.totalorder %v1453, %v1520
  %vm1597 = vcmp.eq.s32.totalorder %v1454, %v1519
  %vm1598 = vcmp.eq.s32.totalorder %v1454, %v1520
  %vm1599 = vcmp.eq.s32.totalorder %v1455, %v1519
  %vm1600 = vcmp.eq.s32.totalorder %v1455, %v1520
  %vm1601 = vcmp.eq.s32.totalorder %v1456, %v1519
  %vm1602 = vcmp.eq.s32.totalorder %v1456, %v1520
  %vm1603 = vcmp.eq.s32.totalorder %v1457, %v1519
  %vm1604 = vcmp.eq.s32.totalorder %v1457, %v1520
  %vm1605 = vcmp.eq.s32.totalorder %v1458, %v1519
  %vm1606 = vcmp.eq.s32.totalorder %v1458, %v1520
  %vm1607 = vcmp.eq.s32.totalorder %v1459, %v1519
  %vm1608 = vcmp.eq.s32.totalorder %v1459, %v1520
  %vm1609 = vcmp.eq.s32.totalorder %v1460, %v1519
  %vm1610 = vcmp.eq.s32.totalorder %v1460, %v1520
  %vm1611 = vcmp.eq.s32.totalorder %v1461, %v1519
  %vm1612 = vcmp.eq.s32.totalorder %v1461, %v1520
  %vm1613 = vcmp.eq.s32.totalorder %v1462, %v1519
  %vm1614 = vcmp.eq.s32.totalorder %v1462, %v1520
  %vm1615 = vcmp.eq.s32.totalorder %v1463, %v1519
  %vm1616 = vcmp.eq.s32.totalorder %v1463, %v1520
  %vm1617 = vcmp.eq.s32.totalorder %v1464, %v1519
  %vm1618 = vcmp.eq.s32.totalorder %v1464, %v1520
  %vm1619 = vcmp.eq.s32.totalorder %v1465, %v1519
  %vm1620 = vcmp.eq.s32.totalorder %v1465, %v1520
  %vm1621 = vcmp.eq.s32.totalorder %v1466, %v1519
  %vm1622 = vcmp.eq.s32.totalorder %v1466, %v1520
  %vm1623 = vcmp.eq.s32.totalorder %v1467, %v1519
  %vm1624 = vcmp.eq.s32.totalorder %v1467, %v1520
  %vm1625 = vcmp.eq.s32.totalorder %v1468, %v1519
  %vm1626 = vcmp.eq.s32.totalorder %v1468, %v1520
  %vm1627 = vcmp.eq.s32.totalorder %v1469, %v1519
  %vm1628 = vcmp.eq.s32.totalorder %v1469, %v1520
  %vm1629 = vcmp.eq.s32.totalorder %v1470, %v1519
  %vm1630 = vcmp.eq.s32.totalorder %v1470, %v1520
  %vm1631 = vcmp.eq.s32.totalorder %v1471, %v1519
  %vm1632 = vcmp.eq.s32.totalorder %v1471, %v1520
  %vm1633 = vcmp.eq.s32.totalorder %v1472, %v1519
  %vm1634 = vcmp.eq.s32.totalorder %v1472, %v1520
  %vm1635 = vcmp.eq.s32.totalorder %v1473, %v1519
  %vm1636 = vcmp.eq.s32.totalorder %v1473, %v1520
  %vm1637 = vcmp.eq.s32.totalorder %v1474, %v1519
  %vm1638 = vcmp.eq.s32.totalorder %v1474, %v1520
  %vm1639 = vcmp.eq.s32.totalorder %v1475, %v1519
  %vm1640 = vcmp.eq.s32.totalorder %v1475, %v1520
  %vm1641 = vcmp.eq.s32.totalorder %v1476, %v1519
  %vm1642 = vcmp.eq.s32.totalorder %v1476, %v1520
  %vm1643 = vcmp.eq.s32.totalorder %v1477, %v1519
  %vm1644 = vcmp.eq.s32.totalorder %v1477, %v1520
  %vm1645 = vcmp.eq.s32.totalorder %v1478, %v1519
  %vm1646 = vcmp.eq.s32.totalorder %v1478, %v1520
  %vm1647 = vcmp.eq.s32.totalorder %v1479, %v1519
  %vm1648 = vcmp.eq.s32.totalorder %v1479, %v1520
  %vm1649 = vcmp.eq.s32.totalorder %v1480, %v1519
  %vm1650 = vcmp.eq.s32.totalorder %v1480, %v1520
  %vm1651 = vcmp.eq.s32.totalorder %v1481, %v1519
  %vm1652 = vcmp.eq.s32.totalorder %v1481, %v1520
  %vm1653 = vcmp.eq.s32.totalorder %v1482, %v1519
  %vm1654 = vcmp.eq.s32.totalorder %v1482, %v1520
  %vm1655 = vcmp.eq.s32.totalorder %v1483, %v1519
  %vm1656 = vcmp.eq.s32.totalorder %v1483, %v1520
  %vm1657 = vcmp.eq.s32.totalorder %v1484, %v1519
  %vm1658 = vcmp.eq.s32.totalorder %v1484, %v1520
  %vm1659 = vcmp.eq.s32.totalorder %v1485, %v1519
  %vm1660 = vcmp.eq.s32.totalorder %v1485, %v1520
  %vm1661 = vcmp.eq.s32.totalorder %v1486, %v1519
  %vm1662 = vcmp.eq.s32.totalorder %v1486, %v1520
  %vm1663 = vcmp.eq.s32.totalorder %v1487, %v1519
  %vm1664 = vcmp.eq.s32.totalorder %v1487, %v1520
  %vm1665 = vcmp.eq.s32.totalorder %v1488, %v1519
  %vm1666 = vcmp.eq.s32.totalorder %v1488, %v1520
  %vm1667 = vcmp.eq.s32.totalorder %v1489, %v1519
  %vm1668 = vcmp.eq.s32.totalorder %v1489, %v1520
  %vm1669 = vcmp.eq.s32.totalorder %v1490, %v1519
  %vm1670 = vcmp.eq.s32.totalorder %v1490, %v1520
  %vm1671 = vcmp.eq.s32.totalorder %v1491, %v1519
  %vm1672 = vcmp.eq.s32.totalorder %v1491, %v1520
  %vm1673 = vcmp.eq.s32.totalorder %v1492, %v1519
  %vm1674 = vcmp.eq.s32.totalorder %v1492, %v1520
  %vm1675 = vcmp.eq.s32.totalorder %v1493, %v1519
  %vm1676 = vcmp.eq.s32.totalorder %v1493, %v1520
  %vm1677 = vcmp.eq.s32.totalorder %v1494, %v1519
  %vm1678 = vcmp.eq.s32.totalorder %v1494, %v1520
  %vm1679 = vcmp.eq.s32.totalorder %v1495, %v1519
  %vm1680 = vcmp.eq.s32.totalorder %v1495, %v1520
  %vm1681 = vcmp.eq.s32.totalorder %v1496, %v1519
  %vm1682 = vcmp.eq.s32.totalorder %v1496, %v1520
  %vm1683 = vcmp.eq.s32.totalorder %v1497, %v1519
  %vm1684 = vcmp.eq.s32.totalorder %v1497, %v1520
  %vm1685 = vcmp.eq.s32.totalorder %v1498, %v1519
  %vm1686 = vcmp.eq.s32.totalorder %v1498, %v1520
  %vm1687 = vcmp.eq.s32.totalorder %v1499, %v1519
  %vm1688 = vcmp.eq.s32.totalorder %v1499, %v1520
  %vm1689 = vcmp.eq.s32.totalorder %v1500, %v1519
  %vm1690 = vcmp.eq.s32.totalorder %v1500, %v1520
  %vm1691 = vcmp.eq.s32.totalorder %v1501, %v1519
  %vm1692 = vcmp.eq.s32.totalorder %v1501, %v1520
  %vm1693 = vcmp.eq.s32.totalorder %v1502, %v1519
  %vm1694 = vcmp.eq.s32.totalorder %v1502, %v1520
  %vm1695 = vcmp.eq.s32.totalorder %v1503, %v1519
  %vm1696 = vcmp.eq.s32.totalorder %v1503, %v1520
  %vm1697 = vcmp.eq.s32.totalorder %v1504, %v1519
  %vm1698 = vcmp.eq.s32.totalorder %v1504, %v1520
  %vm1699 = vcmp.eq.s32.totalorder %v1505, %v1519
  %vm1700 = vcmp.eq.s32.totalorder %v1505, %v1520
  %vm1701 = vcmp.eq.s32.totalorder %v1506, %v1519
  %vm1702 = vcmp.eq.s32.totalorder %v1506, %v1520
  %vm1703 = vcmp.eq.s32.totalorder %v1507, %v1519
  %vm1704 = vcmp.eq.s32.totalorder %v1507, %v1520
  %vm1705 = vcmp.eq.s32.totalorder %v1508, %v1519
  %vm1706 = vcmp.eq.s32.totalorder %v1508, %v1520
  %vm1707 = vcmp.eq.s32.totalorder %v1509, %v1519
  %vm1708 = vcmp.eq.s32.totalorder %v1509, %v1520
  %vm1709 = vcmp.eq.s32.totalorder %v1510, %v1519
  %vm1710 = vcmp.eq.s32.totalorder %v1510, %v1520
  %vm1711 = vcmp.eq.s32.totalorder %v1511, %v1519
  %vm1712 = vcmp.eq.s32.totalorder %v1511, %v1520
  %vm1713 = vcmp.eq.s32.totalorder %v1512, %v1519
  %vm1714 = vcmp.eq.s32.totalorder %v1512, %v1520
  %vm1715 = vcmp.eq.s32.totalorder %v1513, %v1519
  %vm1716 = vcmp.eq.s32.totalorder %v1513, %v1520
  %vm1717 = vcmp.eq.s32.totalorder %v1514, %v1519
  %vm1718 = vcmp.eq.s32.totalorder %v1514, %v1520
  %vm1719 = vcmp.eq.s32.totalorder %v1515, %v1519
  %vm1720 = vcmp.eq.s32.totalorder %v1515, %v1520
  %v1721 = vsel %vm1521, 1, 0
  %v1722 = vsel %vm1522, 1, 0
  %v1723 = vsel %vm1523, 1, 0
  %v1724 = vsel %vm1524, 1, 0
  %v1725 = vsel %vm1525, 1, 0
  %v1726 = vsel %vm1526, 1, 0
  %v1727 = vsel %vm1527, 1, 0
  %v1728 = vsel %vm1528, 1, 0
  %v1729 = vsel %vm1529, 1, 0
  %v1730 = vsel %vm1530, 1, 0
  %v1731 = vsel %vm1531, 1, 0
  %v1732 = vsel %vm1532, 1, 0
  %v1733 = vsel %vm1533, 1, 0
  %v1734 = vsel %vm1534, 1, 0
  %v1735 = vsel %vm1535, 1, 0
  %v1736 = vsel %vm1536, 1, 0
  %v1737 = vsel %vm1537, 1, 0
  %v1738 = vsel %vm1538, 1, 0
  %v1739 = vsel %vm1539, 1, 0
  %v1740 = vsel %vm1540, 1, 0
  %v1741 = vsel %vm1541, 1, 0
  %v1742 = vsel %vm1542, 1, 0
  %v1743 = vsel %vm1543, 1, 0
  %v1744 = vsel %vm1544, 1, 0
  %v1745 = vsel %vm1545, 1, 0
  %v1746 = vsel %vm1546, 1, 0
  %v1747 = vsel %vm1547, 1, 0
  %v1748 = vsel %vm1548, 1, 0
  %v1749 = vsel %vm1549, 1, 0
  %v1750 = vsel %vm1550, 1, 0
  %v1751 = vsel %vm1551, 1, 0
  %v1752 = vsel %vm1552, 1, 0
  %v1753 = vsel %vm1553, 1, 0
  %v1754 = vsel %vm1554, 1, 0
  %v1755 = vsel %vm1555, 1, 0
  %v1756 = vsel %vm1556, 1, 0
  %v1757 = vsel %vm1557, 1, 0
  %v1758 = vsel %vm1558, 1, 0
  %v1759 = vsel %vm1559, 1, 0
  %v1760 = vsel %vm1560, 1, 0
  %v1761 = vsel %vm1561, 1, 0
  %v1762 = vsel %vm1562, 1, 0
  %v1763 = vsel %vm1563, 1, 0
  %v1764 = vsel %vm1564, 1, 0
  %v1765 = vsel %vm1565, 1, 0
  %v1766 = vsel %vm1566, 1, 0
  %v1767 = vsel %vm1567, 1, 0
  %v1768 = vsel %vm1568, 1, 0
  %v1769 = vsel %vm1569, 1, 0
  %v1770 = vsel %vm1570, 1, 0
  %v1771 = vsel %vm1571, 1, 0
  %v1772 = vsel %vm1572, 1, 0
  %v1773 = vsel %vm1573, 1, 0
  %v1774 = vsel %vm1574, 1, 0
  %v1775 = vsel %vm1575, 1, 0
  %v1776 = vsel %vm1576, 1, 0
  %v1777 = vsel %vm1577, 1, 0
  %v1778 = vsel %vm1578, 1, 0
  %v1779 = vsel %vm1579, 1, 0
  %v1780 = vsel %vm1580, 1, 0
  %v1781 = vsel %vm1581, 1, 0
  %v1782 = vsel %vm1582, 1, 0
  %v1783 = vsel %vm1583, 1, 0
  %v1784 = vsel %vm1584, 1, 0
  %v1785 = vsel %vm1585, 1, 0
  %v1786 = vsel %vm1586, 1, 0
  %v1787 = vsel %vm1587, 1, 0
  %v1788 = vsel %vm1588, 1, 0
  %v1789 = vsel %vm1589, 1, 0
  %v1790 = vsel %vm1590, 1, 0
  %v1791 = vsel %vm1591, 1, 0
  %v1792 = vsel %vm1592, 1, 0
  %v1793 = vsel %vm1593, 1, 0
  %v1794 = vsel %vm1594, 1, 0
  %v1795 = vsel %vm1595, 1, 0
  %v1796 = vsel %vm1596, 1, 0
  %v1797 = vsel %vm1597, 1, 0
  %v1798 = vsel %vm1598, 1, 0
  %v1799 = vsel %vm1599, 1, 0
  %v1800 = vsel %vm1600, 1, 0
  %v1801 = vsel %vm1601, 1, 0
  %v1802 = vsel %vm1602, 1, 0
  %v1803 = vsel %vm1603, 1, 0
  %v1804 = vsel %vm1604, 1, 0
  %v1805 = vsel %vm1605, 1, 0
  %v1806 = vsel %vm1606, 1, 0
  %v1807 = vsel %vm1607, 1, 0
  %v1808 = vsel %vm1608, 1, 0
  %v1809 = vsel %vm1609, 1, 0
  %v1810 = vsel %vm1610, 1, 0
  %v1811 = vsel %vm1611, 1, 0
  %v1812 = vsel %vm1612, 1, 0
  %v1813 = vsel %vm1613, 1, 0
  %v1814 = vsel %vm1614, 1, 0
  %v1815 = vsel %vm1615, 1, 0
  %v1816 = vsel %vm1616, 1, 0
  %v1817 = vsel %vm1617, 1, 0
  %v1818 = vsel %vm1618, 1, 0
  %v1819 = vsel %vm1619, 1, 0
  %v1820 = vsel %vm1620, 1, 0
  %v1821 = vsel %vm1621, 1, 0
  %v1822 = vsel %vm1622, 1, 0
  %v1823 = vsel %vm1623, 1, 0
  %v1824 = vsel %vm1624, 1, 0
  %v1825 = vsel %vm1625, 1, 0
  %v1826 = vsel %vm1626, 1, 0
  %v1827 = vsel %vm1627, 1, 0
  %v1828 = vsel %vm1628, 1, 0
  %v1829 = vsel %vm1629, 1, 0
  %v1830 = vsel %vm1630, 1, 0
  %v1831 = vsel %vm1631, 1, 0
  %v1832 = vsel %vm1632, 1, 0
  %v1833 = vsel %vm1633, 1, 0
  %v1834 = vsel %vm1634, 1, 0
  %v1835 = vsel %vm1635, 1, 0
  %v1836 = vsel %vm1636, 1, 0
  %v1837 = vsel %vm1637, 1, 0
  %v1838 = vsel %vm1638, 1, 0
  %v1839 = vsel %vm1639, 1, 0
  %v1840 = vsel %vm1640, 1, 0
  %v1841 = vsel %vm1641, 1, 0
  %v1842 = vsel %vm1642, 1, 0
  %v1843 = vsel %vm1643, 1, 0
  %v1844 = vsel %vm1644, 1, 0
  %v1845 = vsel %vm1645, 1, 0
  %v1846 = vsel %vm1646, 1, 0
  %v1847 = vsel %vm1647, 1, 0
  %v1848 = vsel %vm1648, 1, 0
  %v1849 = vsel %vm1649, 1, 0
  %v1850 = vsel %vm1650, 1, 0
  %v1851 = vsel %vm1651, 1, 0
  %v1852 = vsel %vm1652, 1, 0
  %v1853 = vsel %vm1653, 1, 0
  %v1854 = vsel %vm1654, 1, 0
  %v1855 = vsel %vm1655, 1, 0
  %v1856 = vsel %vm1656, 1, 0
  %v1857 = vsel %vm1657, 1, 0
  %v1858 = vsel %vm1658, 1, 0
  %v1859 = vsel %vm1659, 1, 0
  %v1860 = vsel %vm1660, 1, 0
  %v1861 = vsel %vm1661, 1, 0
  %v1862 = vsel %vm1662, 1, 0
  %v1863 = vsel %vm1663, 1, 0
  %v1864 = vsel %vm1664, 1, 0
  %v1865 = vsel %vm1665, 1, 0
  %v1866 = vsel %vm1666, 1, 0
  %v1867 = vsel %vm1667, 1, 0
  %v1868 = vsel %vm1668, 1, 0
  %v1869 = vsel %vm1669, 1, 0
  %v1870 = vsel %vm1670, 1, 0
  %v1871 = vsel %vm1671, 1, 0
  %v1872 = vsel %vm1672, 1, 0
  %v1873 = vsel %vm1673, 1, 0
  %v1874 = vsel %vm1674, 1, 0
  %v1875 = vsel %vm1675, 1, 0
  %v1876 = vsel %vm1676, 1, 0
  %v1877 = vsel %vm1677, 1, 0
  %v1878 = vsel %vm1678, 1, 0
  %v1879 = vsel %vm1679, 1, 0
  %v1880 = vsel %vm1680, 1, 0
  %v1881 = vsel %vm1681, 1, 0
  %v1882 = vsel %vm1682, 1, 0
  %v1883 = vsel %vm1683, 1, 0
  %v1884 = vsel %vm1684, 1, 0
  %v1885 = vsel %vm1685, 1, 0
  %v1886 = vsel %vm1686, 1, 0
  %v1887 = vsel %vm1687, 1, 0
  %v1888 = vsel %vm1688, 1, 0
  %v1889 = vsel %vm1689, 1, 0
  %v1890 = vsel %vm1690, 1, 0
  %v1891 = vsel %vm1691, 1, 0
  %v1892 = vsel %vm1692, 1, 0
  %v1893 = vsel %vm1693, 1, 0
  %v1894 = vsel %vm1694, 1, 0
  %v1895 = vsel %vm1695, 1, 0
  %v1896 = vsel %vm1696, 1, 0
  %v1897 = vsel %vm1697, 1, 0
  %v1898 = vsel %vm1698, 1, 0
  %v1899 = vsel %vm1699, 1, 0
  %v1900 = vsel %vm1700, 1, 0
  %v1901 = vsel %vm1701, 1, 0
  %v1902 = vsel %vm1702, 1, 0
  %v1903 = vsel %vm1703, 1, 0
  %v1904 = vsel %vm1704, 1, 0
  %v1905 = vsel %vm1705, 1, 0
  %v1906 = vsel %vm1706, 1, 0
  %v1907 = vsel %vm1707, 1, 0
  %v1908 = vsel %vm1708, 1, 0
  %v1909 = vsel %vm1709, 1, 0
  %v1910 = vsel %vm1710, 1, 0
  %v1911 = vsel %vm1711, 1, 0
  %v1912 = vsel %vm1712, 1, 0
  %v1913 = vsel %vm1713, 1, 0
  %v1914 = vsel %vm1714, 1, 0
  %v1915 = vsel %vm1715, 1, 0
  %v1916 = vsel %vm1716, 1, 0
  %v1917 = vsel %vm1717, 1, 0
  %v1918 = vsel %vm1718, 1, 0
  %v1919 = vsel %vm1719, 1, 0
  %v1920 = vsel %vm1720, 1, 0
  %v1921 = vcvt.s32.f32 %v1721
  %v1922 = vcvt.s32.f32 %v1722
  %v1923 = vcvt.s32.f32 %v1723
  %v1924 = vcvt.s32.f32 %v1724
  %v1925 = vcvt.s32.f32 %v1725
  %v1926 = vcvt.s32.f32 %v1726
  %v1927 = vcvt.s32.f32 %v1727
  %v1928 = vcvt.s32.f32 %v1728
  %v1929 = vcvt.s32.f32 %v1729
  %v1930 = vcvt.s32.f32 %v1730
  %v1931 = vcvt.s32.f32 %v1731
  %v1932 = vcvt.s32.f32 %v1732
  %v1933 = vcvt.s32.f32 %v1733
  %v1934 = vcvt.s32.f32 %v1734
  %v1935 = vcvt.s32.f32 %v1735
  %v1936 = vcvt.s32.f32 %v1736
  %v1937 = vcvt.s32.f32 %v1737
  %v1938 = vcvt.s32.f32 %v1738
  %v1939 = vcvt.s32.f32 %v1739
  %v1940 = vcvt.s32.f32 %v1740
  %v1941 = vcvt.s32.f32 %v1741
  %v1942 = vcvt.s32.f32 %v1742
  %v1943 = vcvt.s32.f32 %v1743
  %v1944 = vcvt.s32.f32 %v1744
  %v1945 = vcvt.s32.f32 %v1745
  %v1946 = vcvt.s32.f32 %v1746
  %v1947 = vcvt.s32.f32 %v1747
  %v1948 = vcvt.s32.f32 %v1748
  %v1949 = vcvt.s32.f32 %v1749
  %v1950 = vcvt.s32.f32 %v1750
  %v1951 = vcvt.s32.f32 %v1751
  %v1952 = vcvt.s32.f32 %v1752
  %v1953 = vcvt.s32.f32 %v1753
  %v1954 = vcvt.s32.f32 %v1754
  %v1955 = vcvt.s32.f32 %v1755
  %v1956 = vcvt.s32.f32 %v1756
  %v1957 = vcvt.s32.f32 %v1757
  %v1958 = vcvt.s32.f32 %v1758
  %v1959 = vcvt.s32.f32 %v1759
  %v1960 = vcvt.s32.f32 %v1760
  %v1961 = vcvt.s32.f32 %v1761
  %v1962 = vcvt.s32.f32 %v1762
  %v1963 = vcvt.s32.f32 %v1763
  %v1964 = vcvt.s32.f32 %v1764
  %v1965 = vcvt.s32.f32 %v1765
  %v1966 = vcvt.s32.f32 %v1766
  %v1967 = vcvt.s32.f32 %v1767
  %v1968 = vcvt.s32.f32 %v1768
  %v1969 = vcvt.s32.f32 %v1769
  %v1970 = vcvt.s32.f32 %v1770
  %v1971 = vcvt.s32.f32 %v1771
  %v1972 = vcvt.s32.f32 %v1772
  %v1973 = vcvt.s32.f32 %v1773
  %v1974 = vcvt.s32.f32 %v1774
  %v1975 = vcvt.s32.f32 %v1775
  %v1976 = vcvt.s32.f32 %v1776
  %v1977 = vcvt.s32.f32 %v1777
  %v1978 = vcvt.s32.f32 %v1778
  %v1979 = vcvt.s32.f32 %v1779
  %v1980 = vcvt.s32.f32 %v1780
  %v1981 = vcvt.s32.f32 %v1781
  %v1982 = vcvt.s32.f32 %v1782
  %v1983 = vcvt.s32.f32 %v1783
  %v1984 = vcvt.s32.f32 %v1784
  %v1985 = vcvt.s32.f32 %v1785
  %v1986 = vcvt.s32.f32 %v1786
  %v1987 = vcvt.s32.f32 %v1787
  %v1988 = vcvt.s32.f32 %v1788
  %v1989 = vcvt.s32.f32 %v1789
  %v1990 = vcvt.s32.f32 %v1790
  %v1991 = vcvt.s32.f32 %v1791
  %v1992 = vcvt.s32.f32 %v1792
  %v1993 = vcvt.s32.f32 %v1793
  %v1994 = vcvt.s32.f32 %v1794
  %v1995 = vcvt.s32.f32 %v1795
  %v1996 = vcvt.s32.f32 %v1796
  %v1997 = vcvt.s32.f32 %v1797
  %v1998 = vcvt.s32.f32 %v1798
  %v1999 = vcvt.s32.f32 %v1799
  %v2000 = vcvt.s32.f32 %v1800
  %v2001 = vcvt.s32.f32 %v1801
  %v2002 = vcvt.s32.f32 %v1802
  %v2003 = vcvt.s32.f32 %v1803
  %v2004 = vcvt.s32.f32 %v1804
  %v2005 = vcvt.s32.f32 %v1805
  %v2006 = vcvt.s32.f32 %v1806
  %v2007 = vcvt.s32.f32 %v1807
  %v2008 = vcvt.s32.f32 %v1808
  %v2009 = vcvt.s32.f32 %v1809
  %v2010 = vcvt.s32.f32 %v1810
  %v2011 = vcvt.s32.f32 %v1811
  %v2012 = vcvt.s32.f32 %v1812
  %v2013 = vcvt.s32.f32 %v1813
  %v2014 = vcvt.s32.f32 %v1814
  %v2015 = vcvt.s32.f32 %v1815
  %v2016 = vcvt.s32.f32 %v1816
  %v2017 = vcvt.s32.f32 %v1817
  %v2018 = vcvt.s32.f32 %v1818
  %v2019 = vcvt.s32.f32 %v1819
  %v2020 = vcvt.s32.f32 %v1820
  %v2021 = vcvt.s32.f32 %v1821
  %v2022 = vcvt.s32.f32 %v1822
  %v2023 = vcvt.s32.f32 %v1823
  %v2024 = vcvt.s32.f32 %v1824
  %v2025 = vcvt.s32.f32 %v1825
  %v2026 = vcvt.s32.f32 %v1826
  %v2027 = vcvt.s32.f32 %v1827
  %v2028 = vcvt.s32.f32 %v1828
  %v2029 = vcvt.s32.f32 %v1829
  %v2030 = vcvt.s32.f32 %v1830
  %v2031 = vcvt.s32.f32 %v1831
  %v2032 = vcvt.s32.f32 %v1832
  %v2033 = vcvt.s32.f32 %v1833
  %v2034 = vcvt.s32.f32 %v1834
  %v2035 = vcvt.s32.f32 %v1835
  %v2036 = vcvt.s32.f32 %v1836
  %v2037 = vcvt.s32.f32 %v1837
  %v2038 = vcvt.s32.f32 %v1838
  %v2039 = vcvt.s32.f32 %v1839
  %v2040 = vcvt.s32.f32 %v1840
  %v2041 = vcvt.s32.f32 %v1841
  %v2042 = vcvt.s32.f32 %v1842
  %v2043 = vcvt.s32.f32 %v1843
  %v2044 = vcvt.s32.f32 %v1844
  %v2045 = vcvt.s32.f32 %v1845
  %v2046 = vcvt.s32.f32 %v1846
  %v2047 = vcvt.s32.f32 %v1847
  %v2048 = vcvt.s32.f32 %v1848
  %v2049 = vcvt.s32.f32 %v1849
  %v2050 = vcvt.s32.f32 %v1850
  %v2051 = vcvt.s32.f32 %v1851
  %v2052 = vcvt.s32.f32 %v1852
  %v2053 = vcvt.s32.f32 %v1853
  %v2054 = vcvt.s32.f32 %v1854
  %v2055 = vcvt.s32.f32 %v1855
  %v2056 = vcvt.s32.f32 %v1856
  %v2057 = vcvt.s32.f32 %v1857
  %v2058 = vcvt.s32.f32 %v1858
  %v2059 = vcvt.s32.f32 %v1859
  %v2060 = vcvt.s32.f32 %v1860
  %v2061 = vcvt.s32.f32 %v1861
  %v2062 = vcvt.s32.f32 %v1862
  %v2063 = vcvt.s32.f32 %v1863
  %v2064 = vcvt.s32.f32 %v1864
  %v2065 = vcvt.s32.f32 %v1865
  %v2066 = vcvt.s32.f32 %v1866
  %v2067 = vcvt.s32.f32 %v1867
  %v2068 = vcvt.s32.f32 %v1868
  %v2069 = vcvt.s32.f32 %v1869
  %v2070 = vcvt.s32.f32 %v1870
  %v2071 = vcvt.s32.f32 %v1871
  %v2072 = vcvt.s32.f32 %v1872
  %v2073 = vcvt.s32.f32 %v1873
  %v2074 = vcvt.s32.f32 %v1874
  %v2075 = vcvt.s32.f32 %v1875
  %v2076 = vcvt.s32.f32 %v1876
  %v2077 = vcvt.s32.f32 %v1877
  %v2078 = vcvt.s32.f32 %v1878
  %v2079 = vcvt.s32.f32 %v1879
  %v2080 = vcvt.s32.f32 %v1880
  %v2081 = vcvt.s32.f32 %v1881
  %v2082 = vcvt.s32.f32 %v1882
  %v2083 = vcvt.s32.f32 %v1883
  %v2084 = vcvt.s32.f32 %v1884
  %v2085 = vcvt.s32.f32 %v1885
  %v2086 = vcvt.s32.f32 %v1886
  %v2087 = vcvt.s32.f32 %v1887
  %v2088 = vcvt.s32.f32 %v1888
  %v2089 = vcvt.s32.f32 %v1889
  %v2090 = vcvt.s32.f32 %v1890
  %v2091 = vcvt.s32.f32 %v1891
  %v2092 = vcvt.s32.f32 %v1892
  %v2093 = vcvt.s32.f32 %v1893
  %v2094 = vcvt.s32.f32 %v1894
  %v2095 = vcvt.s32.f32 %v1895
  %v2096 = vcvt.s32.f32 %v1896
  %v2097 = vcvt.s32.f32 %v1897
  %v2098 = vcvt.s32.f32 %v1898
  %v2099 = vcvt.s32.f32 %v1899
  %v2100 = vcvt.s32.f32 %v1900
  %v2101 = vcvt.s32.f32 %v1901
  %v2102 = vcvt.s32.f32 %v1902
  %v2103 = vcvt.s32.f32 %v1903
  %v2104 = vcvt.s32.f32 %v1904
  %v2105 = vcvt.s32.f32 %v1905
  %v2106 = vcvt.s32.f32 %v1906
  %v2107 = vcvt.s32.f32 %v1907
  %v2108 = vcvt.s32.f32 %v1908
  %v2109 = vcvt.s32.f32 %v1909
  %v2110 = vcvt.s32.f32 %v1910
  %v2111 = vcvt.s32.f32 %v1911
  %v2112 = vcvt.s32.f32 %v1912
  %v2113 = vcvt.s32.f32 %v1913
  %v2114 = vcvt.s32.f32 %v1914
  %v2115 = vcvt.s32.f32 %v1915
  %v2116 = vcvt.s32.f32 %v1916
  %v2117 = vcvt.s32.f32 %v1917
  %v2118 = vcvt.s32.f32 %v1918
  %v2119 = vcvt.s32.f32 %v1919
  %v2120 = vcvt.s32.f32 %v1920
  %2121 = vset.pattern.permute.xlu0 6
  %2122 = vperm.xlu0 %2121, %v15
  %v2123 = vpop.permute.xlu0 %2122
  %2125 = vset.pattern.permute.xlu0 6
  %2126 = vperm.xlu0 %2125, %v16
  %v2127 = vpop.permute.xlu0 %2126
  %vm2129 = vcmask 236544
  %v2131 = vsel %vm2129, %v1410, 0
  %v2134 = vsel %vm2129, %v1413, 0
  %vm2136 = vcmask 1044480
  %v2138 = vsel %vm2136, %v2119, 0
  %v2141 = vsel %vm2136, %v2120, 0
  %2143 = vmatpush.msra.mxu0 %v1951
  %2144 = vmatpush.msra.mxu0 %v1949
  %2145 = vmatpush.msra.mxu0 %v1947
  %2146 = vmatpush.msra.mxu0 %v1945
  %2147 = vmatpush.msra.mxu0 %v1943
  %2148 = vmatpush.msra.mxu0 %v1941
  %2149 = vmatpush.msra.mxu0 %v1939
  %2150 = vmatpush.msra.mxu0 %v1937
  %2151 = vmatpush.msra.mxu0 %v1935
  %2152 = vmatpush.msra.mxu0 %v1933
  %2153 = vmatpush.msra.mxu0 %v1931
  %2154 = vmatpush.msra.mxu0 %v1929
  %2155 = vmatpush.msra.mxu0 %v1927
  %2156 = vmatpush.msra.mxu0 %v1925
  %2157 = vmatpush.msra.mxu0 %v1923
  %2158 = vmatpush.msra.mxu0 %v1921
  %2159 = vmatmul.f32.gmra.mxu0 %v1272
  %v2160 = vpop.f32.mrf.mxu0
  %v2161 = vadd.f32 %v2123, %v2160
  %2162 = vmatmul.f32.gmra.mxu0 %v1275
  %v2163 = vpop.f32.mrf.mxu0
  %v2164 = vadd.f32 %v2127, %v2163
  %2165 = vdwg.mxu0
  %2166 = vmatpush.msra.mxu0 %v1983
  %2167 = vmatpush.msra.mxu0 %v1981
  %2168 = vmatpush.msra.mxu0 %v1979
  %2169 = vmatpush.msra.mxu0 %v1977
  %2170 = vmatpush.msra.mxu0 %v1975
  %2171 = vmatpush.msra.mxu0 %v1973
  %2172 = vmatpush.msra.mxu0 %v1971
  %2173 = vmatpush.msra.mxu0 %v1969
  %2174 = vmatpush.msra.mxu0 %v1967
  %2175 = vmatpush.msra.mxu0 %v1965
  %2176 = vmatpush.msra.mxu0 %v1963
  %2177 = vmatpush.msra.mxu0 %v1961
  %2178 = vmatpush.msra.mxu0 %v1959
  %2179 = vmatpush.msra.mxu0 %v1957
  %2180 = vmatpush.msra.mxu0 %v1955
  %2181 = vmatpush.msra.mxu0 %v1953
  %2182 = vmatmul.f32.gmra.mxu0 %v1295
  %v2183 = vpop.f32.mrf.mxu0
  %v2184 = vadd.f32 %v2161, %v2183
  %2185 = vmatmul.f32.gmra.mxu0 %v1298
  %v2186 = vpop.f32.mrf.mxu0
  %v2187 = vadd.f32 %v2164, %v2186
  %2188 = vdwg.mxu0
  %2189 = vmatpush.msra.mxu0 %v2015
  %2190 = vmatpush.msra.mxu0 %v2013
  %2191 = vmatpush.msra.mxu0 %v2011
  %2192 = vmatpush.msra.mxu0 %v2009
  %2193 = vmatpush.msra.mxu0 %v2007
  %2194 = vmatpush.msra.mxu0 %v2005
  %2195 = vmatpush.msra.mxu0 %v2003
  %2196 = vmatpush.msra.mxu0 %v2001
  %2197 = vmatpush.msra.mxu0 %v1999
  %2198 = vmatpush.msra.mxu0 %v1997
  %2199 = vmatpush.msra.mxu0 %v1995
  %2200 = vmatpush.msra.mxu0 %v1993
  %2201 = vmatpush.msra.mxu0 %v1991
  %2202 = vmatpush.msra.mxu0 %v1989
  %2203 = vmatpush.msra.mxu0 %v1987
  %2204 = vmatpush.msra.mxu0 %v1985
  %2205 = vmatmul.f32.gmra.mxu0 %v1318
  %v2206 = vpop.f32.mrf.mxu0
  %v2207 = vadd.f32 %v2184, %v2206
  %2208 = vmatmul.f32.gmra.mxu0 %v1321
  %v2209 = vpop.f32.mrf.mxu0
  %v2210 = vadd.f32 %v2187, %v2209
  %2211 = vdwg.mxu0
  %2212 = vmatpush.msra.mxu0 %v2047
  %2213 = vmatpush.msra.mxu0 %v2045
  %2214 = vmatpush.msra.mxu0 %v2043
  %2215 = vmatpush.msra.mxu0 %v2041
  %2216 = vmatpush.msra.mxu0 %v2039
  %2217 = vmatpush.msra.mxu0 %v2037
  %2218 = vmatpush.msra.mxu0 %v2035
  %2219 = vmatpush.msra.mxu0 %v2033
  %2220 = vmatpush.msra.mxu0 %v2031
  %2221 = vmatpush.msra.mxu0 %v2029
  %2222 = vmatpush.msra.mxu0 %v2027
  %2223 = vmatpush.msra.mxu0 %v2025
  %2224 = vmatpush.msra.mxu0 %v2023
  %2225 = vmatpush.msra.mxu0 %v2021
  %2226 = vmatpush.msra.mxu0 %v2019
  %2227 = vmatpush.msra.mxu0 %v2017
  %2228 = vmatmul.f32.gmra.mxu0 %v1341
  %v2229 = vpop.f32.mrf.mxu0
  %v2230 = vadd.f32 %v2207, %v2229
  %2231 = vmatmul.f32.gmra.mxu0 %v1344
  %v2232 = vpop.f32.mrf.mxu0
  %v2233 = vadd.f32 %v2210, %v2232
  %2234 = vdwg.mxu0
  %2235 = vmatpush.msra.mxu0 %v2079
  %2236 = vmatpush.msra.mxu0 %v2077
  %2237 = vmatpush.msra.mxu0 %v2075
  %2238 = vmatpush.msra.mxu0 %v2073
  %2239 = vmatpush.msra.mxu0 %v2071
  %2240 = vmatpush.msra.mxu0 %v2069
  %2241 = vmatpush.msra.mxu0 %v2067
  %2242 = vmatpush.msra.mxu0 %v2065
  %2243 = vmatpush.msra.mxu0 %v2063
  %2244 = vmatpush.msra.mxu0 %v2061
  %2245 = vmatpush.msra.mxu0 %v2059
  %2246 = vmatpush.msra.mxu0 %v2057
  %2247 = vmatpush.msra.mxu0 %v2055
  %2248 = vmatpush.msra.mxu0 %v2053
  %2249 = vmatpush.msra.mxu0 %v2051
  %2250 = vmatpush.msra.mxu0 %v2049
  %2251 = vmatmul.f32.gmra.mxu0 %v1364
  %v2252 = vpop.f32.mrf.mxu0
  %v2253 = vadd.f32 %v2230, %v2252
  %2254 = vmatmul.f32.gmra.mxu0 %v1367
  %v2255 = vpop.f32.mrf.mxu0
  %v2256 = vadd.f32 %v2233, %v2255
  %2257 = vdwg.mxu0
  %2258 = vmatpush.msra.mxu0 %v2111
  %2259 = vmatpush.msra.mxu0 %v2109
  %2260 = vmatpush.msra.mxu0 %v2107
  %2261 = vmatpush.msra.mxu0 %v2105
  %2262 = vmatpush.msra.mxu0 %v2103
  %2263 = vmatpush.msra.mxu0 %v2101
  %2264 = vmatpush.msra.mxu0 %v2099
  %2265 = vmatpush.msra.mxu0 %v2097
  %2266 = vmatpush.msra.mxu0 %v2095
  %2267 = vmatpush.msra.mxu0 %v2093
  %2268 = vmatpush.msra.mxu0 %v2091
  %2269 = vmatpush.msra.mxu0 %v2089
  %2270 = vmatpush.msra.mxu0 %v2087
  %2271 = vmatpush.msra.mxu0 %v2085
  %2272 = vmatpush.msra.mxu0 %v2083
  %2273 = vmatpush.msra.mxu0 %v2081
  %2274 = vmatmul.f32.gmra.mxu0 %v1387
  %v2275 = vpop.f32.mrf.mxu0
  %v2276 = vadd.f32 %v2253, %v2275
  %2277 = vmatmul.f32.gmra.mxu0 %v1390
  %v2278 = vpop.f32.mrf.mxu0
  %v2279 = vadd.f32 %v2256, %v2278
  %2280 = vdwg.mxu0
  %2281 = vmatpush.msra.mxu0 0.0
  %2282 = vmatpush.msra.mxu0 0.0
  %2283 = vmatpush.msra.mxu0 0.0
  %2284 = vmatpush.msra.mxu0 0.0
  %2285 = vmatpush.msra.mxu0 0.0
  %2286 = vmatpush.msra.mxu0 0.0
  %2287 = vmatpush.msra.mxu0 0.0
  %2288 = vmatpush.msra.mxu0 0.0
  %2289 = vmatpush.msra.mxu0 0.0
  %2290 = vmatpush.msra.mxu0 0.0
  %2291 = vmatpush.msra.mxu0 0.0
  %2292 = vmatpush.msra.mxu0 0.0
  %2293 = vmatpush.msra.mxu0 %v2138
  %2294 = vmatpush.msra.mxu0 %v2117
  %2295 = vmatpush.msra.mxu0 %v2115
  %2296 = vmatpush.msra.mxu0 %v2113
  %2297 = vmatmul.f32.gmra.mxu0 %v2131
  %v2298 = vpop.f32.mrf.mxu0
  %v2299 = vadd.f32 %v2276, %v2298
  %2300 = vmatmul.f32.gmra.mxu0 %v2134
  %v2301 = vpop.f32.mrf.mxu0
  %v2302 = vadd.f32 %v2279, %v2301
  %2303 = vdwg.mxu0
  %2304 = vmatpush.msra.mxu0 %v1952
  %2305 = vmatpush.msra.mxu0 %v1950
  %2306 = vmatpush.msra.mxu0 %v1948
  %2307 = vmatpush.msra.mxu0 %v1946
  %2308 = vmatpush.msra.mxu0 %v1944
  %2309 = vmatpush.msra.mxu0 %v1942
  %2310 = vmatpush.msra.mxu0 %v1940
  %2311 = vmatpush.msra.mxu0 %v1938
  %2312 = vmatpush.msra.mxu0 %v1936
  %2313 = vmatpush.msra.mxu0 %v1934
  %2314 = vmatpush.msra.mxu0 %v1932
  %2315 = vmatpush.msra.mxu0 %v1930
  %2316 = vmatpush.msra.mxu0 %v1928
  %2317 = vmatpush.msra.mxu0 %v1926
  %2318 = vmatpush.msra.mxu0 %v1924
  %2319 = vmatpush.msra.mxu0 %v1922
  %2320 = vmatmul.f32.gmra.mxu0 %v1272
  %v2321 = vpop.f32.mrf.mxu0
  %v2322 = vadd.f32 %v2123, %v2321
  %2323 = vmatmul.f32.gmra.mxu0 %v1275
  %v2324 = vpop.f32.mrf.mxu0
  %v2325 = vadd.f32 %v2127, %v2324
  %2326 = vdwg.mxu0
  %2327 = vmatpush.msra.mxu0 %v1984
  %2328 = vmatpush.msra.mxu0 %v1982
  %2329 = vmatpush.msra.mxu0 %v1980
  %2330 = vmatpush.msra.mxu0 %v1978
  %2331 = vmatpush.msra.mxu0 %v1976
  %2332 = vmatpush.msra.mxu0 %v1974
  %2333 = vmatpush.msra.mxu0 %v1972
  %2334 = vmatpush.msra.mxu0 %v1970
  %2335 = vmatpush.msra.mxu0 %v1968
  %2336 = vmatpush.msra.mxu0 %v1966
  %2337 = vmatpush.msra.mxu0 %v1964
  %2338 = vmatpush.msra.mxu0 %v1962
  %2339 = vmatpush.msra.mxu0 %v1960
  %2340 = vmatpush.msra.mxu0 %v1958
  %2341 = vmatpush.msra.mxu0 %v1956
  %2342 = vmatpush.msra.mxu0 %v1954
  %2343 = vmatmul.f32.gmra.mxu0 %v1295
  %v2344 = vpop.f32.mrf.mxu0
  %v2345 = vadd.f32 %v2322, %v2344
  %2346 = vmatmul.f32.gmra.mxu0 %v1298
  %v2347 = vpop.f32.mrf.mxu0
  %v2348 = vadd.f32 %v2325, %v2347
  %2349 = vdwg.mxu0
  %2350 = vmatpush.msra.mxu0 %v2016
  %2351 = vmatpush.msra.mxu0 %v2014
  %2352 = vmatpush.msra.mxu0 %v2012
  %2353 = vmatpush.msra.mxu0 %v2010
  %2354 = vmatpush.msra.mxu0 %v2008
  %2355 = vmatpush.msra.mxu0 %v2006
  %2356 = vmatpush.msra.mxu0 %v2004
  %2357 = vmatpush.msra.mxu0 %v2002
  %2358 = vmatpush.msra.mxu0 %v2000
  %2359 = vmatpush.msra.mxu0 %v1998
  %2360 = vmatpush.msra.mxu0 %v1996
  %2361 = vmatpush.msra.mxu0 %v1994
  %2362 = vmatpush.msra.mxu0 %v1992
  %2363 = vmatpush.msra.mxu0 %v1990
  %2364 = vmatpush.msra.mxu0 %v1988
  %2365 = vmatpush.msra.mxu0 %v1986
  %2366 = vmatmul.f32.gmra.mxu0 %v1318
  %v2367 = vpop.f32.mrf.mxu0
  %v2368 = vadd.f32 %v2345, %v2367
  %2369 = vmatmul.f32.gmra.mxu0 %v1321
  %v2370 = vpop.f32.mrf.mxu0
  %v2371 = vadd.f32 %v2348, %v2370
  %2372 = vdwg.mxu0
  %2373 = vmatpush.msra.mxu0 %v2048
  %2374 = vmatpush.msra.mxu0 %v2046
  %2375 = vmatpush.msra.mxu0 %v2044
  %2376 = vmatpush.msra.mxu0 %v2042
  %2377 = vmatpush.msra.mxu0 %v2040
  %2378 = vmatpush.msra.mxu0 %v2038
  %2379 = vmatpush.msra.mxu0 %v2036
  %2380 = vmatpush.msra.mxu0 %v2034
  %2381 = vmatpush.msra.mxu0 %v2032
  %2382 = vmatpush.msra.mxu0 %v2030
  %2383 = vmatpush.msra.mxu0 %v2028
  %2384 = vmatpush.msra.mxu0 %v2026
  %2385 = vmatpush.msra.mxu0 %v2024
  %2386 = vmatpush.msra.mxu0 %v2022
  %2387 = vmatpush.msra.mxu0 %v2020
  %2388 = vmatpush.msra.mxu0 %v2018
  %2389 = vmatmul.f32.gmra.mxu0 %v1341
  %v2390 = vpop.f32.mrf.mxu0
  %v2391 = vadd.f32 %v2368, %v2390
  %2392 = vmatmul.f32.gmra.mxu0 %v1344
  %v2393 = vpop.f32.mrf.mxu0
  %v2394 = vadd.f32 %v2371, %v2393
  %2395 = vdwg.mxu0
  %2396 = vmatpush.msra.mxu0 %v2080
  %2397 = vmatpush.msra.mxu0 %v2078
  %2398 = vmatpush.msra.mxu0 %v2076
  %2399 = vmatpush.msra.mxu0 %v2074
  %2400 = vmatpush.msra.mxu0 %v2072
  %2401 = vmatpush.msra.mxu0 %v2070
  %2402 = vmatpush.msra.mxu0 %v2068
  %2403 = vmatpush.msra.mxu0 %v2066
  %2404 = vmatpush.msra.mxu0 %v2064
  %2405 = vmatpush.msra.mxu0 %v2062
  %2406 = vmatpush.msra.mxu0 %v2060
  %2407 = vmatpush.msra.mxu0 %v2058
  %2408 = vmatpush.msra.mxu0 %v2056
  %2409 = vmatpush.msra.mxu0 %v2054
  %2410 = vmatpush.msra.mxu0 %v2052
  %2411 = vmatpush.msra.mxu0 %v2050
  %2412 = vmatmul.f32.gmra.mxu0 %v1364
  %v2413 = vpop.f32.mrf.mxu0
  %v2414 = vadd.f32 %v2391, %v2413
  %2415 = vmatmul.f32.gmra.mxu0 %v1367
  %v2416 = vpop.f32.mrf.mxu0
  %v2417 = vadd.f32 %v2394, %v2416
  %2418 = vdwg.mxu0
  %2419 = vmatpush.msra.mxu0 %v2112
  %2420 = vmatpush.msra.mxu0 %v2110
  %2421 = vmatpush.msra.mxu0 %v2108
  %2422 = vmatpush.msra.mxu0 %v2106
  %2423 = vmatpush.msra.mxu0 %v2104
  %2424 = vmatpush.msra.mxu0 %v2102
  %2425 = vmatpush.msra.mxu0 %v2100
  %2426 = vmatpush.msra.mxu0 %v2098
  %2427 = vmatpush.msra.mxu0 %v2096
  %2428 = vmatpush.msra.mxu0 %v2094
  %2429 = vmatpush.msra.mxu0 %v2092
  %2430 = vmatpush.msra.mxu0 %v2090
  %2431 = vmatpush.msra.mxu0 %v2088
  %2432 = vmatpush.msra.mxu0 %v2086
  %2433 = vmatpush.msra.mxu0 %v2084
  %2434 = vmatpush.msra.mxu0 %v2082
  %2435 = vmatmul.f32.gmra.mxu0 %v1387
  %v2436 = vpop.f32.mrf.mxu0
  %v2437 = vadd.f32 %v2414, %v2436
  %2438 = vmatmul.f32.gmra.mxu0 %v1390
  %v2439 = vpop.f32.mrf.mxu0
  %v2440 = vadd.f32 %v2417, %v2439
  %2441 = vdwg.mxu0
  %2442 = vmatpush.msra.mxu0 0.0
  %2443 = vmatpush.msra.mxu0 0.0
  %2444 = vmatpush.msra.mxu0 0.0
  %2445 = vmatpush.msra.mxu0 0.0
  %2446 = vmatpush.msra.mxu0 0.0
  %2447 = vmatpush.msra.mxu0 0.0
  %2448 = vmatpush.msra.mxu0 0.0
  %2449 = vmatpush.msra.mxu0 0.0
  %2450 = vmatpush.msra.mxu0 0.0
  %2451 = vmatpush.msra.mxu0 0.0
  %2452 = vmatpush.msra.mxu0 0.0
  %2453 = vmatpush.msra.mxu0 0.0
  %2454 = vmatpush.msra.mxu0 %v2141
  %2455 = vmatpush.msra.mxu0 %v2118
  %2456 = vmatpush.msra.mxu0 %v2116
  %2457 = vmatpush.msra.mxu0 %v2114
  %2458 = vmatmul.f32.gmra.mxu0 %v2131
  %v2459 = vpop.f32.mrf.mxu0
  %v2460 = vadd.f32 %v2437, %v2459
  %2461 = vmatmul.f32.gmra.mxu0 %v2134
  %v2462 = vpop.f32.mrf.mxu0
  %v2463 = vadd.f32 %v2440, %v2462
  %2464 = vdwg.mxu0
  %2469 = vrot.lane.b32.xlu0 %v2299, 127
  %v2470 = vpop.permute.xlu0 %2469
  %2471 = vrot.lane.b32.xlu0 %v2460, 127
  %v2472 = vpop.permute.xlu0 %2471
  %2473 = vrot.lane.b32.xlu0 %v2302, 127
  %v2474 = vpop.permute.xlu0 %2473
  %2475 = vrot.lane.b32.xlu0 %v2463, 127
  %v2476 = vpop.permute.xlu0 %2475
  %v2477 = vsel %vm151, %v2470, %v2472
  %v2478 = vsel %vm151, %v2474, %v2476
  %2483 = vrot.lane.b32.xlu0 %v2299, 126
  %v2484 = vpop.permute.xlu0 %2483
  %2485 = vrot.lane.b32.xlu0 %v2460, 126
  %v2486 = vpop.permute.xlu0 %2485
  %2487 = vrot.lane.b32.xlu0 %v2302, 126
  %v2488 = vpop.permute.xlu0 %2487
  %2489 = vrot.lane.b32.xlu0 %v2463, 126
  %v2490 = vpop.permute.xlu0 %2489
  %v2491 = vsel %vm500, %v2484, %v2486
  %v2492 = vsel %vm500, %v2488, %v2490
  %2497 = vrot.lane.b32.xlu0 %v2299, 125
  %v2498 = vpop.permute.xlu0 %2497
  %2499 = vrot.lane.b32.xlu0 %v2460, 125
  %v2500 = vpop.permute.xlu0 %2499
  %2501 = vrot.lane.b32.xlu0 %v2302, 125
  %v2502 = vpop.permute.xlu0 %2501
  %2503 = vrot.lane.b32.xlu0 %v2463, 125
  %v2504 = vpop.permute.xlu0 %2503
  %v2505 = vsel %vm1220, %v2498, %v2500
  %v2506 = vsel %vm1220, %v2502, %v2504
  %2511 = vrot.lane.b32.xlu0 %v13, 64
  %v2512 = vpop.permute.xlu0 %2511
  %2513 = vrot.lane.b32.xlu0 %v14, 64
  %v2514 = vpop.permute.xlu0 %2513
  %v2515 = vsel %vm1247, %v2512, 0
  %v2517 = vsel %vm1247, %v2514, 0
  %2519 = vmatpush.msra.mxu0 0.0
  %2520 = vmatpush.msra.mxu0 0.0
  %2521 = vmatpush.msra.mxu0 0.0
  %2522 = vmatpush.msra.mxu0 0.0
  %2523 = vmatpush.msra.mxu0 0.0
  %2524 = vmatpush.msra.mxu0 0.0
  %2525 = vmatpush.msra.mxu0 0.0
  %2526 = vmatpush.msra.mxu0 0.0
  %2527 = vmatpush.msra.mxu0 %v2506
  %2528 = vmatpush.msra.mxu0 %v2505
  %2529 = vmatpush.msra.mxu0 %v2492
  %2530 = vmatpush.msra.mxu0 %v2491
  %2531 = vmatpush.msra.mxu0 %v2478
  %2532 = vmatpush.msra.mxu0 %v2477
  %2533 = vmatpush.msra.mxu0 %v2302
  %2534 = vmatpush.msra.mxu0 %v2299
  %2535 = vmatmul.f32.gmra.mxu0 %v2515
  %v2536 = vpop.f32.mrf.mxu0
  %v2537 = vadd.f32 0.0, %v2536
  %2538 = vmatmul.f32.gmra.mxu0 %v2517
  %v2539 = vpop.f32.mrf.mxu0
  %v2540 = vadd.f32 0.0, %v2539
  %2541 = vdwg.mxu0
  %2542 = vmatpush.msra.mxu0 0.0
  %2543 = vmatpush.msra.mxu0 0.0
  %2544 = vmatpush.msra.mxu0 0.0
  %2545 = vmatpush.msra.mxu0 0.0
  %2546 = vmatpush.msra.mxu0 0.0
  %2547 = vmatpush.msra.mxu0 0.0
  %2548 = vmatpush.msra.mxu0 0.0
  %2549 = vmatpush.msra.mxu0 0.0
  %2550 = vmatpush.msra.mxu0 %v2504
  %2551 = vmatpush.msra.mxu0 %v2500
  %2552 = vmatpush.msra.mxu0 %v2490
  %2553 = vmatpush.msra.mxu0 %v2486
  %2554 = vmatpush.msra.mxu0 %v2476
  %2555 = vmatpush.msra.mxu0 %v2472
  %2556 = vmatpush.msra.mxu0 %v2463
  %2557 = vmatpush.msra.mxu0 %v2460
  %2558 = vmatmul.f32.gmra.mxu0 %v2515
  %v2559 = vpop.f32.mrf.mxu0
  %v2560 = vadd.f32 0.0, %v2559
  %2561 = vmatmul.f32.gmra.mxu0 %v2517
  %v2562 = vpop.f32.mrf.mxu0
  %v2563 = vadd.f32 0.0, %v2562
  %2564 = vdwg.mxu0
  %2565 = vset.pattern.permute.xlu0 7
  %2566 = vperm.xlu0 %2565, %v15
  %v2567 = vpop.permute.xlu0 %2566
  %2569 = vset.pattern.permute.xlu0 7
  %2570 = vperm.xlu0 %2569, %v16
  %v2571 = vpop.permute.xlu0 %2570
  %vm2573 = vcmask 564224
  %v2575 = vsel %vm2573, %v2560, 0
  %v2578 = vsel %vm2573, %v2563, 0
  %v2581 = vsel %vm2136, %v1969, 0
  %2583 = vmatpush.msra.mxu0 %v1951
  %2584 = vmatpush.msra.mxu0 %v1949
  %2585 = vmatpush.msra.mxu0 %v1947
  %2586 = vmatpush.msra.mxu0 %v1945
  %2587 = vmatpush.msra.mxu0 %v1943
  %2588 = vmatpush.msra.mxu0 %v1941
  %2589 = vmatpush.msra.mxu0 %v1939
  %2590 = vmatpush.msra.mxu0 %v1937
  %2591 = vmatpush.msra.mxu0 %v1935
  %2592 = vmatpush.msra.mxu0 %v1933
  %2593 = vmatpush.msra.mxu0 %v1931
  %2594 = vmatpush.msra.mxu0 %v1929
  %2595 = vmatpush.msra.mxu0 %v1927
  %2596 = vmatpush.msra.mxu0 %v1925
  %2597 = vmatpush.msra.mxu0 %v1923
  %2598 = vmatpush.msra.mxu0 %v1921
  %2599 = vmatmul.f32.gmra.mxu0 %v2537
  %v2600 = vpop.f32.mrf.mxu0
  %v2601 = vadd.f32 %v2567, %v2600
  %2602 = vmatmul.f32.gmra.mxu0 %v2540
  %v2603 = vpop.f32.mrf.mxu0
  %v2604 = vadd.f32 %v2571, %v2603
  %2605 = vdwg.mxu0
  %2606 = vmatpush.msra.mxu0 0.0
  %2607 = vmatpush.msra.mxu0 0.0
  %2608 = vmatpush.msra.mxu0 0.0
  %2609 = vmatpush.msra.mxu0 0.0
  %2610 = vmatpush.msra.mxu0 0.0
  %2611 = vmatpush.msra.mxu0 0.0
  %2612 = vmatpush.msra.mxu0 0.0
  %2613 = vmatpush.msra.mxu0 %v2581
  %2614 = vmatpush.msra.mxu0 %v1967
  %2615 = vmatpush.msra.mxu0 %v1965
  %2616 = vmatpush.msra.mxu0 %v1963
  %2617 = vmatpush.msra.mxu0 %v1961
  %2618 = vmatpush.msra.mxu0 %v1959
  %2619 = vmatpush.msra.mxu0 %v1957
  %2620 = vmatpush.msra.mxu0 %v1955
  %2621 = vmatpush.msra.mxu0 %v1953
  %2622 = vmatmul.f32.gmra.mxu0 %v2575
  %v2623 = vpop.f32.mrf.mxu0
  %v2624 = vadd.f32 %v2601, %v2623
  %2625 = vmatmul.f32.gmra.mxu0 %v2578
  %v2626 = vpop.f32.mrf.mxu0
  %v2627 = vadd.f32 %v2604, %v2626
  %2628 = vdwg.mxu0
  %2631 = vrot.lane.b32.xlu0 %v2624, 127
  %v2632 = vpop.permute.xlu0 %2631
  %2633 = vrot.lane.b32.xlu0 %v2627, 127
  %v2634 = vpop.permute.xlu0 %2633
  %2637 = vrot.lane.b32.xlu0 %v11, 32
  %v2638 = vpop.permute.xlu0 %2637
  %2639 = vrot.lane.b32.xlu0 %v12, 32
  %v2640 = vpop.permute.xlu0 %2639
  %v2641 = vsel %vm290, %v2638, 0
  %v2643 = vsel %vm290, %v2640, 0
  %2645 = vmatpush.msra.mxu0 0.0
  %2646 = vmatpush.msra.mxu0 0.0
  %2647 = vmatpush.msra.mxu0 0.0
  %2648 = vmatpush.msra.mxu0 0.0
  %2649 = vmatpush.msra.mxu0 0.0
  %2650 = vmatpush.msra.mxu0 0.0
  %2651 = vmatpush.msra.mxu0 0.0
  %2652 = vmatpush.msra.mxu0 0.0
  %2653 = vmatpush.msra.mxu0 0.0
  %2654 = vmatpush.msra.mxu0 0.0
  %2655 = vmatpush.msra.mxu0 0.0
  %2656 = vmatpush.msra.mxu0 0.0
  %2657 = vmatpush.msra.mxu0 %v2634
  %2658 = vmatpush.msra.mxu0 %v2632
  %2659 = vmatpush.msra.mxu0 %v2627
  %2660 = vmatpush.msra.mxu0 %v2624
  %2661 = vmatmul.f32.gmra.mxu0 %v2641
  %v2662 = vpop.f32.mrf.mxu0
  %v2663 = vadd.f32 0.0, %v2662
  %2664 = vmatmul.f32.gmra.mxu0 %v2643
  %v2665 = vpop.f32.mrf.mxu0
  %v2666 = vadd.f32 0.0, %v2665
  %2667 = vdwg.mxu0
  %v2668 = vmul.u32 %v1517, 2
  %vm2669 = vcmp.eq.s32.totalorder %v1416, %v2668
  %vm2670 = vcmp.eq.s32.totalorder %v1417, %v2668
  %vm2671 = vcmp.eq.s32.totalorder %v1418, %v2668
  %vm2672 = vcmp.eq.s32.totalorder %v1419, %v2668
  %vm2673 = vcmp.eq.s32.totalorder %v1420, %v2668
  %vm2674 = vcmp.eq.s32.totalorder %v1421, %v2668
  %vm2675 = vcmp.eq.s32.totalorder %v1422, %v2668
  %v2676 = vsel %vm2669, 1, 0
  %v2677 = vsel %vm2670, 1, 0
  %v2678 = vsel %vm2671, 1, 0
  %v2679 = vsel %vm2672, 1, 0
  %v2680 = vsel %vm2673, 1, 0
  %v2681 = vsel %vm2674, 1, 0
  %v2682 = vsel %vm2675, 1, 0
  %v2683 = vcvt.s32.f32 %v2676
  %v2684 = vcvt.s32.f32 %v2677
  %v2685 = vcvt.s32.f32 %v2678
  %v2686 = vcvt.s32.f32 %v2679
  %v2687 = vcvt.s32.f32 %v2680
  %v2688 = vcvt.s32.f32 %v2681
  %v2689 = vcvt.s32.f32 %v2682
  %2690 = vset.pattern.permute.xlu0 8
  %2691 = vperm.xlu0 %2690, %v15
  %v2692 = vpop.permute.xlu0 %2691
  %2694 = vset.pattern.permute.xlu0 8
  %2695 = vperm.xlu0 %2694, %v16
  %v2696 = vpop.permute.xlu0 %2695
  %vm2698 = vcmask 400384
  %v2700 = vsel %vm2698, %v2663, 0
  %v2703 = vsel %vm2698, %v2666, 0
  %vm2705 = vcmask 1040384
  %v2707 = vsel %vm2705, %v2689, 0
  %2709 = vmatpush.msra.mxu0 0.0
  %2710 = vmatpush.msra.mxu0 0.0
  %2711 = vmatpush.msra.mxu0 0.0
  %2712 = vmatpush.msra.mxu0 0.0
  %2713 = vmatpush.msra.mxu0 0.0
  %2714 = vmatpush.msra.mxu0 0.0
  %2715 = vmatpush.msra.mxu0 0.0
  %2716 = vmatpush.msra.mxu0 0.0
  %2717 = vmatpush.msra.mxu0 0.0
  %2718 = vmatpush.msra.mxu0 %v2707
  %2719 = vmatpush.msra.mxu0 %v2688
  %2720 = vmatpush.msra.mxu0 %v2687
  %2721 = vmatpush.msra.mxu0 %v2686
  %2722 = vmatpush.msra.mxu0 %v2685
  %2723 = vmatpush.msra.mxu0 %v2684
  %2724 = vmatpush.msra.mxu0 %v2683
  %2725 = vmatmul.f32.gmra.mxu0 %v2700
  %v2726 = vpop.f32.mrf.mxu0
  %v2727 = vadd.f32 %v2692, %v2726
  %2728 = vmatmul.f32.gmra.mxu0 %v2703
  %v2729 = vpop.f32.mrf.mxu0
  %v2730 = vadd.f32 %v2696, %v2729
  %2731 = vdwg.mxu0
  %v2732 = vmul.u32 %v1517, 5
  %vm2733 = vcmp.eq.s32.totalorder %v1416, %v2732
  %vm2734 = vcmp.eq.s32.totalorder %v1417, %v2732
  %vm2735 = vcmp.eq.s32.totalorder %v1418, %v2732
  %vm2736 = vcmp.eq.s32.totalorder %v1419, %v2732
  %v2737 = vsel %vm2733, 1, 0
  %v2738 = vsel %vm2734, 1, 0
  %v2739 = vsel %vm2735, 1, 0
  %v2740 = vsel %vm2736, 1, 0
  %v2741 = vcvt.s32.f32 %v2737
  %v2742 = vcvt.s32.f32 %v2738
  %v2743 = vcvt.s32.f32 %v2739
  %v2744 = vcvt.s32.f32 %v2740
  %vm2745 = vcmask 203776
  %v2747 = vsel %vm2745, %v2727, 0
  %v2750 = vsel %vm2745, %v2730, 0
  %v2753 = vsel %vm2705, %v2744, 0
  %2755 = vmatpush.msra.mxu0 0.0
  %2756 = vmatpush.msra.mxu0 0.0
  %2757 = vmatpush.msra.mxu0 0.0
  %2758 = vmatpush.msra.mxu0 0.0
  %2759 = vmatpush.msra.mxu0 0.0
  %2760 = vmatpush.msra.mxu0 0.0
  %2761 = vmatpush.msra.mxu0 0.0
  %2762 = vmatpush.msra.mxu0 0.0
  %2763 = vmatpush.msra.mxu0 0.0
  %2764 = vmatpush.msra.mxu0 0.0
  %2765 = vmatpush.msra.mxu0 0.0
  %2766 = vmatpush.msra.mxu0 0.0
  %2767 = vmatpush.msra.mxu0 %v2753
  %2768 = vmatpush.msra.mxu0 %v2743
  %2769 = vmatpush.msra.mxu0 %v2742
  %2770 = vmatpush.msra.mxu0 %v2741
  %2771 = vmatmul.f32.gmra.mxu0 %v2747
  %v2772 = vpop.f32.mrf.mxu0
  %v2773 = vadd.f32 0.0, %v2772
  %2774 = vmatmul.f32.gmra.mxu0 %v2750
  %v2775 = vpop.f32.mrf.mxu0
  %v2776 = vadd.f32 0.0, %v2775
  %2777 = vdwg.mxu0
  %v2778 = vadd.s32 %v2732, 1
  %vm2779 = vcmp.eq.s32.totalorder %v1416, %v2778
  %vm2780 = vcmp.eq.s32.totalorder %v1417, %v2778
  %vm2781 = vcmp.eq.s32.totalorder %v1418, %v2778
  %vm2782 = vcmp.eq.s32.totalorder %v1419, %v2778
  %v2783 = vsel %vm2779, 1, 0
  %v2784 = vsel %vm2780, 1, 0
  %v2785 = vsel %vm2781, 1, 0
  %v2786 = vsel %vm2782, 1, 0
  %v2787 = vcvt.s32.f32 %v2783
  %v2788 = vcvt.s32.f32 %v2784
  %v2789 = vcvt.s32.f32 %v2785
  %v2790 = vcvt.s32.f32 %v2786
  %v2792 = vsel %vm2705, %v2790, 0
  %2794 = vmatpush.msra.mxu0 0.0
  %2795 = vmatpush.msra.mxu0 0.0
  %2796 = vmatpush.msra.mxu0 0.0
  %2797 = vmatpush.msra.mxu0 0.0
  %2798 = vmatpush.msra.mxu0 0.0
  %2799 = vmatpush.msra.mxu0 0.0
  %2800 = vmatpush.msra.mxu0 0.0
  %2801 = vmatpush.msra.mxu0 0.0
  %2802 = vmatpush.msra.mxu0 0.0
  %2803 = vmatpush.msra.mxu0 0.0
  %2804 = vmatpush.msra.mxu0 0.0
  %2805 = vmatpush.msra.mxu0 0.0
  %2806 = vmatpush.msra.mxu0 %v2792
  %2807 = vmatpush.msra.mxu0 %v2789
  %2808 = vmatpush.msra.mxu0 %v2788
  %2809 = vmatpush.msra.mxu0 %v2787
  %2810 = vmatmul.f32.gmra.mxu0 %v2747
  %v2811 = vpop.f32.mrf.mxu0
  %v2812 = vadd.f32 0.0, %v2811
  %2813 = vmatmul.f32.gmra.mxu0 %v2750
  %v2814 = vpop.f32.mrf.mxu0
  %v2815 = vadd.f32 0.0, %v2814
  %2816 = vdwg.mxu0
  %v2817 = vmax.f32 %v2773, %v2812
  %v2818 = vmax.f32 %v2776, %v2815
  %v2819 = vadd.s32 %v2732, 2
  %vm2820 = vcmp.eq.s32.totalorder %v1416, %v2819
  %vm2821 = vcmp.eq.s32.totalorder %v1417, %v2819
  %vm2822 = vcmp.eq.s32.totalorder %v1418, %v2819
  %vm2823 = vcmp.eq.s32.totalorder %v1419, %v2819
  %v2824 = vsel %vm2820, 1, 0
  %v2825 = vsel %vm2821, 1, 0
  %v2826 = vsel %vm2822, 1, 0
  %v2827 = vsel %vm2823, 1, 0
  %v2828 = vcvt.s32.f32 %v2824
  %v2829 = vcvt.s32.f32 %v2825
  %v2830 = vcvt.s32.f32 %v2826
  %v2831 = vcvt.s32.f32 %v2827
  %v2833 = vsel %vm2705, %v2831, 0
  %2835 = vmatpush.msra.mxu0 0.0
  %2836 = vmatpush.msra.mxu0 0.0
  %2837 = vmatpush.msra.mxu0 0.0
  %2838 = vmatpush.msra.mxu0 0.0
  %2839 = vmatpush.msra.mxu0 0.0
  %2840 = vmatpush.msra.mxu0 0.0
  %2841 = vmatpush.msra.mxu0 0.0
  %2842 = vmatpush.msra.mxu0 0.0
  %2843 = vmatpush.msra.mxu0 0.0
  %2844 = vmatpush.msra.mxu0 0.0
  %2845 = vmatpush.msra.mxu0 0.0
  %2846 = vmatpush.msra.mxu0 0.0
  %2847 = vmatpush.msra.mxu0 %v2833
  %2848 = vmatpush.msra.mxu0 %v2830
  %2849 = vmatpush.msra.mxu0 %v2829
  %2850 = vmatpush.msra.mxu0 %v2828
  %2851 = vmatmul.f32.gmra.mxu0 %v2747
  %v2852 = vpop.f32.mrf.mxu0
  %v2853 = vadd.f32 0.0, %v2852
  %2854 = vmatmul.f32.gmra.mxu0 %v2750
  %v2855 = vpop.f32.mrf.mxu0
  %v2856 = vadd.f32 0.0, %v2855
  %2857 = vdwg.mxu0
  %v2858 = vmax.f32 %v2817, %v2853
  %v2859 = vmax.f32 %v2818, %v2856
  %v2860 = vadd.s32 %v2732, 3
  %vm2861 = vcmp.eq.s32.totalorder %v1416, %v2860
  %vm2862 = vcmp.eq.s32.totalorder %v1417, %v2860
  %vm2863 = vcmp.eq.s32.totalorder %v1418, %v2860
  %vm2864 = vcmp.eq.s32.totalorder %v1419, %v2860
  %v2865 = vsel %vm2861, 1, 0
  %v2866 = vsel %vm2862, 1, 0
  %v2867 = vsel %vm2863, 1, 0
  %v2868 = vsel %vm2864, 1, 0
  %v2869 = vcvt.s32.f32 %v2865
  %v2870 = vcvt.s32.f32 %v2866
  %v2871 = vcvt.s32.f32 %v2867
  %v2872 = vcvt.s32.f32 %v2868
  %v2874 = vsel %vm2705, %v2872, 0
  %2876 = vmatpush.msra.mxu0 0.0
  %2877 = vmatpush.msra.mxu0 0.0
  %2878 = vmatpush.msra.mxu0 0.0
  %2879 = vmatpush.msra.mxu0 0.0
  %2880 = vmatpush.msra.mxu0 0.0
  %2881 = vmatpush.msra.mxu0 0.0
  %2882 = vmatpush.msra.mxu0 0.0
  %2883 = vmatpush.msra.mxu0 0.0
  %2884 = vmatpush.msra.mxu0 0.0
  %2885 = vmatpush.msra.mxu0 0.0
  %2886 = vmatpush.msra.mxu0 0.0
  %2887 = vmatpush.msra.mxu0 0.0
  %2888 = vmatpush.msra.mxu0 %v2874
  %2889 = vmatpush.msra.mxu0 %v2871
  %2890 = vmatpush.msra.mxu0 %v2870
  %2891 = vmatpush.msra.mxu0 %v2869
  %2892 = vmatmul.f32.gmra.mxu0 %v2747
  %v2893 = vpop.f32.mrf.mxu0
  %v2894 = vadd.f32 0.0, %v2893
  %2895 = vmatmul.f32.gmra.mxu0 %v2750
  %v2896 = vpop.f32.mrf.mxu0
  %v2897 = vadd.f32 0.0, %v2896
  %2898 = vdwg.mxu0
  %v2899 = vmax.f32 %v2858, %v2894
  %v2900 = vmax.f32 %v2859, %v2897
  %v2901 = vadd.s32 %v2732, 4
  %vm2902 = vcmp.eq.s32.totalorder %v1416, %v2901
  %vm2903 = vcmp.eq.s32.totalorder %v1417, %v2901
  %vm2904 = vcmp.eq.s32.totalorder %v1418, %v2901
  %vm2905 = vcmp.eq.s32.totalorder %v1419, %v2901
  %v2906 = vsel %vm2902, 1, 0
  %v2907 = vsel %vm2903, 1, 0
  %v2908 = vsel %vm2904, 1, 0
  %v2909 = vsel %vm2905, 1, 0
  %v2910 = vcvt.s32.f32 %v2906
  %v2911 = vcvt.s32.f32 %v2907
  %v2912 = vcvt.s32.f32 %v2908
  %v2913 = vcvt.s32.f32 %v2909
  %v2915 = vsel %vm2705, %v2913, 0
  %2917 = vmatpush.msra.mxu0 0.0
  %2918 = vmatpush.msra.mxu0 0.0
  %2919 = vmatpush.msra.mxu0 0.0
  %2920 = vmatpush.msra.mxu0 0.0
  %2921 = vmatpush.msra.mxu0 0.0
  %2922 = vmatpush.msra.mxu0 0.0
  %2923 = vmatpush.msra.mxu0 0.0
  %2924 = vmatpush.msra.mxu0 0.0
  %2925 = vmatpush.msra.mxu0 0.0
  %2926 = vmatpush.msra.mxu0 0.0
  %2927 = vmatpush.msra.mxu0 0.0
  %2928 = vmatpush.msra.mxu0 0.0
  %2929 = vmatpush.msra.mxu0 %v2915
  %2930 = vmatpush.msra.mxu0 %v2912
  %2931 = vmatpush.msra.mxu0 %v2911
  %2932 = vmatpush.msra.mxu0 %v2910
  %2933 = vmatmul.f32.gmra.mxu0 %v2747
  %v2934 = vpop.f32.mrf.mxu0
  %v2935 = vadd.f32 0.0, %v2934
  %2936 = vmatmul.f32.gmra.mxu0 %v2750
  %v2937 = vpop.f32.mrf.mxu0
  %v2938 = vadd.f32 0.0, %v2937
  %2939 = vdwg.mxu0
  %v2940 = vmax.f32 %v2899, %v2935
  %v2941 = vmax.f32 %v2900, %v2938
  %vm2942 = vcmask 39936
  %v2943 = vsel %vm2942, %v2940, 0.0
  %2944 = vadd.xlane.f32.xlu0 %v2943
  %v2945 = vpop.xlane.xlu0 %2944
  %v2946 = vsel %vm2942, %v2941, 0.0
  %2947 = vadd.xlane.f32.xlu0 %v2946
  %v2948 = vpop.xlane.xlu0 %2947
  %v2949 = vmul.f32 %v2940, %v2940
  %v2950 = vmul.f32 %v2941, %v2941
  %v2951 = vsel %vm2942, %v2949, 0.0
  %2952 = vadd.xlane.f32.xlu0 %v2951
  %v2953 = vpop.xlane.xlu0 %2952
  %v2954 = vsel %vm2942, %v2950, 0.0
  %2955 = vadd.xlane.f32.xlu0 %v2954
  %v2956 = vpop.xlane.xlu0 %2955
  %v2957 = vadd.f32 %v2945, %v2948
  %v2958 = vadd.f32 %v2953, %v2956
  %v2959 = vrcp.pop 10.0
  %v2960 = vmul.f32 10.0, %v2959
  %v2961 = vsub.f32 1.0, %v2960
  %v2962 = vmul.f32 %v2959, %v2961
  %v2963 = vadd.f32 %v2959, %v2962
  %vm2964 = vweird.f32 %v2959
  %v2965 = vsel %vm2964, %v2959, %v2963
  %v2966 = vmul.f32 %v2957, %v2965
  %v2967 = vmul.f32 %v2958, %v2965
  %v2968 = vmul.f32 %v2966, %v2966
  %v2969 = vsub.f32 %v2967, %v2968
  %v2970 = vmax.f32 %v2969, 0.0
  %v2971 = vadd.f32 %v2970, 1e-05
  %v2972 = vrsqrt.pop %v2971
  %v2973 = vmul.f32 %v2972, %v2971
  %v2974 = vmul.f32 %v2973, %v2972
  %v2975 = vmul.f32 0.5, %v2974
  %v2976 = vsub.f32 1.5, %v2975
  %v2977 = vmul.f32 %v2972, %v2976
  %vm2978 = vweird.f32 %v2971
  %vm2979 = vweird.f32 %v2972
  %vm2980 = vmor %vm2978, %vm2979
  %v2981 = vsel %vm2980, %v2972, %v2977
  %v2982 = vmul.f32 %v15, %v2981
  %v2983 = vmul.f32 %v2966, %v2982
  %2985 = vrot.lane.b32.xlu0 %v2983, 1
  %v2986 = vpop.permute.xlu0 %2985
  %v2988 = vsub.f32 %v15, %v2986
  %2990 = vset.pattern.permute.xlu0 11
  %2991 = vperm.xlu0 %2990, %v2982
  %v2992 = vpop.permute.xlu0 %2991
  %v2994 = vmul.f32 %v2940, %v2992
  %v2995 = vmul.f32 %v2941, %v2992
  %2997 = vset.pattern.permute.xlu0 12
  %2998 = vperm.xlu0 %2997, %v2988
  %v2999 = vpop.permute.xlu0 %2998
  %v3001 = vadd.f32 %v2994, %v2999
  %v3002 = vadd.f32 %v2995, %v2999
  %3003 = vst.msk [vmem:[%s2] sm:$0xff] %vm2942, %v3001
  %3004 = vst.msk [vmem:[%s2 + $0x8] sm:$0xff] %vm2942, %v3002
  // Predicated region
  $region10: #{preconv_raw_forward.1} parent=0 // pred_check
    _
  $region11: #{preconv_raw_forward.1} parent=0 // pred_check_branch
    %3006 = sbr.rel (0) target = $region13
  $region12: #{preconv_raw_forward.1} parent=0 // pred_region
    _
  $region13: #{preconv_raw_forward.1} parent=0 // pred_fallthru
    _
  // Predicated region
  $region14: #{preconv_raw_forward.1} parent=0 // pred_check
    _
  $region15: #{preconv_raw_forward.1} parent=0 // pred_check_branch
    %3008 = sbr.rel (0) target = $region17
  $region16: #{preconv_raw_forward.1} parent=0 // pred_region
    _
  $region17: #{preconv_raw_forward.1} parent=0 // pred_fallthru
    _

</llo_original>
